<compile_context>
chip_gen: v6e
topology: v6e:2x2x1
jax: 0.10.0
libtpu: 0.0.40
codegen_flags: <defaults>
</compile_context>

<pallas_src>
import functools

import jax
import jax.numpy as jnp
from jax import lax
from jax.experimental import pallas as pl
from jax.experimental.pallas import tpu as pltpu

_SUB, _LANE = 8, 128
_TILE = _SUB * _LANE  # 1024 batch elements per grid step (one vreg per element-tensor)


def _poe_kernel(nJoint, x_ref, c_ref, m_ref, out_ref):
    """One batch tile of 1024 elements laid out as (8, 128).

    x_ref  : (nJoint, 1, 8, 128) f32 VMEM   joint angles (batch in sublanes/lanes)
    c_ref  : (nJoint, 19)        f32 SMEM   per-joint twist constants (see wrapper)
    m_ref  : (12,)               f32 SMEM   row-major 3x4 affine of expSE3(M_se3)
    out_ref: (12, 1, 8, 128)     f32 VMEM   row-major 3x4 affine of the result
    """

    def exp_joint(i):
        # exp(theta * xi_i) as an affine (R[9], p[3]) with each entry an (8,128) tile.
        theta = x_ref[i, 0, :, :]
        wsq = c_ref[i, 0]
        t2 = theta * theta
        th2 = t2 * wsq
        small = th2 < 1e-12
        th2s = jnp.where(small, 1.0, th2)
        inv_th = lax.rsqrt(th2s)                 # EUP, replaces the 3 divisions
        th = th2s * inv_th
        inv_th2 = inv_th * inv_th
        sin_t = jnp.sin(th)
        cos_t = jnp.cos(th)
        A = jnp.where(small, 1.0 - th2 * (1.0 / 6.0), sin_t * inv_th)
        B = jnp.where(small, 0.5 - th2 * (1.0 / 24.0), (1.0 - cos_t) * inv_th2)
        C = jnp.where(small, 1.0 / 6.0 - th2 * (1.0 / 120.0),
                      (th - sin_t) * (inv_th2 * inv_th))
        At = A * theta          # multiplies A * theta * [w]x
        Bt2 = B * t2            # multiplies B * theta^2 * [w]x^2
        Ct3 = C * t2 * theta    # multiplies C * theta^3 * [w]x^2 v

        w0, w1, w2 = c_ref[i, 1], c_ref[i, 2], c_ref[i, 3]
        w01, w02, w12 = c_ref[i, 4], c_ref[i, 5], c_ref[i, 6]
        d0, d1, d2 = c_ref[i, 7], c_ref[i, 8], c_ref[i, 9]

        R = [1.0 - Bt2 * d0, Bt2 * w01 - At * w2, Bt2 * w02 + At * w1,
             Bt2 * w01 + At * w2, 1.0 - Bt2 * d1, Bt2 * w12 - At * w0,
             Bt2 * w02 - At * w1, Bt2 * w12 + At * w0, 1.0 - Bt2 * d2]
        # p = theta*v + B*theta^2 * ([w]x v) + C*theta^3 * ([w]x^2 v)
        p = [theta * c_ref[i, 10] + Bt2 * c_ref[i, 13] + Ct3 * c_ref[i, 16],
             theta * c_ref[i, 11] + Bt2 * c_ref[i, 14] + Ct3 * c_ref[i, 17],
             theta * c_ref[i, 12] + Bt2 * c_ref[i, 15] + Ct3 * c_ref[i, 18]]
        return R, p

    # Accumulator starts at E(joint 0): the initial identity matmul is skipped.
    R_acc, p_acc = exp_joint(0)

    # Sequential product of exponentials (statically unrolled; nJoint is small).
    for i in range(1, nJoint):
        R_e, p_e = exp_joint(i)
        R_new = []
        for r in range(3):
            a0, a1, a2 = R_acc[3 * r + 0], R_acc[3 * r + 1], R_acc[3 * r + 2]
            for c in range(3):
                R_new.append(a0 * R_e[c] + a1 * R_e[3 + c] + a2 * R_e[6 + c])
        p_new = [R_acc[3 * r + 0] * p_e[0] + R_acc[3 * r + 1] * p_e[1]
                 + R_acc[3 * r + 2] * p_e[2] + p_acc[r] for r in range(3)]
        R_acc, p_acc = R_new, p_new

    # Final batch-independent offset exp(M_se3) (precomputed; SMEM scalar constants).
    elems = []
    for r in range(3):
        a0, a1, a2 = R_acc[3 * r + 0], R_acc[3 * r + 1], R_acc[3 * r + 2]
        for c in range(3):
            elems.append(a0 * m_ref[c] + a1 * m_ref[4 + c] + a2 * m_ref[8 + c])
        elems.append(a0 * m_ref[3] + a1 * m_ref[7] + a2 * m_ref[11] + p_acc[r])

    # elems is row-major [R00,R01,R02,p0, R10,R11,R12,p1, R20,R21,R22,p2].
    for j in range(12):
        out_ref[j, 0, :, :] = elems[j]          # full (8,128) vreg stores


def _expse3_single(xi):
    """Plain-JAX se(3) exponential (4x4), used for the hoisted exp(M_se3) and the reference."""
    w, v = xi[:3], xi[3:]
    th2 = jnp.dot(w, w)
    small = th2 < 1e-12
    th2s = jnp.where(small, 1.0, th2)
    th = jnp.sqrt(th2s)
    A = jnp.where(small, 1.0 - th2 / 6.0, jnp.sin(th) / th)
    B = jnp.where(small, 0.5 - th2 / 24.0, (1.0 - jnp.cos(th)) / th2s)
    C = jnp.where(small, 1.0 / 6.0 - th2 / 120.0, (th - jnp.sin(th)) / (th2s * th))
    W = jnp.array([[0.0, -w[2], w[1]], [w[2], 0.0, -w[0]], [-w[1], w[0], 0.0]],
                  dtype=jnp.float32)
    W2 = W @ W
    R = jnp.eye(3, dtype=jnp.float32) + A * W + B * W2
    V = jnp.eye(3, dtype=jnp.float32) + B * W + C * W2
    p = V @ v
    return jnp.eye(4, dtype=jnp.float32).at[:3, :3].set(R).at[:3, 3].set(p)


def _joint_consts(joint_twist):
    """Per-joint twist constants for the strength-reduced in-kernel exponential.

    Layout per joint (19 f32): [wsq, w0,w1,w2, w0w1,w0w2,w1w2, d0,d1,d2,
                                v0,v1,v2, ( [w]x v )0..2, ( [w]x^2 v )0..2]
    """
    jt = jnp.asarray(joint_twist, jnp.float32)
    w, v = jt[:, :3], jt[:, 3:]
    w0, w1, w2 = w[:, 0], w[:, 1], w[:, 2]
    wsq = w0 * w0 + w1 * w1 + w2 * w2
    w01, w02, w12 = w0 * w1, w0 * w2, w1 * w2
    d0 = w1 * w1 + w2 * w2
    d1 = w0 * w0 + w2 * w2
    d2 = w0 * w0 + w1 * w1
    u = jnp.cross(w, v)                                            # [w]x v
    q = w * jnp.sum(w * v, axis=1, keepdims=True) - v * wsq[:, None]  # [w]x^2 v
    return jnp.stack([wsq, w0, w1, w2, w01, w02, w12, d0, d1, d2,
                      v[:, 0], v[:, 1], v[:, 2],
                      u[:, 0], u[:, 1], u[:, 2],
                      q[:, 0], q[:, 1], q[:, 2]], axis=1)          # (nJoint, 19)


def poe_forward(x, joint_twist, m_se3):
    """x: (nBatch, nJoint) f32; joint_twist (== eta, useAdjoint=False): (nJoint, 6) f32;
    m_se3: (1, 6) f32. Returns SE3: (nBatch, 4, 4) f32 (same as the PyTorch module)."""
    nBatch, nJoint = x.shape
    padded = pl.cdiv(nBatch, _TILE) * _TILE
    n_tiles = padded // _TILE

    x_t = jnp.asarray(x, jnp.float32).T                       # (nJoint, nBatch)
    if padded != nBatch:
        x_t = jnp.pad(x_t, ((0, 0), (0, padded - nBatch)))    # theta=0 -> harmless identity
    x_tiles = x_t.reshape(nJoint, n_tiles, _SUB, _LANE)

    consts = _joint_consts(joint_twist)                       # (nJoint, 19) -> SMEM
    m_aff = _expse3_single(jnp.asarray(m_se3, jnp.float32)[0])[:3, :].reshape(12)  # -> SMEM

    kernel = functools.partial(_poe_kernel, nJoint)
    cost = pl.CostEstimate(
        flops=int(padded * (nJoint * 110 + 70)),
        transcendentals=int(padded * nJoint * 3),
        bytes_accessed=int(padded * 4 * (nJoint + 12)),
    )
    out = pl.pallas_call(
        kernel,
        out_shape=jax.ShapeDtypeStruct((12, n_tiles, _SUB, _LANE), jnp.float32),
        grid=(n_tiles,),
        in_specs=[
            pl.BlockSpec((nJoint, 1, _SUB, _LANE), lambda t: (0, t, 0, 0)),
            pl.BlockSpec(memory_space=pltpu.MemorySpace.SMEM),   # joint constants
            pl.BlockSpec(memory_space=pltpu.MemorySpace.SMEM),   # exp(M_se3) affine
        ],
        out_specs=pl.BlockSpec((12, 1, _SUB, _LANE), lambda t: (0, t, 0, 0)),
        compiler_params=pltpu.CompilerParams(
            dimension_semantics=("parallel",),
            vmem_limit_bytes=32 * 1024 * 1024,
        ),
        cost_estimate=cost,
    )(x_tiles, consts, m_aff)

    aff = out.reshape(12, padded)[:, :nBatch].T.reshape(nBatch, 3, 4)
    bottom = jnp.broadcast_to(
        jnp.array([0.0, 0.0, 0.0, 1.0], jnp.float32), (nBatch, 1, 4))
    return jnp.concatenate([aff, bottom], axis=1)              # (nBatch, 4, 4)


# ---------------- pure-JAX reference (for verification only) ----------------
def poe_forward_ref(x, twist, m):
    x = jnp.asarray(x, jnp.float32)
    twist = jnp.asarray(twist, jnp.float32)
    m = jnp.asarray(m, jnp.float32)
    nBatch, nJoint = x.shape
    SE3 = jnp.tile(jnp.eye(4, dtype=jnp.float32)[None], (nBatch, 1, 1))
    for i in range(nJoint):
        E = jax.vmap(_expse3_single)(x[:, i:i + 1] * twist[i])
        SE3 = SE3 @ E
    return SE3 @ _expse3_single(m[0])[None]


if __name__ == "__main__":
    nBatch, nJoint = 8, 6
    key = jax.random.PRNGKey(0)
    k_eta, k_m, k_x, k_x2 = jax.random.split(key, 4)

    # Parameters as in __init__ (useAdjoint=False): eta ~ U(-1,1), M_se3 ~ U(-2,2).
    eta = jax.random.uniform(k_eta, (nJoint, 6), jnp.float32, -1.0, 1.0)
    m_se3 = jax.random.uniform(k_m, (1, 6), jnp.float32, -2.0, 2.0)
    x = jax.random.uniform(k_x, (nBatch, nJoint), jnp.float32, -jnp.pi, jnp.pi)

    out = jax.block_until_ready(poe_forward(x, eta, m_se3))
    ref = poe_forward_ref(x, eta, m_se3)
    assert out.shape == (nBatch, 4, 4)
    err = float(jnp.max(jnp.abs(out - ref)))
    assert err < 2e-4, f"mismatch vs reference: {err}"

    # Multi-tile path (exercises the parallel batch grid + padding/truncation).
    nBatch2 = 2304
    x2 = jax.random.uniform(k_x2, (nBatch2, nJoint), jnp.float32, -jnp.pi, jnp.pi)
    out2 = jax.block_until_ready(poe_forward(x2, eta, m_se3))
    ref2 = poe_forward_ref(x2, eta, m_se3)
    assert out2.shape == (nBatch2, 4, 4)
    err2 = float(jnp.max(jnp.abs(out2 - ref2)))
    assert err2 < 2e-4, f"mismatch vs reference (multi-tile): {err2}"

    print("KERNEL_OK")
</pallas_src>

<mosaic_0001>
module attributes {stable_mosaic.version = 11 : i64} {
  func.func @_poe_kernel(%arg0: i32, %arg1: memref<6x1x8x128xf32, #tpu.memory_space<vmem>>, %arg2: memref<6x19xf32, #tpu.memory_space<smem>>, %arg3: memref<12xf32, #tpu.memory_space<smem>>, %arg4: memref<12x1x8x128xf32, #tpu.memory_space<vmem>>) attributes {dimension_semantics = [#tpu.dimension_semantics<parallel>], iteration_bounds = array<i64: 1>, scalar_prefetch = 0 : i64, scratch_operands = 0 : i64, tpu.core_type = #tpu.core_type<tc>, window_params = [{transform_indices = @transform_0, window_bounds = array<i64: 6, 1, 8, 128>}, {transform_indices = @transform_1, window_bounds = array<i64: 6, 19>}, {transform_indices = @transform_2, window_bounds = array<i64: 12>}, {transform_indices = @transform_3, window_bounds = array<i64: 12, 1, 8, 128>}]} {
    %c0 = arith.constant 0 : index
    %c0_0 = arith.constant 0 : index
    %c0_1 = arith.constant 0 : index
    %c0_2 = arith.constant 0 : index
    %0 = vector.load %arg1[%c0, %c0_0, %c0_1, %c0_2] : memref<6x1x8x128xf32, #tpu.memory_space<vmem>>, vector<1x1x8x128xf32>
    %1 = vector.shape_cast %0 : vector<1x1x8x128xf32> to vector<8x128xf32>
    %c0_3 = arith.constant 0 : index
    %c0_4 = arith.constant 0 : index
    %2 = memref.load %arg2[%c0_3, %c0_4] : memref<6x19xf32, #tpu.memory_space<smem>>
    %3 = arith.mulf %1, %1 : vector<8x128xf32>
    %4 = vector.broadcast %2 : f32 to vector<8x128xf32>
    %5 = arith.mulf %3, %4 : vector<8x128xf32>
    %cst = arith.constant 9.99999996E-13 : f32
    %6 = vector.broadcast %cst : f32 to vector<8x128xf32>
    %7 = arith.cmpf olt, %5, %6 : vector<8x128xf32>
    %cst_5 = arith.constant 1.000000e+00 : f32
    %8 = vector.broadcast %cst_5 : f32 to vector<8x128xf32>
    %9 = arith.select %7, %8, %5 : vector<8x128xi1>, vector<8x128xf32>
    %10 = math.rsqrt %9 : vector<8x128xf32>
    %11 = arith.mulf %9, %10 : vector<8x128xf32>
    %12 = arith.mulf %10, %10 : vector<8x128xf32>
    %13 = math.sin %11 : vector<8x128xf32>
    %14 = math.cos %11 : vector<8x128xf32>
    %cst_6 = arith.constant 0.166666672 : f32
    %15 = vector.broadcast %cst_6 : f32 to vector<8x128xf32>
    %16 = arith.mulf %5, %15 : vector<8x128xf32>
    %cst_7 = arith.constant 1.000000e+00 : f32
    %17 = vector.broadcast %cst_7 : f32 to vector<8x128xf32>
    %18 = arith.subf %17, %16 : vector<8x128xf32>
    %19 = arith.mulf %13, %10 : vector<8x128xf32>
    %20 = arith.select %7, %18, %19 : vector<8x128xi1>, vector<8x128xf32>
    %cst_8 = arith.constant 0.0416666679 : f32
    %21 = vector.broadcast %cst_8 : f32 to vector<8x128xf32>
    %22 = arith.mulf %5, %21 : vector<8x128xf32>
    %cst_9 = arith.constant 5.000000e-01 : f32
    %23 = vector.broadcast %cst_9 : f32 to vector<8x128xf32>
    %24 = arith.subf %23, %22 : vector<8x128xf32>
    %cst_10 = arith.constant 1.000000e+00 : f32
    %25 = vector.broadcast %cst_10 : f32 to vector<8x128xf32>
    %26 = arith.subf %25, %14 : vector<8x128xf32>
    %27 = arith.mulf %26, %12 : vector<8x128xf32>
    %28 = arith.select %7, %24, %27 : vector<8x128xi1>, vector<8x128xf32>
    %cst_11 = arith.constant 0.00833333377 : f32
    %29 = vector.broadcast %cst_11 : f32 to vector<8x128xf32>
    %30 = arith.mulf %5, %29 : vector<8x128xf32>
    %cst_12 = arith.constant 0.166666672 : f32
    %31 = vector.broadcast %cst_12 : f32 to vector<8x128xf32>
    %32 = arith.subf %31, %30 : vector<8x128xf32>
    %33 = arith.subf %11, %13 : vector<8x128xf32>
    %34 = arith.mulf %12, %10 : vector<8x128xf32>
    %35 = arith.mulf %33, %34 : vector<8x128xf32>
    %36 = arith.select %7, %32, %35 : vector<8x128xi1>, vector<8x128xf32>
    %37 = arith.mulf %20, %1 : vector<8x128xf32>
    %38 = arith.mulf %28, %3 : vector<8x128xf32>
    %39 = arith.mulf %36, %3 : vector<8x128xf32>
    %40 = arith.mulf %39, %1 : vector<8x128xf32>
    %c0_13 = arith.constant 0 : index
    %c1 = arith.constant 1 : index
    %41 = memref.load %arg2[%c0_13, %c1] : memref<6x19xf32, #tpu.memory_space<smem>>
    %c0_14 = arith.constant 0 : index
    %c2 = arith.constant 2 : index
    %42 = memref.load %arg2[%c0_14, %c2] : memref<6x19xf32, #tpu.memory_space<smem>>
    %c0_15 = arith.constant 0 : index
    %c3 = arith.constant 3 : index
    %43 = memref.load %arg2[%c0_15, %c3] : memref<6x19xf32, #tpu.memory_space<smem>>
    %c0_16 = arith.constant 0 : index
    %c4 = arith.constant 4 : index
    %44 = memref.load %arg2[%c0_16, %c4] : memref<6x19xf32, #tpu.memory_space<smem>>
    %c0_17 = arith.constant 0 : index
    %c5 = arith.constant 5 : index
    %45 = memref.load %arg2[%c0_17, %c5] : memref<6x19xf32, #tpu.memory_space<smem>>
    %c0_18 = arith.constant 0 : index
    %c6 = arith.constant 6 : index
    %46 = memref.load %arg2[%c0_18, %c6] : memref<6x19xf32, #tpu.memory_space<smem>>
    %c0_19 = arith.constant 0 : index
    %c7 = arith.constant 7 : index
    %47 = memref.load %arg2[%c0_19, %c7] : memref<6x19xf32, #tpu.memory_space<smem>>
    %c0_20 = arith.constant 0 : index
    %c8 = arith.constant 8 : index
    %48 = memref.load %arg2[%c0_20, %c8] : memref<6x19xf32, #tpu.memory_space<smem>>
    %c0_21 = arith.constant 0 : index
    %c9 = arith.constant 9 : index
    %49 = memref.load %arg2[%c0_21, %c9] : memref<6x19xf32, #tpu.memory_space<smem>>
    %50 = vector.broadcast %47 : f32 to vector<8x128xf32>
    %51 = arith.mulf %38, %50 : vector<8x128xf32>
    %cst_22 = arith.constant 1.000000e+00 : f32
    %52 = vector.broadcast %cst_22 : f32 to vector<8x128xf32>
    %53 = arith.subf %52, %51 : vector<8x128xf32>
    %54 = vector.broadcast %44 : f32 to vector<8x128xf32>
    %55 = arith.mulf %38, %54 : vector<8x128xf32>
    %56 = vector.broadcast %43 : f32 to vector<8x128xf32>
    %57 = arith.mulf %37, %56 : vector<8x128xf32>
    %58 = arith.subf %55, %57 : vector<8x128xf32>
    %59 = vector.broadcast %45 : f32 to vector<8x128xf32>
    %60 = arith.mulf %38, %59 : vector<8x128xf32>
    %61 = vector.broadcast %42 : f32 to vector<8x128xf32>
    %62 = arith.mulf %37, %61 : vector<8x128xf32>
    %63 = arith.addf %60, %62 : vector<8x128xf32>
    %64 = vector.broadcast %44 : f32 to vector<8x128xf32>
    %65 = arith.mulf %38, %64 : vector<8x128xf32>
    %66 = vector.broadcast %43 : f32 to vector<8x128xf32>
    %67 = arith.mulf %37, %66 : vector<8x128xf32>
    %68 = arith.addf %65, %67 : vector<8x128xf32>
    %69 = vector.broadcast %48 : f32 to vector<8x128xf32>
    %70 = arith.mulf %38, %69 : vector<8x128xf32>
    %cst_23 = arith.constant 1.000000e+00 : f32
    %71 = vector.broadcast %cst_23 : f32 to vector<8x128xf32>
    %72 = arith.subf %71, %70 : vector<8x128xf32>
    %73 = vector.broadcast %46 : f32 to vector<8x128xf32>
    %74 = arith.mulf %38, %73 : vector<8x128xf32>
    %75 = vector.broadcast %41 : f32 to vector<8x128xf32>
    %76 = arith.mulf %37, %75 : vector<8x128xf32>
    %77 = arith.subf %74, %76 : vector<8x128xf32>
    %78 = vector.broadcast %45 : f32 to vector<8x128xf32>
    %79 = arith.mulf %38, %78 : vector<8x128xf32>
    %80 = vector.broadcast %42 : f32 to vector<8x128xf32>
    %81 = arith.mulf %37, %80 : vector<8x128xf32>
    %82 = arith.subf %79, %81 : vector<8x128xf32>
    %83 = vector.broadcast %46 : f32 to vector<8x128xf32>
    %84 = arith.mulf %38, %83 : vector<8x128xf32>
    %85 = vector.broadcast %41 : f32 to vector<8x128xf32>
    %86 = arith.mulf %37, %85 : vector<8x128xf32>
    %87 = arith.addf %84, %86 : vector<8x128xf32>
    %88 = vector.broadcast %49 : f32 to vector<8x128xf32>
    %89 = arith.mulf %38, %88 : vector<8x128xf32>
    %cst_24 = arith.constant 1.000000e+00 : f32
    %90 = vector.broadcast %cst_24 : f32 to vector<8x128xf32>
    %91 = arith.subf %90, %89 : vector<8x128xf32>
    %c0_25 = arith.constant 0 : index
    %c10 = arith.constant 10 : index
    %92 = memref.load %arg2[%c0_25, %c10] : memref<6x19xf32, #tpu.memory_space<smem>>
    %93 = vector.broadcast %92 : f32 to vector<8x128xf32>
    %94 = arith.mulf %1, %93 : vector<8x128xf32>
    %c0_26 = arith.constant 0 : index
    %c13 = arith.constant 13 : index
    %95 = memref.load %arg2[%c0_26, %c13] : memref<6x19xf32, #tpu.memory_space<smem>>
    %96 = vector.broadcast %95 : f32 to vector<8x128xf32>
    %97 = arith.mulf %38, %96 : vector<8x128xf32>
    %98 = arith.addf %94, %97 : vector<8x128xf32>
    %c0_27 = arith.constant 0 : index
    %c16 = arith.constant 16 : index
    %99 = memref.load %arg2[%c0_27, %c16] : memref<6x19xf32, #tpu.memory_space<smem>>
    %100 = vector.broadcast %99 : f32 to vector<8x128xf32>
    %101 = arith.mulf %40, %100 : vector<8x128xf32>
    %102 = arith.addf %98, %101 : vector<8x128xf32>
    %c0_28 = arith.constant 0 : index
    %c11 = arith.constant 11 : index
    %103 = memref.load %arg2[%c0_28, %c11] : memref<6x19xf32, #tpu.memory_space<smem>>
    %104 = vector.broadcast %103 : f32 to vector<8x128xf32>
    %105 = arith.mulf %1, %104 : vector<8x128xf32>
    %c0_29 = arith.constant 0 : index
    %c14 = arith.constant 14 : index
    %106 = memref.load %arg2[%c0_29, %c14] : memref<6x19xf32, #tpu.memory_space<smem>>
    %107 = vector.broadcast %106 : f32 to vector<8x128xf32>
    %108 = arith.mulf %38, %107 : vector<8x128xf32>
    %109 = arith.addf %105, %108 : vector<8x128xf32>
    %c0_30 = arith.constant 0 : index
    %c17 = arith.constant 17 : index
    %110 = memref.load %arg2[%c0_30, %c17] : memref<6x19xf32, #tpu.memory_space<smem>>
    %111 = vector.broadcast %110 : f32 to vector<8x128xf32>
    %112 = arith.mulf %40, %111 : vector<8x128xf32>
    %113 = arith.addf %109, %112 : vector<8x128xf32>
    %c0_31 = arith.constant 0 : index
    %c12 = arith.constant 12 : index
    %114 = memref.load %arg2[%c0_31, %c12] : memref<6x19xf32, #tpu.memory_space<smem>>
    %115 = vector.broadcast %114 : f32 to vector<8x128xf32>
    %116 = arith.mulf %1, %115 : vector<8x128xf32>
    %c0_32 = arith.constant 0 : index
    %c15 = arith.constant 15 : index
    %117 = memref.load %arg2[%c0_32, %c15] : memref<6x19xf32, #tpu.memory_space<smem>>
    %118 = vector.broadcast %117 : f32 to vector<8x128xf32>
    %119 = arith.mulf %38, %118 : vector<8x128xf32>
    %120 = arith.addf %116, %119 : vector<8x128xf32>
    %c0_33 = arith.constant 0 : index
    %c18 = arith.constant 18 : index
    %121 = memref.load %arg2[%c0_33, %c18] : memref<6x19xf32, #tpu.memory_space<smem>>
    %122 = vector.broadcast %121 : f32 to vector<8x128xf32>
    %123 = arith.mulf %40, %122 : vector<8x128xf32>
    %124 = arith.addf %120, %123 : vector<8x128xf32>
    %c1_34 = arith.constant 1 : index
    %c0_35 = arith.constant 0 : index
    %c0_36 = arith.constant 0 : index
    %c0_37 = arith.constant 0 : index
    %125 = vector.load %arg1[%c1_34, %c0_35, %c0_36, %c0_37] : memref<6x1x8x128xf32, #tpu.memory_space<vmem>>, vector<1x1x8x128xf32>
    %126 = vector.shape_cast %125 : vector<1x1x8x128xf32> to vector<8x128xf32>
    %c1_38 = arith.constant 1 : index
    %c0_39 = arith.constant 0 : index
    %127 = memref.load %arg2[%c1_38, %c0_39] : memref<6x19xf32, #tpu.memory_space<smem>>
    %128 = arith.mulf %126, %126 : vector<8x128xf32>
    %129 = vector.broadcast %127 : f32 to vector<8x128xf32>
    %130 = arith.mulf %128, %129 : vector<8x128xf32>
    %cst_40 = arith.constant 9.99999996E-13 : f32
    %131 = vector.broadcast %cst_40 : f32 to vector<8x128xf32>
    %132 = arith.cmpf olt, %130, %131 : vector<8x128xf32>
    %cst_41 = arith.constant 1.000000e+00 : f32
    %133 = vector.broadcast %cst_41 : f32 to vector<8x128xf32>
    %134 = arith.select %132, %133, %130 : vector<8x128xi1>, vector<8x128xf32>
    %135 = math.rsqrt %134 : vector<8x128xf32>
    %136 = arith.mulf %134, %135 : vector<8x128xf32>
    %137 = arith.mulf %135, %135 : vector<8x128xf32>
    %138 = math.sin %136 : vector<8x128xf32>
    %139 = math.cos %136 : vector<8x128xf32>
    %cst_42 = arith.constant 0.166666672 : f32
    %140 = vector.broadcast %cst_42 : f32 to vector<8x128xf32>
    %141 = arith.mulf %130, %140 : vector<8x128xf32>
    %cst_43 = arith.constant 1.000000e+00 : f32
    %142 = vector.broadcast %cst_43 : f32 to vector<8x128xf32>
    %143 = arith.subf %142, %141 : vector<8x128xf32>
    %144 = arith.mulf %138, %135 : vector<8x128xf32>
    %145 = arith.select %132, %143, %144 : vector<8x128xi1>, vector<8x128xf32>
    %cst_44 = arith.constant 0.0416666679 : f32
    %146 = vector.broadcast %cst_44 : f32 to vector<8x128xf32>
    %147 = arith.mulf %130, %146 : vector<8x128xf32>
    %cst_45 = arith.constant 5.000000e-01 : f32
    %148 = vector.broadcast %cst_45 : f32 to vector<8x128xf32>
    %149 = arith.subf %148, %147 : vector<8x128xf32>
    %cst_46 = arith.constant 1.000000e+00 : f32
    %150 = vector.broadcast %cst_46 : f32 to vector<8x128xf32>
    %151 = arith.subf %150, %139 : vector<8x128xf32>
    %152 = arith.mulf %151, %137 : vector<8x128xf32>
    %153 = arith.select %132, %149, %152 : vector<8x128xi1>, vector<8x128xf32>
    %cst_47 = arith.constant 0.00833333377 : f32
    %154 = vector.broadcast %cst_47 : f32 to vector<8x128xf32>
    %155 = arith.mulf %130, %154 : vector<8x128xf32>
    %cst_48 = arith.constant 0.166666672 : f32
    %156 = vector.broadcast %cst_48 : f32 to vector<8x128xf32>
    %157 = arith.subf %156, %155 : vector<8x128xf32>
    %158 = arith.subf %136, %138 : vector<8x128xf32>
    %159 = arith.mulf %137, %135 : vector<8x128xf32>
    %160 = arith.mulf %158, %159 : vector<8x128xf32>
    %161 = arith.select %132, %157, %160 : vector<8x128xi1>, vector<8x128xf32>
    %162 = arith.mulf %145, %126 : vector<8x128xf32>
    %163 = arith.mulf %153, %128 : vector<8x128xf32>
    %164 = arith.mulf %161, %128 : vector<8x128xf32>
    %165 = arith.mulf %164, %126 : vector<8x128xf32>
    %c1_49 = arith.constant 1 : index
    %c1_50 = arith.constant 1 : index
    %166 = memref.load %arg2[%c1_49, %c1_50] : memref<6x19xf32, #tpu.memory_space<smem>>
    %c1_51 = arith.constant 1 : index
    %c2_52 = arith.constant 2 : index
    %167 = memref.load %arg2[%c1_51, %c2_52] : memref<6x19xf32, #tpu.memory_space<smem>>
    %c1_53 = arith.constant 1 : index
    %c3_54 = arith.constant 3 : index
    %168 = memref.load %arg2[%c1_53, %c3_54] : memref<6x19xf32, #tpu.memory_space<smem>>
    %c1_55 = arith.constant 1 : index
    %c4_56 = arith.constant 4 : index
    %169 = memref.load %arg2[%c1_55, %c4_56] : memref<6x19xf32, #tpu.memory_space<smem>>
    %c1_57 = arith.constant 1 : index
    %c5_58 = arith.constant 5 : index
    %170 = memref.load %arg2[%c1_57, %c5_58] : memref<6x19xf32, #tpu.memory_space<smem>>
    %c1_59 = arith.constant 1 : index
    %c6_60 = arith.constant 6 : index
    %171 = memref.load %arg2[%c1_59, %c6_60] : memref<6x19xf32, #tpu.memory_space<smem>>
    %c1_61 = arith.constant 1 : index
    %c7_62 = arith.constant 7 : index
    %172 = memref.load %arg2[%c1_61, %c7_62] : memref<6x19xf32, #tpu.memory_space<smem>>
    %c1_63 = arith.constant 1 : index
    %c8_64 = arith.constant 8 : index
    %173 = memref.load %arg2[%c1_63, %c8_64] : memref<6x19xf32, #tpu.memory_space<smem>>
    %c1_65 = arith.constant 1 : index
    %c9_66 = arith.constant 9 : index
    %174 = memref.load %arg2[%c1_65, %c9_66] : memref<6x19xf32, #tpu.memory_space<smem>>
    %175 = vector.broadcast %172 : f32 to vector<8x128xf32>
    %176 = arith.mulf %163, %175 : vector<8x128xf32>
    %cst_67 = arith.constant 1.000000e+00 : f32
    %177 = vector.broadcast %cst_67 : f32 to vector<8x128xf32>
    %178 = arith.subf %177, %176 : vector<8x128xf32>
    %179 = vector.broadcast %169 : f32 to vector<8x128xf32>
    %180 = arith.mulf %163, %179 : vector<8x128xf32>
    %181 = vector.broadcast %168 : f32 to vector<8x128xf32>
    %182 = arith.mulf %162, %181 : vector<8x128xf32>
    %183 = arith.subf %180, %182 : vector<8x128xf32>
    %184 = vector.broadcast %170 : f32 to vector<8x128xf32>
    %185 = arith.mulf %163, %184 : vector<8x128xf32>
    %186 = vector.broadcast %167 : f32 to vector<8x128xf32>
    %187 = arith.mulf %162, %186 : vector<8x128xf32>
    %188 = arith.addf %185, %187 : vector<8x128xf32>
    %189 = vector.broadcast %169 : f32 to vector<8x128xf32>
    %190 = arith.mulf %163, %189 : vector<8x128xf32>
    %191 = vector.broadcast %168 : f32 to vector<8x128xf32>
    %192 = arith.mulf %162, %191 : vector<8x128xf32>
    %193 = arith.addf %190, %192 : vector<8x128xf32>
    %194 = vector.broadcast %173 : f32 to vector<8x128xf32>
    %195 = arith.mulf %163, %194 : vector<8x128xf32>
    %cst_68 = arith.constant 1.000000e+00 : f32
    %196 = vector.broadcast %cst_68 : f32 to vector<8x128xf32>
    %197 = arith.subf %196, %195 : vector<8x128xf32>
    %198 = vector.broadcast %171 : f32 to vector<8x128xf32>
    %199 = arith.mulf %163, %198 : vector<8x128xf32>
    %200 = vector.broadcast %166 : f32 to vector<8x128xf32>
    %201 = arith.mulf %162, %200 : vector<8x128xf32>
    %202 = arith.subf %199, %201 : vector<8x128xf32>
    %203 = vector.broadcast %170 : f32 to vector<8x128xf32>
    %204 = arith.mulf %163, %203 : vector<8x128xf32>
    %205 = vector.broadcast %167 : f32 to vector<8x128xf32>
    %206 = arith.mulf %162, %205 : vector<8x128xf32>
    %207 = arith.subf %204, %206 : vector<8x128xf32>
    %208 = vector.broadcast %171 : f32 to vector<8x128xf32>
    %209 = arith.mulf %163, %208 : vector<8x128xf32>
    %210 = vector.broadcast %166 : f32 to vector<8x128xf32>
    %211 = arith.mulf %162, %210 : vector<8x128xf32>
    %212 = arith.addf %209, %211 : vector<8x128xf32>
    %213 = vector.broadcast %174 : f32 to vector<8x128xf32>
    %214 = arith.mulf %163, %213 : vector<8x128xf32>
    %cst_69 = arith.constant 1.000000e+00 : f32
    %215 = vector.broadcast %cst_69 : f32 to vector<8x128xf32>
    %216 = arith.subf %215, %214 : vector<8x128xf32>
    %c1_70 = arith.constant 1 : index
    %c10_71 = arith.constant 10 : index
    %217 = memref.load %arg2[%c1_70, %c10_71] : memref<6x19xf32, #tpu.memory_space<smem>>
    %218 = vector.broadcast %217 : f32 to vector<8x128xf32>
    %219 = arith.mulf %126, %218 : vector<8x128xf32>
    %c1_72 = arith.constant 1 : index
    %c13_73 = arith.constant 13 : index
    %220 = memref.load %arg2[%c1_72, %c13_73] : memref<6x19xf32, #tpu.memory_space<smem>>
    %221 = vector.broadcast %220 : f32 to vector<8x128xf32>
    %222 = arith.mulf %163, %221 : vector<8x128xf32>
    %223 = arith.addf %219, %222 : vector<8x128xf32>
    %c1_74 = arith.constant 1 : index
    %c16_75 = arith.constant 16 : index
    %224 = memref.load %arg2[%c1_74, %c16_75] : memref<6x19xf32, #tpu.memory_space<smem>>
    %225 = vector.broadcast %224 : f32 to vector<8x128xf32>
    %226 = arith.mulf %165, %225 : vector<8x128xf32>
    %227 = arith.addf %223, %226 : vector<8x128xf32>
    %c1_76 = arith.constant 1 : index
    %c11_77 = arith.constant 11 : index
    %228 = memref.load %arg2[%c1_76, %c11_77] : memref<6x19xf32, #tpu.memory_space<smem>>
    %229 = vector.broadcast %228 : f32 to vector<8x128xf32>
    %230 = arith.mulf %126, %229 : vector<8x128xf32>
    %c1_78 = arith.constant 1 : index
    %c14_79 = arith.constant 14 : index
    %231 = memref.load %arg2[%c1_78, %c14_79] : memref<6x19xf32, #tpu.memory_space<smem>>
    %232 = vector.broadcast %231 : f32 to vector<8x128xf32>
    %233 = arith.mulf %163, %232 : vector<8x128xf32>
    %234 = arith.addf %230, %233 : vector<8x128xf32>
    %c1_80 = arith.constant 1 : index
    %c17_81 = arith.constant 17 : index
    %235 = memref.load %arg2[%c1_80, %c17_81] : memref<6x19xf32, #tpu.memory_space<smem>>
    %236 = vector.broadcast %235 : f32 to vector<8x128xf32>
    %237 = arith.mulf %165, %236 : vector<8x128xf32>
    %238 = arith.addf %234, %237 : vector<8x128xf32>
    %c1_82 = arith.constant 1 : index
    %c12_83 = arith.constant 12 : index
    %239 = memref.load %arg2[%c1_82, %c12_83] : memref<6x19xf32, #tpu.memory_space<smem>>
    %240 = vector.broadcast %239 : f32 to vector<8x128xf32>
    %241 = arith.mulf %126, %240 : vector<8x128xf32>
    %c1_84 = arith.constant 1 : index
    %c15_85 = arith.constant 15 : index
    %242 = memref.load %arg2[%c1_84, %c15_85] : memref<6x19xf32, #tpu.memory_space<smem>>
    %243 = vector.broadcast %242 : f32 to vector<8x128xf32>
    %244 = arith.mulf %163, %243 : vector<8x128xf32>
    %245 = arith.addf %241, %244 : vector<8x128xf32>
    %c1_86 = arith.constant 1 : index
    %c18_87 = arith.constant 18 : index
    %246 = memref.load %arg2[%c1_86, %c18_87] : memref<6x19xf32, #tpu.memory_space<smem>>
    %247 = vector.broadcast %246 : f32 to vector<8x128xf32>
    %248 = arith.mulf %165, %247 : vector<8x128xf32>
    %249 = arith.addf %245, %248 : vector<8x128xf32>
    %250 = arith.mulf %53, %178 : vector<8x128xf32>
    %251 = arith.mulf %58, %193 : vector<8x128xf32>
    %252 = arith.addf %250, %251 : vector<8x128xf32>
    %253 = arith.mulf %63, %207 : vector<8x128xf32>
    %254 = arith.addf %252, %253 : vector<8x128xf32>
    %255 = arith.mulf %53, %183 : vector<8x128xf32>
    %256 = arith.mulf %58, %197 : vector<8x128xf32>
    %257 = arith.addf %255, %256 : vector<8x128xf32>
    %258 = arith.mulf %63, %212 : vector<8x128xf32>
    %259 = arith.addf %257, %258 : vector<8x128xf32>
    %260 = arith.mulf %53, %188 : vector<8x128xf32>
    %261 = arith.mulf %58, %202 : vector<8x128xf32>
    %262 = arith.addf %260, %261 : vector<8x128xf32>
    %263 = arith.mulf %63, %216 : vector<8x128xf32>
    %264 = arith.addf %262, %263 : vector<8x128xf32>
    %265 = arith.mulf %68, %178 : vector<8x128xf32>
    %266 = arith.mulf %72, %193 : vector<8x128xf32>
    %267 = arith.addf %265, %266 : vector<8x128xf32>
    %268 = arith.mulf %77, %207 : vector<8x128xf32>
    %269 = arith.addf %267, %268 : vector<8x128xf32>
    %270 = arith.mulf %68, %183 : vector<8x128xf32>
    %271 = arith.mulf %72, %197 : vector<8x128xf32>
    %272 = arith.addf %270, %271 : vector<8x128xf32>
    %273 = arith.mulf %77, %212 : vector<8x128xf32>
    %274 = arith.addf %272, %273 : vector<8x128xf32>
    %275 = arith.mulf %68, %188 : vector<8x128xf32>
    %276 = arith.mulf %72, %202 : vector<8x128xf32>
    %277 = arith.addf %275, %276 : vector<8x128xf32>
    %278 = arith.mulf %77, %216 : vector<8x128xf32>
    %279 = arith.addf %277, %278 : vector<8x128xf32>
    %280 = arith.mulf %82, %178 : vector<8x128xf32>
    %281 = arith.mulf %87, %193 : vector<8x128xf32>
    %282 = arith.addf %280, %281 : vector<8x128xf32>
    %283 = arith.mulf %91, %207 : vector<8x128xf32>
    %284 = arith.addf %282, %283 : vector<8x128xf32>
    %285 = arith.mulf %82, %183 : vector<8x128xf32>
    %286 = arith.mulf %87, %197 : vector<8x128xf32>
    %287 = arith.addf %285, %286 : vector<8x128xf32>
    %288 = arith.mulf %91, %212 : vector<8x128xf32>
    %289 = arith.addf %287, %288 : vector<8x128xf32>
    %290 = arith.mulf %82, %188 : vector<8x128xf32>
    %291 = arith.mulf %87, %202 : vector<8x128xf32>
    %292 = arith.addf %290, %291 : vector<8x128xf32>
    %293 = arith.mulf %91, %216 : vector<8x128xf32>
    %294 = arith.addf %292, %293 : vector<8x128xf32>
    %295 = arith.mulf %53, %227 : vector<8x128xf32>
    %296 = arith.mulf %58, %238 : vector<8x128xf32>
    %297 = arith.addf %295, %296 : vector<8x128xf32>
    %298 = arith.mulf %63, %249 : vector<8x128xf32>
    %299 = arith.addf %297, %298 : vector<8x128xf32>
    %300 = arith.addf %299, %102 : vector<8x128xf32>
    %301 = arith.mulf %68, %227 : vector<8x128xf32>
    %302 = arith.mulf %72, %238 : vector<8x128xf32>
    %303 = arith.addf %301, %302 : vector<8x128xf32>
    %304 = arith.mulf %77, %249 : vector<8x128xf32>
    %305 = arith.addf %303, %304 : vector<8x128xf32>
    %306 = arith.addf %305, %113 : vector<8x128xf32>
    %307 = arith.mulf %82, %227 : vector<8x128xf32>
    %308 = arith.mulf %87, %238 : vector<8x128xf32>
    %309 = arith.addf %307, %308 : vector<8x128xf32>
    %310 = arith.mulf %91, %249 : vector<8x128xf32>
    %311 = arith.addf %309, %310 : vector<8x128xf32>
    %312 = arith.addf %311, %124 : vector<8x128xf32>
    %c2_88 = arith.constant 2 : index
    %c0_89 = arith.constant 0 : index
    %c0_90 = arith.constant 0 : index
    %c0_91 = arith.constant 0 : index
    %313 = vector.load %arg1[%c2_88, %c0_89, %c0_90, %c0_91] : memref<6x1x8x128xf32, #tpu.memory_space<vmem>>, vector<1x1x8x128xf32>
    %314 = vector.shape_cast %313 : vector<1x1x8x128xf32> to vector<8x128xf32>
    %c2_92 = arith.constant 2 : index
    %c0_93 = arith.constant 0 : index
    %315 = memref.load %arg2[%c2_92, %c0_93] : memref<6x19xf32, #tpu.memory_space<smem>>
    %316 = arith.mulf %314, %314 : vector<8x128xf32>
    %317 = vector.broadcast %315 : f32 to vector<8x128xf32>
    %318 = arith.mulf %316, %317 : vector<8x128xf32>
    %cst_94 = arith.constant 9.99999996E-13 : f32
    %319 = vector.broadcast %cst_94 : f32 to vector<8x128xf32>
    %320 = arith.cmpf olt, %318, %319 : vector<8x128xf32>
    %cst_95 = arith.constant 1.000000e+00 : f32
    %321 = vector.broadcast %cst_95 : f32 to vector<8x128xf32>
    %322 = arith.select %320, %321, %318 : vector<8x128xi1>, vector<8x128xf32>
    %323 = math.rsqrt %322 : vector<8x128xf32>
    %324 = arith.mulf %322, %323 : vector<8x128xf32>
    %325 = arith.mulf %323, %323 : vector<8x128xf32>
    %326 = math.sin %324 : vector<8x128xf32>
    %327 = math.cos %324 : vector<8x128xf32>
    %cst_96 = arith.constant 0.166666672 : f32
    %328 = vector.broadcast %cst_96 : f32 to vector<8x128xf32>
    %329 = arith.mulf %318, %328 : vector<8x128xf32>
    %cst_97 = arith.constant 1.000000e+00 : f32
    %330 = vector.broadcast %cst_97 : f32 to vector<8x128xf32>
    %331 = arith.subf %330, %329 : vector<8x128xf32>
    %332 = arith.mulf %326, %323 : vector<8x128xf32>
    %333 = arith.select %320, %331, %332 : vector<8x128xi1>, vector<8x128xf32>
    %cst_98 = arith.constant 0.0416666679 : f32
    %334 = vector.broadcast %cst_98 : f32 to vector<8x128xf32>
    %335 = arith.mulf %318, %334 : vector<8x128xf32>
    %cst_99 = arith.constant 5.000000e-01 : f32
    %336 = vector.broadcast %cst_99 : f32 to vector<8x128xf32>
    %337 = arith.subf %336, %335 : vector<8x128xf32>
    %cst_100 = arith.constant 1.000000e+00 : f32
    %338 = vector.broadcast %cst_100 : f32 to vector<8x128xf32>
    %339 = arith.subf %338, %327 : vector<8x128xf32>
    %340 = arith.mulf %339, %325 : vector<8x128xf32>
    %341 = arith.select %320, %337, %340 : vector<8x128xi1>, vector<8x128xf32>
    %cst_101 = arith.constant 0.00833333377 : f32
    %342 = vector.broadcast %cst_101 : f32 to vector<8x128xf32>
    %343 = arith.mulf %318, %342 : vector<8x128xf32>
    %cst_102 = arith.constant 0.166666672 : f32
    %344 = vector.broadcast %cst_102 : f32 to vector<8x128xf32>
    %345 = arith.subf %344, %343 : vector<8x128xf32>
    %346 = arith.subf %324, %326 : vector<8x128xf32>
    %347 = arith.mulf %325, %323 : vector<8x128xf32>
    %348 = arith.mulf %346, %347 : vector<8x128xf32>
    %349 = arith.select %320, %345, %348 : vector<8x128xi1>, vector<8x128xf32>
    %350 = arith.mulf %333, %314 : vector<8x128xf32>
    %351 = arith.mulf %341, %316 : vector<8x128xf32>
    %352 = arith.mulf %349, %316 : vector<8x128xf32>
    %353 = arith.mulf %352, %314 : vector<8x128xf32>
    %c2_103 = arith.constant 2 : index
    %c1_104 = arith.constant 1 : index
    %354 = memref.load %arg2[%c2_103, %c1_104] : memref<6x19xf32, #tpu.memory_space<smem>>
    %c2_105 = arith.constant 2 : index
    %c2_106 = arith.constant 2 : index
    %355 = memref.load %arg2[%c2_105, %c2_106] : memref<6x19xf32, #tpu.memory_space<smem>>
    %c2_107 = arith.constant 2 : index
    %c3_108 = arith.constant 3 : index
    %356 = memref.load %arg2[%c2_107, %c3_108] : memref<6x19xf32, #tpu.memory_space<smem>>
    %c2_109 = arith.constant 2 : index
    %c4_110 = arith.constant 4 : index
    %357 = memref.load %arg2[%c2_109, %c4_110] : memref<6x19xf32, #tpu.memory_space<smem>>
    %c2_111 = arith.constant 2 : index
    %c5_112 = arith.constant 5 : index
    %358 = memref.load %arg2[%c2_111, %c5_112] : memref<6x19xf32, #tpu.memory_space<smem>>
    %c2_113 = arith.constant 2 : index
    %c6_114 = arith.constant 6 : index
    %359 = memref.load %arg2[%c2_113, %c6_114] : memref<6x19xf32, #tpu.memory_space<smem>>
    %c2_115 = arith.constant 2 : index
    %c7_116 = arith.constant 7 : index
    %360 = memref.load %arg2[%c2_115, %c7_116] : memref<6x19xf32, #tpu.memory_space<smem>>
    %c2_117 = arith.constant 2 : index
    %c8_118 = arith.constant 8 : index
    %361 = memref.load %arg2[%c2_117, %c8_118] : memref<6x19xf32, #tpu.memory_space<smem>>
    %c2_119 = arith.constant 2 : index
    %c9_120 = arith.constant 9 : index
    %362 = memref.load %arg2[%c2_119, %c9_120] : memref<6x19xf32, #tpu.memory_space<smem>>
    %363 = vector.broadcast %360 : f32 to vector<8x128xf32>
    %364 = arith.mulf %351, %363 : vector<8x128xf32>
    %cst_121 = arith.constant 1.000000e+00 : f32
    %365 = vector.broadcast %cst_121 : f32 to vector<8x128xf32>
    %366 = arith.subf %365, %364 : vector<8x128xf32>
    %367 = vector.broadcast %357 : f32 to vector<8x128xf32>
    %368 = arith.mulf %351, %367 : vector<8x128xf32>
    %369 = vector.broadcast %356 : f32 to vector<8x128xf32>
    %370 = arith.mulf %350, %369 : vector<8x128xf32>
    %371 = arith.subf %368, %370 : vector<8x128xf32>
    %372 = vector.broadcast %358 : f32 to vector<8x128xf32>
    %373 = arith.mulf %351, %372 : vector<8x128xf32>
    %374 = vector.broadcast %355 : f32 to vector<8x128xf32>
    %375 = arith.mulf %350, %374 : vector<8x128xf32>
    %376 = arith.addf %373, %375 : vector<8x128xf32>
    %377 = vector.broadcast %357 : f32 to vector<8x128xf32>
    %378 = arith.mulf %351, %377 : vector<8x128xf32>
    %379 = vector.broadcast %356 : f32 to vector<8x128xf32>
    %380 = arith.mulf %350, %379 : vector<8x128xf32>
    %381 = arith.addf %378, %380 : vector<8x128xf32>
    %382 = vector.broadcast %361 : f32 to vector<8x128xf32>
    %383 = arith.mulf %351, %382 : vector<8x128xf32>
    %cst_122 = arith.constant 1.000000e+00 : f32
    %384 = vector.broadcast %cst_122 : f32 to vector<8x128xf32>
    %385 = arith.subf %384, %383 : vector<8x128xf32>
    %386 = vector.broadcast %359 : f32 to vector<8x128xf32>
    %387 = arith.mulf %351, %386 : vector<8x128xf32>
    %388 = vector.broadcast %354 : f32 to vector<8x128xf32>
    %389 = arith.mulf %350, %388 : vector<8x128xf32>
    %390 = arith.subf %387, %389 : vector<8x128xf32>
    %391 = vector.broadcast %358 : f32 to vector<8x128xf32>
    %392 = arith.mulf %351, %391 : vector<8x128xf32>
    %393 = vector.broadcast %355 : f32 to vector<8x128xf32>
    %394 = arith.mulf %350, %393 : vector<8x128xf32>
    %395 = arith.subf %392, %394 : vector<8x128xf32>
    %396 = vector.broadcast %359 : f32 to vector<8x128xf32>
    %397 = arith.mulf %351, %396 : vector<8x128xf32>
    %398 = vector.broadcast %354 : f32 to vector<8x128xf32>
    %399 = arith.mulf %350, %398 : vector<8x128xf32>
    %400 = arith.addf %397, %399 : vector<8x128xf32>
    %401 = vector.broadcast %362 : f32 to vector<8x128xf32>
    %402 = arith.mulf %351, %401 : vector<8x128xf32>
    %cst_123 = arith.constant 1.000000e+00 : f32
    %403 = vector.broadcast %cst_123 : f32 to vector<8x128xf32>
    %404 = arith.subf %403, %402 : vector<8x128xf32>
    %c2_124 = arith.constant 2 : index
    %c10_125 = arith.constant 10 : index
    %405 = memref.load %arg2[%c2_124, %c10_125] : memref<6x19xf32, #tpu.memory_space<smem>>
    %406 = vector.broadcast %405 : f32 to vector<8x128xf32>
    %407 = arith.mulf %314, %406 : vector<8x128xf32>
    %c2_126 = arith.constant 2 : index
    %c13_127 = arith.constant 13 : index
    %408 = memref.load %arg2[%c2_126, %c13_127] : memref<6x19xf32, #tpu.memory_space<smem>>
    %409 = vector.broadcast %408 : f32 to vector<8x128xf32>
    %410 = arith.mulf %351, %409 : vector<8x128xf32>
    %411 = arith.addf %407, %410 : vector<8x128xf32>
    %c2_128 = arith.constant 2 : index
    %c16_129 = arith.constant 16 : index
    %412 = memref.load %arg2[%c2_128, %c16_129] : memref<6x19xf32, #tpu.memory_space<smem>>
    %413 = vector.broadcast %412 : f32 to vector<8x128xf32>
    %414 = arith.mulf %353, %413 : vector<8x128xf32>
    %415 = arith.addf %411, %414 : vector<8x128xf32>
    %c2_130 = arith.constant 2 : index
    %c11_131 = arith.constant 11 : index
    %416 = memref.load %arg2[%c2_130, %c11_131] : memref<6x19xf32, #tpu.memory_space<smem>>
    %417 = vector.broadcast %416 : f32 to vector<8x128xf32>
    %418 = arith.mulf %314, %417 : vector<8x128xf32>
    %c2_132 = arith.constant 2 : index
    %c14_133 = arith.constant 14 : index
    %419 = memref.load %arg2[%c2_132, %c14_133] : memref<6x19xf32, #tpu.memory_space<smem>>
    %420 = vector.broadcast %419 : f32 to vector<8x128xf32>
    %421 = arith.mulf %351, %420 : vector<8x128xf32>
    %422 = arith.addf %418, %421 : vector<8x128xf32>
    %c2_134 = arith.constant 2 : index
    %c17_135 = arith.constant 17 : index
    %423 = memref.load %arg2[%c2_134, %c17_135] : memref<6x19xf32, #tpu.memory_space<smem>>
    %424 = vector.broadcast %423 : f32 to vector<8x128xf32>
    %425 = arith.mulf %353, %424 : vector<8x128xf32>
    %426 = arith.addf %422, %425 : vector<8x128xf32>
    %c2_136 = arith.constant 2 : index
    %c12_137 = arith.constant 12 : index
    %427 = memref.load %arg2[%c2_136, %c12_137] : memref<6x19xf32, #tpu.memory_space<smem>>
    %428 = vector.broadcast %427 : f32 to vector<8x128xf32>
    %429 = arith.mulf %314, %428 : vector<8x128xf32>
    %c2_138 = arith.constant 2 : index
    %c15_139 = arith.constant 15 : index
    %430 = memref.load %arg2[%c2_138, %c15_139] : memref<6x19xf32, #tpu.memory_space<smem>>
    %431 = vector.broadcast %430 : f32 to vector<8x128xf32>
    %432 = arith.mulf %351, %431 : vector<8x128xf32>
    %433 = arith.addf %429, %432 : vector<8x128xf32>
    %c2_140 = arith.constant 2 : index
    %c18_141 = arith.constant 18 : index
    %434 = memref.load %arg2[%c2_140, %c18_141] : memref<6x19xf32, #tpu.memory_space<smem>>
    %435 = vector.broadcast %434 : f32 to vector<8x128xf32>
    %436 = arith.mulf %353, %435 : vector<8x128xf32>
    %437 = arith.addf %433, %436 : vector<8x128xf32>
    %438 = arith.mulf %254, %366 : vector<8x128xf32>
    %439 = arith.mulf %259, %381 : vector<8x128xf32>
    %440 = arith.addf %438, %439 : vector<8x128xf32>
    %441 = arith.mulf %264, %395 : vector<8x128xf32>
    %442 = arith.addf %440, %441 : vector<8x128xf32>
    %443 = arith.mulf %254, %371 : vector<8x128xf32>
    %444 = arith.mulf %259, %385 : vector<8x128xf32>
    %445 = arith.addf %443, %444 : vector<8x128xf32>
    %446 = arith.mulf %264, %400 : vector<8x128xf32>
    %447 = arith.addf %445, %446 : vector<8x128xf32>
    %448 = arith.mulf %254, %376 : vector<8x128xf32>
    %449 = arith.mulf %259, %390 : vector<8x128xf32>
    %450 = arith.addf %448, %449 : vector<8x128xf32>
    %451 = arith.mulf %264, %404 : vector<8x128xf32>
    %452 = arith.addf %450, %451 : vector<8x128xf32>
    %453 = arith.mulf %269, %366 : vector<8x128xf32>
    %454 = arith.mulf %274, %381 : vector<8x128xf32>
    %455 = arith.addf %453, %454 : vector<8x128xf32>
    %456 = arith.mulf %279, %395 : vector<8x128xf32>
    %457 = arith.addf %455, %456 : vector<8x128xf32>
    %458 = arith.mulf %269, %371 : vector<8x128xf32>
    %459 = arith.mulf %274, %385 : vector<8x128xf32>
    %460 = arith.addf %458, %459 : vector<8x128xf32>
    %461 = arith.mulf %279, %400 : vector<8x128xf32>
    %462 = arith.addf %460, %461 : vector<8x128xf32>
    %463 = arith.mulf %269, %376 : vector<8x128xf32>
    %464 = arith.mulf %274, %390 : vector<8x128xf32>
    %465 = arith.addf %463, %464 : vector<8x128xf32>
    %466 = arith.mulf %279, %404 : vector<8x128xf32>
    %467 = arith.addf %465, %466 : vector<8x128xf32>
    %468 = arith.mulf %284, %366 : vector<8x128xf32>
    %469 = arith.mulf %289, %381 : vector<8x128xf32>
    %470 = arith.addf %468, %469 : vector<8x128xf32>
    %471 = arith.mulf %294, %395 : vector<8x128xf32>
    %472 = arith.addf %470, %471 : vector<8x128xf32>
    %473 = arith.mulf %284, %371 : vector<8x128xf32>
    %474 = arith.mulf %289, %385 : vector<8x128xf32>
    %475 = arith.addf %473, %474 : vector<8x128xf32>
    %476 = arith.mulf %294, %400 : vector<8x128xf32>
    %477 = arith.addf %475, %476 : vector<8x128xf32>
    %478 = arith.mulf %284, %376 : vector<8x128xf32>
    %479 = arith.mulf %289, %390 : vector<8x128xf32>
    %480 = arith.addf %478, %479 : vector<8x128xf32>
    %481 = arith.mulf %294, %404 : vector<8x128xf32>
    %482 = arith.addf %480, %481 : vector<8x128xf32>
    %483 = arith.mulf %254, %415 : vector<8x128xf32>
    %484 = arith.mulf %259, %426 : vector<8x128xf32>
    %485 = arith.addf %483, %484 : vector<8x128xf32>
    %486 = arith.mulf %264, %437 : vector<8x128xf32>
    %487 = arith.addf %485, %486 : vector<8x128xf32>
    %488 = arith.addf %487, %300 : vector<8x128xf32>
    %489 = arith.mulf %269, %415 : vector<8x128xf32>
    %490 = arith.mulf %274, %426 : vector<8x128xf32>
    %491 = arith.addf %489, %490 : vector<8x128xf32>
    %492 = arith.mulf %279, %437 : vector<8x128xf32>
    %493 = arith.addf %491, %492 : vector<8x128xf32>
    %494 = arith.addf %493, %306 : vector<8x128xf32>
    %495 = arith.mulf %284, %415 : vector<8x128xf32>
    %496 = arith.mulf %289, %426 : vector<8x128xf32>
    %497 = arith.addf %495, %496 : vector<8x128xf32>
    %498 = arith.mulf %294, %437 : vector<8x128xf32>
    %499 = arith.addf %497, %498 : vector<8x128xf32>
    %500 = arith.addf %499, %312 : vector<8x128xf32>
    %c3_142 = arith.constant 3 : index
    %c0_143 = arith.constant 0 : index
    %c0_144 = arith.constant 0 : index
    %c0_145 = arith.constant 0 : index
    %501 = vector.load %arg1[%c3_142, %c0_143, %c0_144, %c0_145] : memref<6x1x8x128xf32, #tpu.memory_space<vmem>>, vector<1x1x8x128xf32>
    %502 = vector.shape_cast %501 : vector<1x1x8x128xf32> to vector<8x128xf32>
    %c3_146 = arith.constant 3 : index
    %c0_147 = arith.constant 0 : index
    %503 = memref.load %arg2[%c3_146, %c0_147] : memref<6x19xf32, #tpu.memory_space<smem>>
    %504 = arith.mulf %502, %502 : vector<8x128xf32>
    %505 = vector.broadcast %503 : f32 to vector<8x128xf32>
    %506 = arith.mulf %504, %505 : vector<8x128xf32>
    %cst_148 = arith.constant 9.99999996E-13 : f32
    %507 = vector.broadcast %cst_148 : f32 to vector<8x128xf32>
    %508 = arith.cmpf olt, %506, %507 : vector<8x128xf32>
    %cst_149 = arith.constant 1.000000e+00 : f32
    %509 = vector.broadcast %cst_149 : f32 to vector<8x128xf32>
    %510 = arith.select %508, %509, %506 : vector<8x128xi1>, vector<8x128xf32>
    %511 = math.rsqrt %510 : vector<8x128xf32>
    %512 = arith.mulf %510, %511 : vector<8x128xf32>
    %513 = arith.mulf %511, %511 : vector<8x128xf32>
    %514 = math.sin %512 : vector<8x128xf32>
    %515 = math.cos %512 : vector<8x128xf32>
    %cst_150 = arith.constant 0.166666672 : f32
    %516 = vector.broadcast %cst_150 : f32 to vector<8x128xf32>
    %517 = arith.mulf %506, %516 : vector<8x128xf32>
    %cst_151 = arith.constant 1.000000e+00 : f32
    %518 = vector.broadcast %cst_151 : f32 to vector<8x128xf32>
    %519 = arith.subf %518, %517 : vector<8x128xf32>
    %520 = arith.mulf %514, %511 : vector<8x128xf32>
    %521 = arith.select %508, %519, %520 : vector<8x128xi1>, vector<8x128xf32>
    %cst_152 = arith.constant 0.0416666679 : f32
    %522 = vector.broadcast %cst_152 : f32 to vector<8x128xf32>
    %523 = arith.mulf %506, %522 : vector<8x128xf32>
    %cst_153 = arith.constant 5.000000e-01 : f32
    %524 = vector.broadcast %cst_153 : f32 to vector<8x128xf32>
    %525 = arith.subf %524, %523 : vector<8x128xf32>
    %cst_154 = arith.constant 1.000000e+00 : f32
    %526 = vector.broadcast %cst_154 : f32 to vector<8x128xf32>
    %527 = arith.subf %526, %515 : vector<8x128xf32>
    %528 = arith.mulf %527, %513 : vector<8x128xf32>
    %529 = arith.select %508, %525, %528 : vector<8x128xi1>, vector<8x128xf32>
    %cst_155 = arith.constant 0.00833333377 : f32
    %530 = vector.broadcast %cst_155 : f32 to vector<8x128xf32>
    %531 = arith.mulf %506, %530 : vector<8x128xf32>
    %cst_156 = arith.constant 0.166666672 : f32
    %532 = vector.broadcast %cst_156 : f32 to vector<8x128xf32>
    %533 = arith.subf %532, %531 : vector<8x128xf32>
    %534 = arith.subf %512, %514 : vector<8x128xf32>
    %535 = arith.mulf %513, %511 : vector<8x128xf32>
    %536 = arith.mulf %534, %535 : vector<8x128xf32>
    %537 = arith.select %508, %533, %536 : vector<8x128xi1>, vector<8x128xf32>
    %538 = arith.mulf %521, %502 : vector<8x128xf32>
    %539 = arith.mulf %529, %504 : vector<8x128xf32>
    %540 = arith.mulf %537, %504 : vector<8x128xf32>
    %541 = arith.mulf %540, %502 : vector<8x128xf32>
    %c3_157 = arith.constant 3 : index
    %c1_158 = arith.constant 1 : index
    %542 = memref.load %arg2[%c3_157, %c1_158] : memref<6x19xf32, #tpu.memory_space<smem>>
    %c3_159 = arith.constant 3 : index
    %c2_160 = arith.constant 2 : index
    %543 = memref.load %arg2[%c3_159, %c2_160] : memref<6x19xf32, #tpu.memory_space<smem>>
    %c3_161 = arith.constant 3 : index
    %c3_162 = arith.constant 3 : index
    %544 = memref.load %arg2[%c3_161, %c3_162] : memref<6x19xf32, #tpu.memory_space<smem>>
    %c3_163 = arith.constant 3 : index
    %c4_164 = arith.constant 4 : index
    %545 = memref.load %arg2[%c3_163, %c4_164] : memref<6x19xf32, #tpu.memory_space<smem>>
    %c3_165 = arith.constant 3 : index
    %c5_166 = arith.constant 5 : index
    %546 = memref.load %arg2[%c3_165, %c5_166] : memref<6x19xf32, #tpu.memory_space<smem>>
    %c3_167 = arith.constant 3 : index
    %c6_168 = arith.constant 6 : index
    %547 = memref.load %arg2[%c3_167, %c6_168] : memref<6x19xf32, #tpu.memory_space<smem>>
    %c3_169 = arith.constant 3 : index
    %c7_170 = arith.constant 7 : index
    %548 = memref.load %arg2[%c3_169, %c7_170] : memref<6x19xf32, #tpu.memory_space<smem>>
    %c3_171 = arith.constant 3 : index
    %c8_172 = arith.constant 8 : index
    %549 = memref.load %arg2[%c3_171, %c8_172] : memref<6x19xf32, #tpu.memory_space<smem>>
    %c3_173 = arith.constant 3 : index
    %c9_174 = arith.constant 9 : index
    %550 = memref.load %arg2[%c3_173, %c9_174] : memref<6x19xf32, #tpu.memory_space<smem>>
    %551 = vector.broadcast %548 : f32 to vector<8x128xf32>
    %552 = arith.mulf %539, %551 : vector<8x128xf32>
    %cst_175 = arith.constant 1.000000e+00 : f32
    %553 = vector.broadcast %cst_175 : f32 to vector<8x128xf32>
    %554 = arith.subf %553, %552 : vector<8x128xf32>
    %555 = vector.broadcast %545 : f32 to vector<8x128xf32>
    %556 = arith.mulf %539, %555 : vector<8x128xf32>
    %557 = vector.broadcast %544 : f32 to vector<8x128xf32>
    %558 = arith.mulf %538, %557 : vector<8x128xf32>
    %559 = arith.subf %556, %558 : vector<8x128xf32>
    %560 = vector.broadcast %546 : f32 to vector<8x128xf32>
    %561 = arith.mulf %539, %560 : vector<8x128xf32>
    %562 = vector.broadcast %543 : f32 to vector<8x128xf32>
    %563 = arith.mulf %538, %562 : vector<8x128xf32>
    %564 = arith.addf %561, %563 : vector<8x128xf32>
    %565 = vector.broadcast %545 : f32 to vector<8x128xf32>
    %566 = arith.mulf %539, %565 : vector<8x128xf32>
    %567 = vector.broadcast %544 : f32 to vector<8x128xf32>
    %568 = arith.mulf %538, %567 : vector<8x128xf32>
    %569 = arith.addf %566, %568 : vector<8x128xf32>
    %570 = vector.broadcast %549 : f32 to vector<8x128xf32>
    %571 = arith.mulf %539, %570 : vector<8x128xf32>
    %cst_176 = arith.constant 1.000000e+00 : f32
    %572 = vector.broadcast %cst_176 : f32 to vector<8x128xf32>
    %573 = arith.subf %572, %571 : vector<8x128xf32>
    %574 = vector.broadcast %547 : f32 to vector<8x128xf32>
    %575 = arith.mulf %539, %574 : vector<8x128xf32>
    %576 = vector.broadcast %542 : f32 to vector<8x128xf32>
    %577 = arith.mulf %538, %576 : vector<8x128xf32>
    %578 = arith.subf %575, %577 : vector<8x128xf32>
    %579 = vector.broadcast %546 : f32 to vector<8x128xf32>
    %580 = arith.mulf %539, %579 : vector<8x128xf32>
    %581 = vector.broadcast %543 : f32 to vector<8x128xf32>
    %582 = arith.mulf %538, %581 : vector<8x128xf32>
    %583 = arith.subf %580, %582 : vector<8x128xf32>
    %584 = vector.broadcast %547 : f32 to vector<8x128xf32>
    %585 = arith.mulf %539, %584 : vector<8x128xf32>
    %586 = vector.broadcast %542 : f32 to vector<8x128xf32>
    %587 = arith.mulf %538, %586 : vector<8x128xf32>
    %588 = arith.addf %585, %587 : vector<8x128xf32>
    %589 = vector.broadcast %550 : f32 to vector<8x128xf32>
    %590 = arith.mulf %539, %589 : vector<8x128xf32>
    %cst_177 = arith.constant 1.000000e+00 : f32
    %591 = vector.broadcast %cst_177 : f32 to vector<8x128xf32>
    %592 = arith.subf %591, %590 : vector<8x128xf32>
    %c3_178 = arith.constant 3 : index
    %c10_179 = arith.constant 10 : index
    %593 = memref.load %arg2[%c3_178, %c10_179] : memref<6x19xf32, #tpu.memory_space<smem>>
    %594 = vector.broadcast %593 : f32 to vector<8x128xf32>
    %595 = arith.mulf %502, %594 : vector<8x128xf32>
    %c3_180 = arith.constant 3 : index
    %c13_181 = arith.constant 13 : index
    %596 = memref.load %arg2[%c3_180, %c13_181] : memref<6x19xf32, #tpu.memory_space<smem>>
    %597 = vector.broadcast %596 : f32 to vector<8x128xf32>
    %598 = arith.mulf %539, %597 : vector<8x128xf32>
    %599 = arith.addf %595, %598 : vector<8x128xf32>
    %c3_182 = arith.constant 3 : index
    %c16_183 = arith.constant 16 : index
    %600 = memref.load %arg2[%c3_182, %c16_183] : memref<6x19xf32, #tpu.memory_space<smem>>
    %601 = vector.broadcast %600 : f32 to vector<8x128xf32>
    %602 = arith.mulf %541, %601 : vector<8x128xf32>
    %603 = arith.addf %599, %602 : vector<8x128xf32>
    %c3_184 = arith.constant 3 : index
    %c11_185 = arith.constant 11 : index
    %604 = memref.load %arg2[%c3_184, %c11_185] : memref<6x19xf32, #tpu.memory_space<smem>>
    %605 = vector.broadcast %604 : f32 to vector<8x128xf32>
    %606 = arith.mulf %502, %605 : vector<8x128xf32>
    %c3_186 = arith.constant 3 : index
    %c14_187 = arith.constant 14 : index
    %607 = memref.load %arg2[%c3_186, %c14_187] : memref<6x19xf32, #tpu.memory_space<smem>>
    %608 = vector.broadcast %607 : f32 to vector<8x128xf32>
    %609 = arith.mulf %539, %608 : vector<8x128xf32>
    %610 = arith.addf %606, %609 : vector<8x128xf32>
    %c3_188 = arith.constant 3 : index
    %c17_189 = arith.constant 17 : index
    %611 = memref.load %arg2[%c3_188, %c17_189] : memref<6x19xf32, #tpu.memory_space<smem>>
    %612 = vector.broadcast %611 : f32 to vector<8x128xf32>
    %613 = arith.mulf %541, %612 : vector<8x128xf32>
    %614 = arith.addf %610, %613 : vector<8x128xf32>
    %c3_190 = arith.constant 3 : index
    %c12_191 = arith.constant 12 : index
    %615 = memref.load %arg2[%c3_190, %c12_191] : memref<6x19xf32, #tpu.memory_space<smem>>
    %616 = vector.broadcast %615 : f32 to vector<8x128xf32>
    %617 = arith.mulf %502, %616 : vector<8x128xf32>
    %c3_192 = arith.constant 3 : index
    %c15_193 = arith.constant 15 : index
    %618 = memref.load %arg2[%c3_192, %c15_193] : memref<6x19xf32, #tpu.memory_space<smem>>
    %619 = vector.broadcast %618 : f32 to vector<8x128xf32>
    %620 = arith.mulf %539, %619 : vector<8x128xf32>
    %621 = arith.addf %617, %620 : vector<8x128xf32>
    %c3_194 = arith.constant 3 : index
    %c18_195 = arith.constant 18 : index
    %622 = memref.load %arg2[%c3_194, %c18_195] : memref<6x19xf32, #tpu.memory_space<smem>>
    %623 = vector.broadcast %622 : f32 to vector<8x128xf32>
    %624 = arith.mulf %541, %623 : vector<8x128xf32>
    %625 = arith.addf %621, %624 : vector<8x128xf32>
    %626 = arith.mulf %442, %554 : vector<8x128xf32>
    %627 = arith.mulf %447, %569 : vector<8x128xf32>
    %628 = arith.addf %626, %627 : vector<8x128xf32>
    %629 = arith.mulf %452, %583 : vector<8x128xf32>
    %630 = arith.addf %628, %629 : vector<8x128xf32>
    %631 = arith.mulf %442, %559 : vector<8x128xf32>
    %632 = arith.mulf %447, %573 : vector<8x128xf32>
    %633 = arith.addf %631, %632 : vector<8x128xf32>
    %634 = arith.mulf %452, %588 : vector<8x128xf32>
    %635 = arith.addf %633, %634 : vector<8x128xf32>
    %636 = arith.mulf %442, %564 : vector<8x128xf32>
    %637 = arith.mulf %447, %578 : vector<8x128xf32>
    %638 = arith.addf %636, %637 : vector<8x128xf32>
    %639 = arith.mulf %452, %592 : vector<8x128xf32>
    %640 = arith.addf %638, %639 : vector<8x128xf32>
    %641 = arith.mulf %457, %554 : vector<8x128xf32>
    %642 = arith.mulf %462, %569 : vector<8x128xf32>
    %643 = arith.addf %641, %642 : vector<8x128xf32>
    %644 = arith.mulf %467, %583 : vector<8x128xf32>
    %645 = arith.addf %643, %644 : vector<8x128xf32>
    %646 = arith.mulf %457, %559 : vector<8x128xf32>
    %647 = arith.mulf %462, %573 : vector<8x128xf32>
    %648 = arith.addf %646, %647 : vector<8x128xf32>
    %649 = arith.mulf %467, %588 : vector<8x128xf32>
    %650 = arith.addf %648, %649 : vector<8x128xf32>
    %651 = arith.mulf %457, %564 : vector<8x128xf32>
    %652 = arith.mulf %462, %578 : vector<8x128xf32>
    %653 = arith.addf %651, %652 : vector<8x128xf32>
    %654 = arith.mulf %467, %592 : vector<8x128xf32>
    %655 = arith.addf %653, %654 : vector<8x128xf32>
    %656 = arith.mulf %472, %554 : vector<8x128xf32>
    %657 = arith.mulf %477, %569 : vector<8x128xf32>
    %658 = arith.addf %656, %657 : vector<8x128xf32>
    %659 = arith.mulf %482, %583 : vector<8x128xf32>
    %660 = arith.addf %658, %659 : vector<8x128xf32>
    %661 = arith.mulf %472, %559 : vector<8x128xf32>
    %662 = arith.mulf %477, %573 : vector<8x128xf32>
    %663 = arith.addf %661, %662 : vector<8x128xf32>
    %664 = arith.mulf %482, %588 : vector<8x128xf32>
    %665 = arith.addf %663, %664 : vector<8x128xf32>
    %666 = arith.mulf %472, %564 : vector<8x128xf32>
    %667 = arith.mulf %477, %578 : vector<8x128xf32>
    %668 = arith.addf %666, %667 : vector<8x128xf32>
    %669 = arith.mulf %482, %592 : vector<8x128xf32>
    %670 = arith.addf %668, %669 : vector<8x128xf32>
    %671 = arith.mulf %442, %603 : vector<8x128xf32>
    %672 = arith.mulf %447, %614 : vector<8x128xf32>
    %673 = arith.addf %671, %672 : vector<8x128xf32>
    %674 = arith.mulf %452, %625 : vector<8x128xf32>
    %675 = arith.addf %673, %674 : vector<8x128xf32>
    %676 = arith.addf %675, %488 : vector<8x128xf32>
    %677 = arith.mulf %457, %603 : vector<8x128xf32>
    %678 = arith.mulf %462, %614 : vector<8x128xf32>
    %679 = arith.addf %677, %678 : vector<8x128xf32>
    %680 = arith.mulf %467, %625 : vector<8x128xf32>
    %681 = arith.addf %679, %680 : vector<8x128xf32>
    %682 = arith.addf %681, %494 : vector<8x128xf32>
    %683 = arith.mulf %472, %603 : vector<8x128xf32>
    %684 = arith.mulf %477, %614 : vector<8x128xf32>
    %685 = arith.addf %683, %684 : vector<8x128xf32>
    %686 = arith.mulf %482, %625 : vector<8x128xf32>
    %687 = arith.addf %685, %686 : vector<8x128xf32>
    %688 = arith.addf %687, %500 : vector<8x128xf32>
    %c4_196 = arith.constant 4 : index
    %c0_197 = arith.constant 0 : index
    %c0_198 = arith.constant 0 : index
    %c0_199 = arith.constant 0 : index
    %689 = vector.load %arg1[%c4_196, %c0_197, %c0_198, %c0_199] : memref<6x1x8x128xf32, #tpu.memory_space<vmem>>, vector<1x1x8x128xf32>
    %690 = vector.shape_cast %689 : vector<1x1x8x128xf32> to vector<8x128xf32>
    %c4_200 = arith.constant 4 : index
    %c0_201 = arith.constant 0 : index
    %691 = memref.load %arg2[%c4_200, %c0_201] : memref<6x19xf32, #tpu.memory_space<smem>>
    %692 = arith.mulf %690, %690 : vector<8x128xf32>
    %693 = vector.broadcast %691 : f32 to vector<8x128xf32>
    %694 = arith.mulf %692, %693 : vector<8x128xf32>
    %cst_202 = arith.constant 9.99999996E-13 : f32
    %695 = vector.broadcast %cst_202 : f32 to vector<8x128xf32>
    %696 = arith.cmpf olt, %694, %695 : vector<8x128xf32>
    %cst_203 = arith.constant 1.000000e+00 : f32
    %697 = vector.broadcast %cst_203 : f32 to vector<8x128xf32>
    %698 = arith.select %696, %697, %694 : vector<8x128xi1>, vector<8x128xf32>
    %699 = math.rsqrt %698 : vector<8x128xf32>
    %700 = arith.mulf %698, %699 : vector<8x128xf32>
    %701 = arith.mulf %699, %699 : vector<8x128xf32>
    %702 = math.sin %700 : vector<8x128xf32>
    %703 = math.cos %700 : vector<8x128xf32>
    %cst_204 = arith.constant 0.166666672 : f32
    %704 = vector.broadcast %cst_204 : f32 to vector<8x128xf32>
    %705 = arith.mulf %694, %704 : vector<8x128xf32>
    %cst_205 = arith.constant 1.000000e+00 : f32
    %706 = vector.broadcast %cst_205 : f32 to vector<8x128xf32>
    %707 = arith.subf %706, %705 : vector<8x128xf32>
    %708 = arith.mulf %702, %699 : vector<8x128xf32>
    %709 = arith.select %696, %707, %708 : vector<8x128xi1>, vector<8x128xf32>
    %cst_206 = arith.constant 0.0416666679 : f32
    %710 = vector.broadcast %cst_206 : f32 to vector<8x128xf32>
    %711 = arith.mulf %694, %710 : vector<8x128xf32>
    %cst_207 = arith.constant 5.000000e-01 : f32
    %712 = vector.broadcast %cst_207 : f32 to vector<8x128xf32>
    %713 = arith.subf %712, %711 : vector<8x128xf32>
    %cst_208 = arith.constant 1.000000e+00 : f32
    %714 = vector.broadcast %cst_208 : f32 to vector<8x128xf32>
    %715 = arith.subf %714, %703 : vector<8x128xf32>
    %716 = arith.mulf %715, %701 : vector<8x128xf32>
    %717 = arith.select %696, %713, %716 : vector<8x128xi1>, vector<8x128xf32>
    %cst_209 = arith.constant 0.00833333377 : f32
    %718 = vector.broadcast %cst_209 : f32 to vector<8x128xf32>
    %719 = arith.mulf %694, %718 : vector<8x128xf32>
    %cst_210 = arith.constant 0.166666672 : f32
    %720 = vector.broadcast %cst_210 : f32 to vector<8x128xf32>
    %721 = arith.subf %720, %719 : vector<8x128xf32>
    %722 = arith.subf %700, %702 : vector<8x128xf32>
    %723 = arith.mulf %701, %699 : vector<8x128xf32>
    %724 = arith.mulf %722, %723 : vector<8x128xf32>
    %725 = arith.select %696, %721, %724 : vector<8x128xi1>, vector<8x128xf32>
    %726 = arith.mulf %709, %690 : vector<8x128xf32>
    %727 = arith.mulf %717, %692 : vector<8x128xf32>
    %728 = arith.mulf %725, %692 : vector<8x128xf32>
    %729 = arith.mulf %728, %690 : vector<8x128xf32>
    %c4_211 = arith.constant 4 : index
    %c1_212 = arith.constant 1 : index
    %730 = memref.load %arg2[%c4_211, %c1_212] : memref<6x19xf32, #tpu.memory_space<smem>>
    %c4_213 = arith.constant 4 : index
    %c2_214 = arith.constant 2 : index
    %731 = memref.load %arg2[%c4_213, %c2_214] : memref<6x19xf32, #tpu.memory_space<smem>>
    %c4_215 = arith.constant 4 : index
    %c3_216 = arith.constant 3 : index
    %732 = memref.load %arg2[%c4_215, %c3_216] : memref<6x19xf32, #tpu.memory_space<smem>>
    %c4_217 = arith.constant 4 : index
    %c4_218 = arith.constant 4 : index
    %733 = memref.load %arg2[%c4_217, %c4_218] : memref<6x19xf32, #tpu.memory_space<smem>>
    %c4_219 = arith.constant 4 : index
    %c5_220 = arith.constant 5 : index
    %734 = memref.load %arg2[%c4_219, %c5_220] : memref<6x19xf32, #tpu.memory_space<smem>>
    %c4_221 = arith.constant 4 : index
    %c6_222 = arith.constant 6 : index
    %735 = memref.load %arg2[%c4_221, %c6_222] : memref<6x19xf32, #tpu.memory_space<smem>>
    %c4_223 = arith.constant 4 : index
    %c7_224 = arith.constant 7 : index
    %736 = memref.load %arg2[%c4_223, %c7_224] : memref<6x19xf32, #tpu.memory_space<smem>>
    %c4_225 = arith.constant 4 : index
    %c8_226 = arith.constant 8 : index
    %737 = memref.load %arg2[%c4_225, %c8_226] : memref<6x19xf32, #tpu.memory_space<smem>>
    %c4_227 = arith.constant 4 : index
    %c9_228 = arith.constant 9 : index
    %738 = memref.load %arg2[%c4_227, %c9_228] : memref<6x19xf32, #tpu.memory_space<smem>>
    %739 = vector.broadcast %736 : f32 to vector<8x128xf32>
    %740 = arith.mulf %727, %739 : vector<8x128xf32>
    %cst_229 = arith.constant 1.000000e+00 : f32
    %741 = vector.broadcast %cst_229 : f32 to vector<8x128xf32>
    %742 = arith.subf %741, %740 : vector<8x128xf32>
    %743 = vector.broadcast %733 : f32 to vector<8x128xf32>
    %744 = arith.mulf %727, %743 : vector<8x128xf32>
    %745 = vector.broadcast %732 : f32 to vector<8x128xf32>
    %746 = arith.mulf %726, %745 : vector<8x128xf32>
    %747 = arith.subf %744, %746 : vector<8x128xf32>
    %748 = vector.broadcast %734 : f32 to vector<8x128xf32>
    %749 = arith.mulf %727, %748 : vector<8x128xf32>
    %750 = vector.broadcast %731 : f32 to vector<8x128xf32>
    %751 = arith.mulf %726, %750 : vector<8x128xf32>
    %752 = arith.addf %749, %751 : vector<8x128xf32>
    %753 = vector.broadcast %733 : f32 to vector<8x128xf32>
    %754 = arith.mulf %727, %753 : vector<8x128xf32>
    %755 = vector.broadcast %732 : f32 to vector<8x128xf32>
    %756 = arith.mulf %726, %755 : vector<8x128xf32>
    %757 = arith.addf %754, %756 : vector<8x128xf32>
    %758 = vector.broadcast %737 : f32 to vector<8x128xf32>
    %759 = arith.mulf %727, %758 : vector<8x128xf32>
    %cst_230 = arith.constant 1.000000e+00 : f32
    %760 = vector.broadcast %cst_230 : f32 to vector<8x128xf32>
    %761 = arith.subf %760, %759 : vector<8x128xf32>
    %762 = vector.broadcast %735 : f32 to vector<8x128xf32>
    %763 = arith.mulf %727, %762 : vector<8x128xf32>
    %764 = vector.broadcast %730 : f32 to vector<8x128xf32>
    %765 = arith.mulf %726, %764 : vector<8x128xf32>
    %766 = arith.subf %763, %765 : vector<8x128xf32>
    %767 = vector.broadcast %734 : f32 to vector<8x128xf32>
    %768 = arith.mulf %727, %767 : vector<8x128xf32>
    %769 = vector.broadcast %731 : f32 to vector<8x128xf32>
    %770 = arith.mulf %726, %769 : vector<8x128xf32>
    %771 = arith.subf %768, %770 : vector<8x128xf32>
    %772 = vector.broadcast %735 : f32 to vector<8x128xf32>
    %773 = arith.mulf %727, %772 : vector<8x128xf32>
    %774 = vector.broadcast %730 : f32 to vector<8x128xf32>
    %775 = arith.mulf %726, %774 : vector<8x128xf32>
    %776 = arith.addf %773, %775 : vector<8x128xf32>
    %777 = vector.broadcast %738 : f32 to vector<8x128xf32>
    %778 = arith.mulf %727, %777 : vector<8x128xf32>
    %cst_231 = arith.constant 1.000000e+00 : f32
    %779 = vector.broadcast %cst_231 : f32 to vector<8x128xf32>
    %780 = arith.subf %779, %778 : vector<8x128xf32>
    %c4_232 = arith.constant 4 : index
    %c10_233 = arith.constant 10 : index
    %781 = memref.load %arg2[%c4_232, %c10_233] : memref<6x19xf32, #tpu.memory_space<smem>>
    %782 = vector.broadcast %781 : f32 to vector<8x128xf32>
    %783 = arith.mulf %690, %782 : vector<8x128xf32>
    %c4_234 = arith.constant 4 : index
    %c13_235 = arith.constant 13 : index
    %784 = memref.load %arg2[%c4_234, %c13_235] : memref<6x19xf32, #tpu.memory_space<smem>>
    %785 = vector.broadcast %784 : f32 to vector<8x128xf32>
    %786 = arith.mulf %727, %785 : vector<8x128xf32>
    %787 = arith.addf %783, %786 : vector<8x128xf32>
    %c4_236 = arith.constant 4 : index
    %c16_237 = arith.constant 16 : index
    %788 = memref.load %arg2[%c4_236, %c16_237] : memref<6x19xf32, #tpu.memory_space<smem>>
    %789 = vector.broadcast %788 : f32 to vector<8x128xf32>
    %790 = arith.mulf %729, %789 : vector<8x128xf32>
    %791 = arith.addf %787, %790 : vector<8x128xf32>
    %c4_238 = arith.constant 4 : index
    %c11_239 = arith.constant 11 : index
    %792 = memref.load %arg2[%c4_238, %c11_239] : memref<6x19xf32, #tpu.memory_space<smem>>
    %793 = vector.broadcast %792 : f32 to vector<8x128xf32>
    %794 = arith.mulf %690, %793 : vector<8x128xf32>
    %c4_240 = arith.constant 4 : index
    %c14_241 = arith.constant 14 : index
    %795 = memref.load %arg2[%c4_240, %c14_241] : memref<6x19xf32, #tpu.memory_space<smem>>
    %796 = vector.broadcast %795 : f32 to vector<8x128xf32>
    %797 = arith.mulf %727, %796 : vector<8x128xf32>
    %798 = arith.addf %794, %797 : vector<8x128xf32>
    %c4_242 = arith.constant 4 : index
    %c17_243 = arith.constant 17 : index
    %799 = memref.load %arg2[%c4_242, %c17_243] : memref<6x19xf32, #tpu.memory_space<smem>>
    %800 = vector.broadcast %799 : f32 to vector<8x128xf32>
    %801 = arith.mulf %729, %800 : vector<8x128xf32>
    %802 = arith.addf %798, %801 : vector<8x128xf32>
    %c4_244 = arith.constant 4 : index
    %c12_245 = arith.constant 12 : index
    %803 = memref.load %arg2[%c4_244, %c12_245] : memref<6x19xf32, #tpu.memory_space<smem>>
    %804 = vector.broadcast %803 : f32 to vector<8x128xf32>
    %805 = arith.mulf %690, %804 : vector<8x128xf32>
    %c4_246 = arith.constant 4 : index
    %c15_247 = arith.constant 15 : index
    %806 = memref.load %arg2[%c4_246, %c15_247] : memref<6x19xf32, #tpu.memory_space<smem>>
    %807 = vector.broadcast %806 : f32 to vector<8x128xf32>
    %808 = arith.mulf %727, %807 : vector<8x128xf32>
    %809 = arith.addf %805, %808 : vector<8x128xf32>
    %c4_248 = arith.constant 4 : index
    %c18_249 = arith.constant 18 : index
    %810 = memref.load %arg2[%c4_248, %c18_249] : memref<6x19xf32, #tpu.memory_space<smem>>
    %811 = vector.broadcast %810 : f32 to vector<8x128xf32>
    %812 = arith.mulf %729, %811 : vector<8x128xf32>
    %813 = arith.addf %809, %812 : vector<8x128xf32>
    %814 = arith.mulf %630, %742 : vector<8x128xf32>
    %815 = arith.mulf %635, %757 : vector<8x128xf32>
    %816 = arith.addf %814, %815 : vector<8x128xf32>
    %817 = arith.mulf %640, %771 : vector<8x128xf32>
    %818 = arith.addf %816, %817 : vector<8x128xf32>
    %819 = arith.mulf %630, %747 : vector<8x128xf32>
    %820 = arith.mulf %635, %761 : vector<8x128xf32>
    %821 = arith.addf %819, %820 : vector<8x128xf32>
    %822 = arith.mulf %640, %776 : vector<8x128xf32>
    %823 = arith.addf %821, %822 : vector<8x128xf32>
    %824 = arith.mulf %630, %752 : vector<8x128xf32>
    %825 = arith.mulf %635, %766 : vector<8x128xf32>
    %826 = arith.addf %824, %825 : vector<8x128xf32>
    %827 = arith.mulf %640, %780 : vector<8x128xf32>
    %828 = arith.addf %826, %827 : vector<8x128xf32>
    %829 = arith.mulf %645, %742 : vector<8x128xf32>
    %830 = arith.mulf %650, %757 : vector<8x128xf32>
    %831 = arith.addf %829, %830 : vector<8x128xf32>
    %832 = arith.mulf %655, %771 : vector<8x128xf32>
    %833 = arith.addf %831, %832 : vector<8x128xf32>
    %834 = arith.mulf %645, %747 : vector<8x128xf32>
    %835 = arith.mulf %650, %761 : vector<8x128xf32>
    %836 = arith.addf %834, %835 : vector<8x128xf32>
    %837 = arith.mulf %655, %776 : vector<8x128xf32>
    %838 = arith.addf %836, %837 : vector<8x128xf32>
    %839 = arith.mulf %645, %752 : vector<8x128xf32>
    %840 = arith.mulf %650, %766 : vector<8x128xf32>
    %841 = arith.addf %839, %840 : vector<8x128xf32>
    %842 = arith.mulf %655, %780 : vector<8x128xf32>
    %843 = arith.addf %841, %842 : vector<8x128xf32>
    %844 = arith.mulf %660, %742 : vector<8x128xf32>
    %845 = arith.mulf %665, %757 : vector<8x128xf32>
    %846 = arith.addf %844, %845 : vector<8x128xf32>
    %847 = arith.mulf %670, %771 : vector<8x128xf32>
    %848 = arith.addf %846, %847 : vector<8x128xf32>
    %849 = arith.mulf %660, %747 : vector<8x128xf32>
    %850 = arith.mulf %665, %761 : vector<8x128xf32>
    %851 = arith.addf %849, %850 : vector<8x128xf32>
    %852 = arith.mulf %670, %776 : vector<8x128xf32>
    %853 = arith.addf %851, %852 : vector<8x128xf32>
    %854 = arith.mulf %660, %752 : vector<8x128xf32>
    %855 = arith.mulf %665, %766 : vector<8x128xf32>
    %856 = arith.addf %854, %855 : vector<8x128xf32>
    %857 = arith.mulf %670, %780 : vector<8x128xf32>
    %858 = arith.addf %856, %857 : vector<8x128xf32>
    %859 = arith.mulf %630, %791 : vector<8x128xf32>
    %860 = arith.mulf %635, %802 : vector<8x128xf32>
    %861 = arith.addf %859, %860 : vector<8x128xf32>
    %862 = arith.mulf %640, %813 : vector<8x128xf32>
    %863 = arith.addf %861, %862 : vector<8x128xf32>
    %864 = arith.addf %863, %676 : vector<8x128xf32>
    %865 = arith.mulf %645, %791 : vector<8x128xf32>
    %866 = arith.mulf %650, %802 : vector<8x128xf32>
    %867 = arith.addf %865, %866 : vector<8x128xf32>
    %868 = arith.mulf %655, %813 : vector<8x128xf32>
    %869 = arith.addf %867, %868 : vector<8x128xf32>
    %870 = arith.addf %869, %682 : vector<8x128xf32>
    %871 = arith.mulf %660, %791 : vector<8x128xf32>
    %872 = arith.mulf %665, %802 : vector<8x128xf32>
    %873 = arith.addf %871, %872 : vector<8x128xf32>
    %874 = arith.mulf %670, %813 : vector<8x128xf32>
    %875 = arith.addf %873, %874 : vector<8x128xf32>
    %876 = arith.addf %875, %688 : vector<8x128xf32>
    %c5_250 = arith.constant 5 : index
    %c0_251 = arith.constant 0 : index
    %c0_252 = arith.constant 0 : index
    %c0_253 = arith.constant 0 : index
    %877 = vector.load %arg1[%c5_250, %c0_251, %c0_252, %c0_253] : memref<6x1x8x128xf32, #tpu.memory_space<vmem>>, vector<1x1x8x128xf32>
    %878 = vector.shape_cast %877 : vector<1x1x8x128xf32> to vector<8x128xf32>
    %c5_254 = arith.constant 5 : index
    %c0_255 = arith.constant 0 : index
    %879 = memref.load %arg2[%c5_254, %c0_255] : memref<6x19xf32, #tpu.memory_space<smem>>
    %880 = arith.mulf %878, %878 : vector<8x128xf32>
    %881 = vector.broadcast %879 : f32 to vector<8x128xf32>
    %882 = arith.mulf %880, %881 : vector<8x128xf32>
    %cst_256 = arith.constant 9.99999996E-13 : f32
    %883 = vector.broadcast %cst_256 : f32 to vector<8x128xf32>
    %884 = arith.cmpf olt, %882, %883 : vector<8x128xf32>
    %cst_257 = arith.constant 1.000000e+00 : f32
    %885 = vector.broadcast %cst_257 : f32 to vector<8x128xf32>
    %886 = arith.select %884, %885, %882 : vector<8x128xi1>, vector<8x128xf32>
    %887 = math.rsqrt %886 : vector<8x128xf32>
    %888 = arith.mulf %886, %887 : vector<8x128xf32>
    %889 = arith.mulf %887, %887 : vector<8x128xf32>
    %890 = math.sin %888 : vector<8x128xf32>
    %891 = math.cos %888 : vector<8x128xf32>
    %cst_258 = arith.constant 0.166666672 : f32
    %892 = vector.broadcast %cst_258 : f32 to vector<8x128xf32>
    %893 = arith.mulf %882, %892 : vector<8x128xf32>
    %cst_259 = arith.constant 1.000000e+00 : f32
    %894 = vector.broadcast %cst_259 : f32 to vector<8x128xf32>
    %895 = arith.subf %894, %893 : vector<8x128xf32>
    %896 = arith.mulf %890, %887 : vector<8x128xf32>
    %897 = arith.select %884, %895, %896 : vector<8x128xi1>, vector<8x128xf32>
    %cst_260 = arith.constant 0.0416666679 : f32
    %898 = vector.broadcast %cst_260 : f32 to vector<8x128xf32>
    %899 = arith.mulf %882, %898 : vector<8x128xf32>
    %cst_261 = arith.constant 5.000000e-01 : f32
    %900 = vector.broadcast %cst_261 : f32 to vector<8x128xf32>
    %901 = arith.subf %900, %899 : vector<8x128xf32>
    %cst_262 = arith.constant 1.000000e+00 : f32
    %902 = vector.broadcast %cst_262 : f32 to vector<8x128xf32>
    %903 = arith.subf %902, %891 : vector<8x128xf32>
    %904 = arith.mulf %903, %889 : vector<8x128xf32>
    %905 = arith.select %884, %901, %904 : vector<8x128xi1>, vector<8x128xf32>
    %cst_263 = arith.constant 0.00833333377 : f32
    %906 = vector.broadcast %cst_263 : f32 to vector<8x128xf32>
    %907 = arith.mulf %882, %906 : vector<8x128xf32>
    %cst_264 = arith.constant 0.166666672 : f32
    %908 = vector.broadcast %cst_264 : f32 to vector<8x128xf32>
    %909 = arith.subf %908, %907 : vector<8x128xf32>
    %910 = arith.subf %888, %890 : vector<8x128xf32>
    %911 = arith.mulf %889, %887 : vector<8x128xf32>
    %912 = arith.mulf %910, %911 : vector<8x128xf32>
    %913 = arith.select %884, %909, %912 : vector<8x128xi1>, vector<8x128xf32>
    %914 = arith.mulf %897, %878 : vector<8x128xf32>
    %915 = arith.mulf %905, %880 : vector<8x128xf32>
    %916 = arith.mulf %913, %880 : vector<8x128xf32>
    %917 = arith.mulf %916, %878 : vector<8x128xf32>
    %c5_265 = arith.constant 5 : index
    %c1_266 = arith.constant 1 : index
    %918 = memref.load %arg2[%c5_265, %c1_266] : memref<6x19xf32, #tpu.memory_space<smem>>
    %c5_267 = arith.constant 5 : index
    %c2_268 = arith.constant 2 : index
    %919 = memref.load %arg2[%c5_267, %c2_268] : memref<6x19xf32, #tpu.memory_space<smem>>
    %c5_269 = arith.constant 5 : index
    %c3_270 = arith.constant 3 : index
    %920 = memref.load %arg2[%c5_269, %c3_270] : memref<6x19xf32, #tpu.memory_space<smem>>
    %c5_271 = arith.constant 5 : index
    %c4_272 = arith.constant 4 : index
    %921 = memref.load %arg2[%c5_271, %c4_272] : memref<6x19xf32, #tpu.memory_space<smem>>
    %c5_273 = arith.constant 5 : index
    %c5_274 = arith.constant 5 : index
    %922 = memref.load %arg2[%c5_273, %c5_274] : memref<6x19xf32, #tpu.memory_space<smem>>
    %c5_275 = arith.constant 5 : index
    %c6_276 = arith.constant 6 : index
    %923 = memref.load %arg2[%c5_275, %c6_276] : memref<6x19xf32, #tpu.memory_space<smem>>
    %c5_277 = arith.constant 5 : index
    %c7_278 = arith.constant 7 : index
    %924 = memref.load %arg2[%c5_277, %c7_278] : memref<6x19xf32, #tpu.memory_space<smem>>
    %c5_279 = arith.constant 5 : index
    %c8_280 = arith.constant 8 : index
    %925 = memref.load %arg2[%c5_279, %c8_280] : memref<6x19xf32, #tpu.memory_space<smem>>
    %c5_281 = arith.constant 5 : index
    %c9_282 = arith.constant 9 : index
    %926 = memref.load %arg2[%c5_281, %c9_282] : memref<6x19xf32, #tpu.memory_space<smem>>
    %927 = vector.broadcast %924 : f32 to vector<8x128xf32>
    %928 = arith.mulf %915, %927 : vector<8x128xf32>
    %cst_283 = arith.constant 1.000000e+00 : f32
    %929 = vector.broadcast %cst_283 : f32 to vector<8x128xf32>
    %930 = arith.subf %929, %928 : vector<8x128xf32>
    %931 = vector.broadcast %921 : f32 to vector<8x128xf32>
    %932 = arith.mulf %915, %931 : vector<8x128xf32>
    %933 = vector.broadcast %920 : f32 to vector<8x128xf32>
    %934 = arith.mulf %914, %933 : vector<8x128xf32>
    %935 = arith.subf %932, %934 : vector<8x128xf32>
    %936 = vector.broadcast %922 : f32 to vector<8x128xf32>
    %937 = arith.mulf %915, %936 : vector<8x128xf32>
    %938 = vector.broadcast %919 : f32 to vector<8x128xf32>
    %939 = arith.mulf %914, %938 : vector<8x128xf32>
    %940 = arith.addf %937, %939 : vector<8x128xf32>
    %941 = vector.broadcast %921 : f32 to vector<8x128xf32>
    %942 = arith.mulf %915, %941 : vector<8x128xf32>
    %943 = vector.broadcast %920 : f32 to vector<8x128xf32>
    %944 = arith.mulf %914, %943 : vector<8x128xf32>
    %945 = arith.addf %942, %944 : vector<8x128xf32>
    %946 = vector.broadcast %925 : f32 to vector<8x128xf32>
    %947 = arith.mulf %915, %946 : vector<8x128xf32>
    %cst_284 = arith.constant 1.000000e+00 : f32
    %948 = vector.broadcast %cst_284 : f32 to vector<8x128xf32>
    %949 = arith.subf %948, %947 : vector<8x128xf32>
    %950 = vector.broadcast %923 : f32 to vector<8x128xf32>
    %951 = arith.mulf %915, %950 : vector<8x128xf32>
    %952 = vector.broadcast %918 : f32 to vector<8x128xf32>
    %953 = arith.mulf %914, %952 : vector<8x128xf32>
    %954 = arith.subf %951, %953 : vector<8x128xf32>
    %955 = vector.broadcast %922 : f32 to vector<8x128xf32>
    %956 = arith.mulf %915, %955 : vector<8x128xf32>
    %957 = vector.broadcast %919 : f32 to vector<8x128xf32>
    %958 = arith.mulf %914, %957 : vector<8x128xf32>
    %959 = arith.subf %956, %958 : vector<8x128xf32>
    %960 = vector.broadcast %923 : f32 to vector<8x128xf32>
    %961 = arith.mulf %915, %960 : vector<8x128xf32>
    %962 = vector.broadcast %918 : f32 to vector<8x128xf32>
    %963 = arith.mulf %914, %962 : vector<8x128xf32>
    %964 = arith.addf %961, %963 : vector<8x128xf32>
    %965 = vector.broadcast %926 : f32 to vector<8x128xf32>
    %966 = arith.mulf %915, %965 : vector<8x128xf32>
    %cst_285 = arith.constant 1.000000e+00 : f32
    %967 = vector.broadcast %cst_285 : f32 to vector<8x128xf32>
    %968 = arith.subf %967, %966 : vector<8x128xf32>
    %c5_286 = arith.constant 5 : index
    %c10_287 = arith.constant 10 : index
    %969 = memref.load %arg2[%c5_286, %c10_287] : memref<6x19xf32, #tpu.memory_space<smem>>
    %970 = vector.broadcast %969 : f32 to vector<8x128xf32>
    %971 = arith.mulf %878, %970 : vector<8x128xf32>
    %c5_288 = arith.constant 5 : index
    %c13_289 = arith.constant 13 : index
    %972 = memref.load %arg2[%c5_288, %c13_289] : memref<6x19xf32, #tpu.memory_space<smem>>
    %973 = vector.broadcast %972 : f32 to vector<8x128xf32>
    %974 = arith.mulf %915, %973 : vector<8x128xf32>
    %975 = arith.addf %971, %974 : vector<8x128xf32>
    %c5_290 = arith.constant 5 : index
    %c16_291 = arith.constant 16 : index
    %976 = memref.load %arg2[%c5_290, %c16_291] : memref<6x19xf32, #tpu.memory_space<smem>>
    %977 = vector.broadcast %976 : f32 to vector<8x128xf32>
    %978 = arith.mulf %917, %977 : vector<8x128xf32>
    %979 = arith.addf %975, %978 : vector<8x128xf32>
    %c5_292 = arith.constant 5 : index
    %c11_293 = arith.constant 11 : index
    %980 = memref.load %arg2[%c5_292, %c11_293] : memref<6x19xf32, #tpu.memory_space<smem>>
    %981 = vector.broadcast %980 : f32 to vector<8x128xf32>
    %982 = arith.mulf %878, %981 : vector<8x128xf32>
    %c5_294 = arith.constant 5 : index
    %c14_295 = arith.constant 14 : index
    %983 = memref.load %arg2[%c5_294, %c14_295] : memref<6x19xf32, #tpu.memory_space<smem>>
    %984 = vector.broadcast %983 : f32 to vector<8x128xf32>
    %985 = arith.mulf %915, %984 : vector<8x128xf32>
    %986 = arith.addf %982, %985 : vector<8x128xf32>
    %c5_296 = arith.constant 5 : index
    %c17_297 = arith.constant 17 : index
    %987 = memref.load %arg2[%c5_296, %c17_297] : memref<6x19xf32, #tpu.memory_space<smem>>
    %988 = vector.broadcast %987 : f32 to vector<8x128xf32>
    %989 = arith.mulf %917, %988 : vector<8x128xf32>
    %990 = arith.addf %986, %989 : vector<8x128xf32>
    %c5_298 = arith.constant 5 : index
    %c12_299 = arith.constant 12 : index
    %991 = memref.load %arg2[%c5_298, %c12_299] : memref<6x19xf32, #tpu.memory_space<smem>>
    %992 = vector.broadcast %991 : f32 to vector<8x128xf32>
    %993 = arith.mulf %878, %992 : vector<8x128xf32>
    %c5_300 = arith.constant 5 : index
    %c15_301 = arith.constant 15 : index
    %994 = memref.load %arg2[%c5_300, %c15_301] : memref<6x19xf32, #tpu.memory_space<smem>>
    %995 = vector.broadcast %994 : f32 to vector<8x128xf32>
    %996 = arith.mulf %915, %995 : vector<8x128xf32>
    %997 = arith.addf %993, %996 : vector<8x128xf32>
    %c5_302 = arith.constant 5 : index
    %c18_303 = arith.constant 18 : index
    %998 = memref.load %arg2[%c5_302, %c18_303] : memref<6x19xf32, #tpu.memory_space<smem>>
    %999 = vector.broadcast %998 : f32 to vector<8x128xf32>
    %1000 = arith.mulf %917, %999 : vector<8x128xf32>
    %1001 = arith.addf %997, %1000 : vector<8x128xf32>
    %1002 = arith.mulf %818, %930 : vector<8x128xf32>
    %1003 = arith.mulf %823, %945 : vector<8x128xf32>
    %1004 = arith.addf %1002, %1003 : vector<8x128xf32>
    %1005 = arith.mulf %828, %959 : vector<8x128xf32>
    %1006 = arith.addf %1004, %1005 : vector<8x128xf32>
    %1007 = arith.mulf %818, %935 : vector<8x128xf32>
    %1008 = arith.mulf %823, %949 : vector<8x128xf32>
    %1009 = arith.addf %1007, %1008 : vector<8x128xf32>
    %1010 = arith.mulf %828, %964 : vector<8x128xf32>
    %1011 = arith.addf %1009, %1010 : vector<8x128xf32>
    %1012 = arith.mulf %818, %940 : vector<8x128xf32>
    %1013 = arith.mulf %823, %954 : vector<8x128xf32>
    %1014 = arith.addf %1012, %1013 : vector<8x128xf32>
    %1015 = arith.mulf %828, %968 : vector<8x128xf32>
    %1016 = arith.addf %1014, %1015 : vector<8x128xf32>
    %1017 = arith.mulf %833, %930 : vector<8x128xf32>
    %1018 = arith.mulf %838, %945 : vector<8x128xf32>
    %1019 = arith.addf %1017, %1018 : vector<8x128xf32>
    %1020 = arith.mulf %843, %959 : vector<8x128xf32>
    %1021 = arith.addf %1019, %1020 : vector<8x128xf32>
    %1022 = arith.mulf %833, %935 : vector<8x128xf32>
    %1023 = arith.mulf %838, %949 : vector<8x128xf32>
    %1024 = arith.addf %1022, %1023 : vector<8x128xf32>
    %1025 = arith.mulf %843, %964 : vector<8x128xf32>
    %1026 = arith.addf %1024, %1025 : vector<8x128xf32>
    %1027 = arith.mulf %833, %940 : vector<8x128xf32>
    %1028 = arith.mulf %838, %954 : vector<8x128xf32>
    %1029 = arith.addf %1027, %1028 : vector<8x128xf32>
    %1030 = arith.mulf %843, %968 : vector<8x128xf32>
    %1031 = arith.addf %1029, %1030 : vector<8x128xf32>
    %1032 = arith.mulf %848, %930 : vector<8x128xf32>
    %1033 = arith.mulf %853, %945 : vector<8x128xf32>
    %1034 = arith.addf %1032, %1033 : vector<8x128xf32>
    %1035 = arith.mulf %858, %959 : vector<8x128xf32>
    %1036 = arith.addf %1034, %1035 : vector<8x128xf32>
    %1037 = arith.mulf %848, %935 : vector<8x128xf32>
    %1038 = arith.mulf %853, %949 : vector<8x128xf32>
    %1039 = arith.addf %1037, %1038 : vector<8x128xf32>
    %1040 = arith.mulf %858, %964 : vector<8x128xf32>
    %1041 = arith.addf %1039, %1040 : vector<8x128xf32>
    %1042 = arith.mulf %848, %940 : vector<8x128xf32>
    %1043 = arith.mulf %853, %954 : vector<8x128xf32>
    %1044 = arith.addf %1042, %1043 : vector<8x128xf32>
    %1045 = arith.mulf %858, %968 : vector<8x128xf32>
    %1046 = arith.addf %1044, %1045 : vector<8x128xf32>
    %1047 = arith.mulf %818, %979 : vector<8x128xf32>
    %1048 = arith.mulf %823, %990 : vector<8x128xf32>
    %1049 = arith.addf %1047, %1048 : vector<8x128xf32>
    %1050 = arith.mulf %828, %1001 : vector<8x128xf32>
    %1051 = arith.addf %1049, %1050 : vector<8x128xf32>
    %1052 = arith.addf %1051, %864 : vector<8x128xf32>
    %1053 = arith.mulf %833, %979 : vector<8x128xf32>
    %1054 = arith.mulf %838, %990 : vector<8x128xf32>
    %1055 = arith.addf %1053, %1054 : vector<8x128xf32>
    %1056 = arith.mulf %843, %1001 : vector<8x128xf32>
    %1057 = arith.addf %1055, %1056 : vector<8x128xf32>
    %1058 = arith.addf %1057, %870 : vector<8x128xf32>
    %1059 = arith.mulf %848, %979 : vector<8x128xf32>
    %1060 = arith.mulf %853, %990 : vector<8x128xf32>
    %1061 = arith.addf %1059, %1060 : vector<8x128xf32>
    %1062 = arith.mulf %858, %1001 : vector<8x128xf32>
    %1063 = arith.addf %1061, %1062 : vector<8x128xf32>
    %1064 = arith.addf %1063, %876 : vector<8x128xf32>
    %c0_304 = arith.constant 0 : index
    %1065 = memref.load %arg3[%c0_304] : memref<12xf32, #tpu.memory_space<smem>>
    %1066 = vector.broadcast %1065 : f32 to vector<8x128xf32>
    %1067 = arith.mulf %1006, %1066 : vector<8x128xf32>
    %c4_305 = arith.constant 4 : index
    %1068 = memref.load %arg3[%c4_305] : memref<12xf32, #tpu.memory_space<smem>>
    %1069 = vector.broadcast %1068 : f32 to vector<8x128xf32>
    %1070 = arith.mulf %1011, %1069 : vector<8x128xf32>
    %1071 = arith.addf %1067, %1070 : vector<8x128xf32>
    %c8_306 = arith.constant 8 : index
    %1072 = memref.load %arg3[%c8_306] : memref<12xf32, #tpu.memory_space<smem>>
    %1073 = vector.broadcast %1072 : f32 to vector<8x128xf32>
    %1074 = arith.mulf %1016, %1073 : vector<8x128xf32>
    %1075 = arith.addf %1071, %1074 : vector<8x128xf32>
    %c1_307 = arith.constant 1 : index
    %1076 = memref.load %arg3[%c1_307] : memref<12xf32, #tpu.memory_space<smem>>
    %1077 = vector.broadcast %1076 : f32 to vector<8x128xf32>
    %1078 = arith.mulf %1006, %1077 : vector<8x128xf32>
    %c5_308 = arith.constant 5 : index
    %1079 = memref.load %arg3[%c5_308] : memref<12xf32, #tpu.memory_space<smem>>
    %1080 = vector.broadcast %1079 : f32 to vector<8x128xf32>
    %1081 = arith.mulf %1011, %1080 : vector<8x128xf32>
    %1082 = arith.addf %1078, %1081 : vector<8x128xf32>
    %c9_309 = arith.constant 9 : index
    %1083 = memref.load %arg3[%c9_309] : memref<12xf32, #tpu.memory_space<smem>>
    %1084 = vector.broadcast %1083 : f32 to vector<8x128xf32>
    %1085 = arith.mulf %1016, %1084 : vector<8x128xf32>
    %1086 = arith.addf %1082, %1085 : vector<8x128xf32>
    %c2_310 = arith.constant 2 : index
    %1087 = memref.load %arg3[%c2_310] : memref<12xf32, #tpu.memory_space<smem>>
    %1088 = vector.broadcast %1087 : f32 to vector<8x128xf32>
    %1089 = arith.mulf %1006, %1088 : vector<8x128xf32>
    %c6_311 = arith.constant 6 : index
    %1090 = memref.load %arg3[%c6_311] : memref<12xf32, #tpu.memory_space<smem>>
    %1091 = vector.broadcast %1090 : f32 to vector<8x128xf32>
    %1092 = arith.mulf %1011, %1091 : vector<8x128xf32>
    %1093 = arith.addf %1089, %1092 : vector<8x128xf32>
    %c10_312 = arith.constant 10 : index
    %1094 = memref.load %arg3[%c10_312] : memref<12xf32, #tpu.memory_space<smem>>
    %1095 = vector.broadcast %1094 : f32 to vector<8x128xf32>
    %1096 = arith.mulf %1016, %1095 : vector<8x128xf32>
    %1097 = arith.addf %1093, %1096 : vector<8x128xf32>
    %c3_313 = arith.constant 3 : index
    %1098 = memref.load %arg3[%c3_313] : memref<12xf32, #tpu.memory_space<smem>>
    %1099 = vector.broadcast %1098 : f32 to vector<8x128xf32>
    %1100 = arith.mulf %1006, %1099 : vector<8x128xf32>
    %c7_314 = arith.constant 7 : index
    %1101 = memref.load %arg3[%c7_314] : memref<12xf32, #tpu.memory_space<smem>>
    %1102 = vector.broadcast %1101 : f32 to vector<8x128xf32>
    %1103 = arith.mulf %1011, %1102 : vector<8x128xf32>
    %1104 = arith.addf %1100, %1103 : vector<8x128xf32>
    %c11_315 = arith.constant 11 : index
    %1105 = memref.load %arg3[%c11_315] : memref<12xf32, #tpu.memory_space<smem>>
    %1106 = vector.broadcast %1105 : f32 to vector<8x128xf32>
    %1107 = arith.mulf %1016, %1106 : vector<8x128xf32>
    %1108 = arith.addf %1104, %1107 : vector<8x128xf32>
    %1109 = arith.addf %1108, %1052 : vector<8x128xf32>
    %c0_316 = arith.constant 0 : index
    %1110 = memref.load %arg3[%c0_316] : memref<12xf32, #tpu.memory_space<smem>>
    %1111 = vector.broadcast %1110 : f32 to vector<8x128xf32>
    %1112 = arith.mulf %1021, %1111 : vector<8x128xf32>
    %c4_317 = arith.constant 4 : index
    %1113 = memref.load %arg3[%c4_317] : memref<12xf32, #tpu.memory_space<smem>>
    %1114 = vector.broadcast %1113 : f32 to vector<8x128xf32>
    %1115 = arith.mulf %1026, %1114 : vector<8x128xf32>
    %1116 = arith.addf %1112, %1115 : vector<8x128xf32>
    %c8_318 = arith.constant 8 : index
    %1117 = memref.load %arg3[%c8_318] : memref<12xf32, #tpu.memory_space<smem>>
    %1118 = vector.broadcast %1117 : f32 to vector<8x128xf32>
    %1119 = arith.mulf %1031, %1118 : vector<8x128xf32>
    %1120 = arith.addf %1116, %1119 : vector<8x128xf32>
    %c1_319 = arith.constant 1 : index
    %1121 = memref.load %arg3[%c1_319] : memref<12xf32, #tpu.memory_space<smem>>
    %1122 = vector.broadcast %1121 : f32 to vector<8x128xf32>
    %1123 = arith.mulf %1021, %1122 : vector<8x128xf32>
    %c5_320 = arith.constant 5 : index
    %1124 = memref.load %arg3[%c5_320] : memref<12xf32, #tpu.memory_space<smem>>
    %1125 = vector.broadcast %1124 : f32 to vector<8x128xf32>
    %1126 = arith.mulf %1026, %1125 : vector<8x128xf32>
    %1127 = arith.addf %1123, %1126 : vector<8x128xf32>
    %c9_321 = arith.constant 9 : index
    %1128 = memref.load %arg3[%c9_321] : memref<12xf32, #tpu.memory_space<smem>>
    %1129 = vector.broadcast %1128 : f32 to vector<8x128xf32>
    %1130 = arith.mulf %1031, %1129 : vector<8x128xf32>
    %1131 = arith.addf %1127, %1130 : vector<8x128xf32>
    %c2_322 = arith.constant 2 : index
    %1132 = memref.load %arg3[%c2_322] : memref<12xf32, #tpu.memory_space<smem>>
    %1133 = vector.broadcast %1132 : f32 to vector<8x128xf32>
    %1134 = arith.mulf %1021, %1133 : vector<8x128xf32>
    %c6_323 = arith.constant 6 : index
    %1135 = memref.load %arg3[%c6_323] : memref<12xf32, #tpu.memory_space<smem>>
    %1136 = vector.broadcast %1135 : f32 to vector<8x128xf32>
    %1137 = arith.mulf %1026, %1136 : vector<8x128xf32>
    %1138 = arith.addf %1134, %1137 : vector<8x128xf32>
    %c10_324 = arith.constant 10 : index
    %1139 = memref.load %arg3[%c10_324] : memref<12xf32, #tpu.memory_space<smem>>
    %1140 = vector.broadcast %1139 : f32 to vector<8x128xf32>
    %1141 = arith.mulf %1031, %1140 : vector<8x128xf32>
    %1142 = arith.addf %1138, %1141 : vector<8x128xf32>
    %c3_325 = arith.constant 3 : index
    %1143 = memref.load %arg3[%c3_325] : memref<12xf32, #tpu.memory_space<smem>>
    %1144 = vector.broadcast %1143 : f32 to vector<8x128xf32>
    %1145 = arith.mulf %1021, %1144 : vector<8x128xf32>
    %c7_326 = arith.constant 7 : index
    %1146 = memref.load %arg3[%c7_326] : memref<12xf32, #tpu.memory_space<smem>>
    %1147 = vector.broadcast %1146 : f32 to vector<8x128xf32>
    %1148 = arith.mulf %1026, %1147 : vector<8x128xf32>
    %1149 = arith.addf %1145, %1148 : vector<8x128xf32>
    %c11_327 = arith.constant 11 : index
    %1150 = memref.load %arg3[%c11_327] : memref<12xf32, #tpu.memory_space<smem>>
    %1151 = vector.broadcast %1150 : f32 to vector<8x128xf32>
    %1152 = arith.mulf %1031, %1151 : vector<8x128xf32>
    %1153 = arith.addf %1149, %1152 : vector<8x128xf32>
    %1154 = arith.addf %1153, %1058 : vector<8x128xf32>
    %c0_328 = arith.constant 0 : index
    %1155 = memref.load %arg3[%c0_328] : memref<12xf32, #tpu.memory_space<smem>>
    %1156 = vector.broadcast %1155 : f32 to vector<8x128xf32>
    %1157 = arith.mulf %1036, %1156 : vector<8x128xf32>
    %c4_329 = arith.constant 4 : index
    %1158 = memref.load %arg3[%c4_329] : memref<12xf32, #tpu.memory_space<smem>>
    %1159 = vector.broadcast %1158 : f32 to vector<8x128xf32>
    %1160 = arith.mulf %1041, %1159 : vector<8x128xf32>
    %1161 = arith.addf %1157, %1160 : vector<8x128xf32>
    %c8_330 = arith.constant 8 : index
    %1162 = memref.load %arg3[%c8_330] : memref<12xf32, #tpu.memory_space<smem>>
    %1163 = vector.broadcast %1162 : f32 to vector<8x128xf32>
    %1164 = arith.mulf %1046, %1163 : vector<8x128xf32>
    %1165 = arith.addf %1161, %1164 : vector<8x128xf32>
    %c1_331 = arith.constant 1 : index
    %1166 = memref.load %arg3[%c1_331] : memref<12xf32, #tpu.memory_space<smem>>
    %1167 = vector.broadcast %1166 : f32 to vector<8x128xf32>
    %1168 = arith.mulf %1036, %1167 : vector<8x128xf32>
    %c5_332 = arith.constant 5 : index
    %1169 = memref.load %arg3[%c5_332] : memref<12xf32, #tpu.memory_space<smem>>
    %1170 = vector.broadcast %1169 : f32 to vector<8x128xf32>
    %1171 = arith.mulf %1041, %1170 : vector<8x128xf32>
    %1172 = arith.addf %1168, %1171 : vector<8x128xf32>
    %c9_333 = arith.constant 9 : index
    %1173 = memref.load %arg3[%c9_333] : memref<12xf32, #tpu.memory_space<smem>>
    %1174 = vector.broadcast %1173 : f32 to vector<8x128xf32>
    %1175 = arith.mulf %1046, %1174 : vector<8x128xf32>
    %1176 = arith.addf %1172, %1175 : vector<8x128xf32>
    %c2_334 = arith.constant 2 : index
    %1177 = memref.load %arg3[%c2_334] : memref<12xf32, #tpu.memory_space<smem>>
    %1178 = vector.broadcast %1177 : f32 to vector<8x128xf32>
    %1179 = arith.mulf %1036, %1178 : vector<8x128xf32>
    %c6_335 = arith.constant 6 : index
    %1180 = memref.load %arg3[%c6_335] : memref<12xf32, #tpu.memory_space<smem>>
    %1181 = vector.broadcast %1180 : f32 to vector<8x128xf32>
    %1182 = arith.mulf %1041, %1181 : vector<8x128xf32>
    %1183 = arith.addf %1179, %1182 : vector<8x128xf32>
    %c10_336 = arith.constant 10 : index
    %1184 = memref.load %arg3[%c10_336] : memref<12xf32, #tpu.memory_space<smem>>
    %1185 = vector.broadcast %1184 : f32 to vector<8x128xf32>
    %1186 = arith.mulf %1046, %1185 : vector<8x128xf32>
    %1187 = arith.addf %1183, %1186 : vector<8x128xf32>
    %c3_337 = arith.constant 3 : index
    %1188 = memref.load %arg3[%c3_337] : memref<12xf32, #tpu.memory_space<smem>>
    %1189 = vector.broadcast %1188 : f32 to vector<8x128xf32>
    %1190 = arith.mulf %1036, %1189 : vector<8x128xf32>
    %c7_338 = arith.constant 7 : index
    %1191 = memref.load %arg3[%c7_338] : memref<12xf32, #tpu.memory_space<smem>>
    %1192 = vector.broadcast %1191 : f32 to vector<8x128xf32>
    %1193 = arith.mulf %1041, %1192 : vector<8x128xf32>
    %1194 = arith.addf %1190, %1193 : vector<8x128xf32>
    %c11_339 = arith.constant 11 : index
    %1195 = memref.load %arg3[%c11_339] : memref<12xf32, #tpu.memory_space<smem>>
    %1196 = vector.broadcast %1195 : f32 to vector<8x128xf32>
    %1197 = arith.mulf %1046, %1196 : vector<8x128xf32>
    %1198 = arith.addf %1194, %1197 : vector<8x128xf32>
    %1199 = arith.addf %1198, %1064 : vector<8x128xf32>
    %c0_340 = arith.constant 0 : index
    %c0_341 = arith.constant 0 : index
    %c0_342 = arith.constant 0 : index
    %c0_343 = arith.constant 0 : index
    %1200 = vector.load %arg4[%c0_340, %c0_341, %c0_342, %c0_343] : memref<12x1x8x128xf32, #tpu.memory_space<vmem>>, vector<1x1x8x128xf32>
    %1201 = vector.shape_cast %1200 : vector<1x1x8x128xf32> to vector<8x128xf32>
    %1202 = vector.shape_cast %1075 : vector<8x128xf32> to vector<1x1x8x128xf32>
    tpu.vector_store %arg4[%c0_340, %c0_341, %c0_342, %c0_343], %1202 {strides = array<i32>} : memref<12x1x8x128xf32, #tpu.memory_space<vmem>>, vector<1x1x8x128xf32>,
    %c1_344 = arith.constant 1 : index
    %c0_345 = arith.constant 0 : index
    %c0_346 = arith.constant 0 : index
    %c0_347 = arith.constant 0 : index
    %1203 = vector.load %arg4[%c1_344, %c0_345, %c0_346, %c0_347] : memref<12x1x8x128xf32, #tpu.memory_space<vmem>>, vector<1x1x8x128xf32>
    %1204 = vector.shape_cast %1203 : vector<1x1x8x128xf32> to vector<8x128xf32>
    %1205 = vector.shape_cast %1086 : vector<8x128xf32> to vector<1x1x8x128xf32>
    tpu.vector_store %arg4[%c1_344, %c0_345, %c0_346, %c0_347], %1205 {strides = array<i32>} : memref<12x1x8x128xf32, #tpu.memory_space<vmem>>, vector<1x1x8x128xf32>,
    %c2_348 = arith.constant 2 : index
    %c0_349 = arith.constant 0 : index
    %c0_350 = arith.constant 0 : index
    %c0_351 = arith.constant 0 : index
    %1206 = vector.load %arg4[%c2_348, %c0_349, %c0_350, %c0_351] : memref<12x1x8x128xf32, #tpu.memory_space<vmem>>, vector<1x1x8x128xf32>
    %1207 = vector.shape_cast %1206 : vector<1x1x8x128xf32> to vector<8x128xf32>
    %1208 = vector.shape_cast %1097 : vector<8x128xf32> to vector<1x1x8x128xf32>
    tpu.vector_store %arg4[%c2_348, %c0_349, %c0_350, %c0_351], %1208 {strides = array<i32>} : memref<12x1x8x128xf32, #tpu.memory_space<vmem>>, vector<1x1x8x128xf32>,
    %c3_352 = arith.constant 3 : index
    %c0_353 = arith.constant 0 : index
    %c0_354 = arith.constant 0 : index
    %c0_355 = arith.constant 0 : index
    %1209 = vector.load %arg4[%c3_352, %c0_353, %c0_354, %c0_355] : memref<12x1x8x128xf32, #tpu.memory_space<vmem>>, vector<1x1x8x128xf32>
    %1210 = vector.shape_cast %1209 : vector<1x1x8x128xf32> to vector<8x128xf32>
    %1211 = vector.shape_cast %1109 : vector<8x128xf32> to vector<1x1x8x128xf32>
    tpu.vector_store %arg4[%c3_352, %c0_353, %c0_354, %c0_355], %1211 {strides = array<i32>} : memref<12x1x8x128xf32, #tpu.memory_space<vmem>>, vector<1x1x8x128xf32>,
    %c4_356 = arith.constant 4 : index
    %c0_357 = arith.constant 0 : index
    %c0_358 = arith.constant 0 : index
    %c0_359 = arith.constant 0 : index
    %1212 = vector.load %arg4[%c4_356, %c0_357, %c0_358, %c0_359] : memref<12x1x8x128xf32, #tpu.memory_space<vmem>>, vector<1x1x8x128xf32>
    %1213 = vector.shape_cast %1212 : vector<1x1x8x128xf32> to vector<8x128xf32>
    %1214 = vector.shape_cast %1120 : vector<8x128xf32> to vector<1x1x8x128xf32>
    tpu.vector_store %arg4[%c4_356, %c0_357, %c0_358, %c0_359], %1214 {strides = array<i32>} : memref<12x1x8x128xf32, #tpu.memory_space<vmem>>, vector<1x1x8x128xf32>,
    %c5_360 = arith.constant 5 : index
    %c0_361 = arith.constant 0 : index
    %c0_362 = arith.constant 0 : index
    %c0_363 = arith.constant 0 : index
    %1215 = vector.load %arg4[%c5_360, %c0_361, %c0_362, %c0_363] : memref<12x1x8x128xf32, #tpu.memory_space<vmem>>, vector<1x1x8x128xf32>
    %1216 = vector.shape_cast %1215 : vector<1x1x8x128xf32> to vector<8x128xf32>
    %1217 = vector.shape_cast %1131 : vector<8x128xf32> to vector<1x1x8x128xf32>
    tpu.vector_store %arg4[%c5_360, %c0_361, %c0_362, %c0_363], %1217 {strides = array<i32>} : memref<12x1x8x128xf32, #tpu.memory_space<vmem>>, vector<1x1x8x128xf32>,
    %c6_364 = arith.constant 6 : index
    %c0_365 = arith.constant 0 : index
    %c0_366 = arith.constant 0 : index
    %c0_367 = arith.constant 0 : index
    %1218 = vector.load %arg4[%c6_364, %c0_365, %c0_366, %c0_367] : memref<12x1x8x128xf32, #tpu.memory_space<vmem>>, vector<1x1x8x128xf32>
    %1219 = vector.shape_cast %1218 : vector<1x1x8x128xf32> to vector<8x128xf32>
    %1220 = vector.shape_cast %1142 : vector<8x128xf32> to vector<1x1x8x128xf32>
    tpu.vector_store %arg4[%c6_364, %c0_365, %c0_366, %c0_367], %1220 {strides = array<i32>} : memref<12x1x8x128xf32, #tpu.memory_space<vmem>>, vector<1x1x8x128xf32>,
    %c7_368 = arith.constant 7 : index
    %c0_369 = arith.constant 0 : index
    %c0_370 = arith.constant 0 : index
    %c0_371 = arith.constant 0 : index
    %1221 = vector.load %arg4[%c7_368, %c0_369, %c0_370, %c0_371] : memref<12x1x8x128xf32, #tpu.memory_space<vmem>>, vector<1x1x8x128xf32>
    %1222 = vector.shape_cast %1221 : vector<1x1x8x128xf32> to vector<8x128xf32>
    %1223 = vector.shape_cast %1154 : vector<8x128xf32> to vector<1x1x8x128xf32>
    tpu.vector_store %arg4[%c7_368, %c0_369, %c0_370, %c0_371], %1223 {strides = array<i32>} : memref<12x1x8x128xf32, #tpu.memory_space<vmem>>, vector<1x1x8x128xf32>,
    %c8_372 = arith.constant 8 : index
    %c0_373 = arith.constant 0 : index
    %c0_374 = arith.constant 0 : index
    %c0_375 = arith.constant 0 : index
    %1224 = vector.load %arg4[%c8_372, %c0_373, %c0_374, %c0_375] : memref<12x1x8x128xf32, #tpu.memory_space<vmem>>, vector<1x1x8x128xf32>
    %1225 = vector.shape_cast %1224 : vector<1x1x8x128xf32> to vector<8x128xf32>
    %1226 = vector.shape_cast %1165 : vector<8x128xf32> to vector<1x1x8x128xf32>
    tpu.vector_store %arg4[%c8_372, %c0_373, %c0_374, %c0_375], %1226 {strides = array<i32>} : memref<12x1x8x128xf32, #tpu.memory_space<vmem>>, vector<1x1x8x128xf32>,
    %c9_376 = arith.constant 9 : index
    %c0_377 = arith.constant 0 : index
    %c0_378 = arith.constant 0 : index
    %c0_379 = arith.constant 0 : index
    %1227 = vector.load %arg4[%c9_376, %c0_377, %c0_378, %c0_379] : memref<12x1x8x128xf32, #tpu.memory_space<vmem>>, vector<1x1x8x128xf32>
    %1228 = vector.shape_cast %1227 : vector<1x1x8x128xf32> to vector<8x128xf32>
    %1229 = vector.shape_cast %1176 : vector<8x128xf32> to vector<1x1x8x128xf32>
    tpu.vector_store %arg4[%c9_376, %c0_377, %c0_378, %c0_379], %1229 {strides = array<i32>} : memref<12x1x8x128xf32, #tpu.memory_space<vmem>>, vector<1x1x8x128xf32>,
    %c10_380 = arith.constant 10 : index
    %c0_381 = arith.constant 0 : index
    %c0_382 = arith.constant 0 : index
    %c0_383 = arith.constant 0 : index
    %1230 = vector.load %arg4[%c10_380, %c0_381, %c0_382, %c0_383] : memref<12x1x8x128xf32, #tpu.memory_space<vmem>>, vector<1x1x8x128xf32>
    %1231 = vector.shape_cast %1230 : vector<1x1x8x128xf32> to vector<8x128xf32>
    %1232 = vector.shape_cast %1187 : vector<8x128xf32> to vector<1x1x8x128xf32>
    tpu.vector_store %arg4[%c10_380, %c0_381, %c0_382, %c0_383], %1232 {strides = array<i32>} : memref<12x1x8x128xf32, #tpu.memory_space<vmem>>, vector<1x1x8x128xf32>,
    %c11_384 = arith.constant 11 : index
    %c0_385 = arith.constant 0 : index
    %c0_386 = arith.constant 0 : index
    %c0_387 = arith.constant 0 : index
    %1233 = vector.load %arg4[%c11_384, %c0_385, %c0_386, %c0_387] : memref<12x1x8x128xf32, #tpu.memory_space<vmem>>, vector<1x1x8x128xf32>
    %1234 = vector.shape_cast %1233 : vector<1x1x8x128xf32> to vector<8x128xf32>
    %1235 = vector.shape_cast %1199 : vector<8x128xf32> to vector<1x1x8x128xf32>
    tpu.vector_store %arg4[%c11_384, %c0_385, %c0_386, %c0_387], %1235 {strides = array<i32>} : memref<12x1x8x128xf32, #tpu.memory_space<vmem>>, vector<1x1x8x128xf32>,
    return
  }
  func.func @transform_0(%arg0: i32) -> (i32, i32, i32, i32) {
    %c0_i32 = arith.constant 0 : i32
    %c0_i32_0 = arith.constant 0 : i32
    %c0_i32_1 = arith.constant 0 : i32
    %c0_i32_2 = arith.constant 0 : i32
    return %c0_i32, %arg0, %c0_i32_0, %c0_i32_1 : i32, i32, i32, i32
  }
  func.func @transform_1(%arg0: i32) -> (i32, i32) {
    %c0_i32 = arith.constant 0 : i32
    %c0_i32_0 = arith.constant 0 : i32
    %c0_i32_1 = arith.constant 0 : i32
    return %c0_i32, %c0_i32_0 : i32, i32
  }
  func.func @transform_2(%arg0: i32) -> i32 {
    %c0_i32 = arith.constant 0 : i32
    %c0_i32_0 = arith.constant 0 : i32
    return %c0_i32 : i32
  }
  func.func @transform_3(%arg0: i32) -> (i32, i32, i32, i32) {
    %c0_i32 = arith.constant 0 : i32
    %c0_i32_0 = arith.constant 0 : i32
    %c0_i32_1 = arith.constant 0 : i32
    %c0_i32_2 = arith.constant 0 : i32
    return %c0_i32, %arg0, %c0_i32_0, %c0_i32_1 : i32, i32, i32, i32
  }
}

</mosaic_0001>

<llo_original>
// kernel: tpu_custom_call.1
$region0: #{tpu_custom_call.1}
  #allocation0 [shape = 'u32[]', space=smem, size = 0x4, offset = 0x4, fixed_abs, tag = 'smem constant byte address 0x4 - core index']
  #allocation1 [shape = 'u32[144,128]{1,0:T(1,128)}', space=vmem, size = 0x12000, scoped, tag = 'internal scratch']
  %s0 = inlined_call_operand.hbm [shape: f32[6,1,8,128], index: 0, kind: input, shape index: {}]
  %s1 = inlined_call_operand.hbm [shape: f32[6,19], index: 1, kind: input, shape index: {}]
  %s2 = inlined_call_operand.vmem [shape: f32[12], index: 2, kind: input, shape index: {}]
  %s3 = inlined_call_operand.hbm [shape: f32[12,1,8,128], index: 3, kind: output, shape index: {}]
  %s4 = sld [smem:[#allocation0]]
  $region34: #{tpu_custom_call.1} parent=0
    _
  %s6 = ssub.s32 1, %s4
  %s7 = scalar_select 0, %s6, %s4
  $region1: #{tpu_custom_call.1} parent=0
    #allocation2 [shape = 'u8[24576]{0}', space=vmem, size = 0x6000, scoped, tag = 'input window, operand 0, single buffered']
    #allocation3 [shape = 's32[1]{0}', space=sflag, size = 0x4, scoped, tag = 'scoped memory for tpu_custom_call.1']
    #allocation4 [shape = 's32[1]{0}', space=sflag, size = 0x4, scoped, tag = 'scoped memory for tpu_custom_call.1']
    #allocation5 [shape = 's32[1]{0}', space=sflag, size = 0x4, scoped, tag = 'scoped memory for tpu_custom_call.1']
    #allocation6 [shape = 's32[1]{0}', space=sflag, size = 0x4, scoped, tag = 'scoped memory for tpu_custom_call.1']
    #allocation7 [shape = 'u8[4096]{0}', space=smem, size = 0x1000, scoped, tag = 'input window, operand 1, single buffered']
    #allocation8 [shape = 'u8[512]{0}', space=smem, size = 0x200, scoped, tag = 'input window, operand 2, single buffered']
    #allocation9 [shape = 'u8[49152]{0}', space=vmem, size = 0xc000, scoped, tag = 'output window, operand 0, single buffered']
    %8 = vsyncpa [#allocation3], 0
    %9 = vsyncpa [#allocation5], 0
    %10 = vsyncpa [#allocation6], 0
    %11 = vsyncpa [#allocation4], 0
    // Predicated region
    $region2: #{tpu_custom_call.1} parent=1 // pred_check
      _
    $region3: #{tpu_custom_call.1} parent=1 // pred_check_branch
      %13 = sbr.rel (0) target = $region5
    $region4: #{tpu_custom_call.1} parent=1 // pred_region
      %s15 = ssub.s32 768, 768
      %16 = vsyncadd [#allocation3], %s15
      %s17 = sshll.u32 [#allocation2], 4
      %s18 = int_to_ptr.vmem [resolvable:$true] %s17
      %23 = dma.hbm_to_vmem [thread:$0]  %s0, 768, %s18, [#allocation3], 128, 128, 8
    $region5: #{tpu_custom_call.1} parent=1 // pred_fallthru
      _
    // Predicated region
    $region6: #{tpu_custom_call.1} parent=1 // pred_check
      _
    $region7: #{tpu_custom_call.1} parent=1 // pred_check_branch
      %25 = sbr.rel (0) target = $region9
    $region8: #{tpu_custom_call.1} parent=1 // pred_region
      %s27 = ssub.s32 128, 128
      %28 = vsyncadd [#allocation5], %s27
      %31 = dma.hbm_to_smem %s1, 128, [#allocation7], [#allocation5]
    $region9: #{tpu_custom_call.1} parent=1 // pred_fallthru
      _
    // Predicated region
    $region10: #{tpu_custom_call.1} parent=1 // pred_check
      _
    $region11: #{tpu_custom_call.1} parent=1 // pred_check_branch
      %33 = sbr.rel (0) target = $region13
    $region12: #{tpu_custom_call.1} parent=1 // pred_region
      %s35 = ssub.s32 16, 16
      %36 = vsyncadd [#allocation6], %s35
      %s38 = sshll.u32 %s2, 4
      %s39 = int_to_ptr.vmem [resolvable:$true] %s38
      %41 = dma.vmem_to_smem %s39, 16, [#allocation8], [#allocation6]
    $region13: #{tpu_custom_call.1} parent=1 // pred_fallthru
      _
    // Predicated region
    $region14: #{tpu_custom_call.1} parent=1 // pred_check
      _
    $region15: #{tpu_custom_call.1} parent=1 // pred_check_branch
      %43 = sbr.rel (0) target = $region17
    $region16: #{tpu_custom_call.1} parent=1 // pred_region
      %44 = dma.done [#allocation3], 768
    $region17: #{tpu_custom_call.1} parent=1 // pred_fallthru
      _
    // Predicated region
    $region18: #{tpu_custom_call.1} parent=1 // pred_check
      _
    $region19: #{tpu_custom_call.1} parent=1 // pred_check_branch
      %46 = sbr.rel (0) target = $region21
    $region20: #{tpu_custom_call.1} parent=1 // pred_region
      %47 = dma.done [#allocation5], 128
    $region21: #{tpu_custom_call.1} parent=1 // pred_fallthru
      _
    // Predicated region
    $region22: #{tpu_custom_call.1} parent=1 // pred_check
      _
    $region23: #{tpu_custom_call.1} parent=1 // pred_check_branch
      %49 = sbr.rel (0) target = $region25
    $region24: #{tpu_custom_call.1} parent=1 // pred_region
      %50 = dma.done [#allocation6], 16
    $region25: #{tpu_custom_call.1} parent=1 // pred_fallthru
      _
    %51 = sfence
    %v52 = vld [vmem:[#allocation2] sm:$0xff]
    %s53 = sld [smem:[#allocation7]]
    %v54 = vmul.f32 %v52, %v52
    %v55 = vstv %s53
    %v56 = vmul.f32 %v54, %v55
    %vm57 = vcmp.lt.f32.partialorder %v56, 1e-12
    %v58 = vsel %vm57, 1.0, %v56
    %v59 = vrsqrt.pop %v58
    %v60 = vmul.f32 %v58, %v59
    %v61 = vmul.f32 %v59, %v59
    %v62 = vand.u32 2147483647, %v60
    %vm63 = vcmp.le.f32.partialorder %v62, 0.7853982
    %vm64 = vcmp.lt.s32.totalorder %v60, 0
    %v65 = vand.u32 %v60, 2139095040
    %v66 = vshrl.u32 %v65, 23
    %v67 = vsub.s32 %v66, 127
    %v68 = vand.u32 2147483647, %v60
    %v69 = vand.u32 %v68, 8388607
    %v70 = vor.u32 %v69, 8388608
    %v71 = vsub.s32 0, %v70
    %v72 = vadd.s32 %v67, 1
    %vm73 = vcmp.gt.s32.totalorder %v72, 0
    %v74 = vsel %vm73, %v72, 0
    %v75 = vshrl.u32 %v74, 5
    %v76 = vand.u32 %v74, 31
    %v77 = vsub.s32 32, %v76
    %v78 = vshrl.u32 683565275, %v77
    %v79 = vshll.u32 683565275, %v76
    %v80 = vshrl.u32 2475754826, %v77
    %v81 = vor.u32 %v79, %v80
    %v82 = vshll.u32 2475754826, %v76
    %v83 = vshrl.u32 2131351028, %v77
    %v84 = vor.u32 %v82, %v83
    %v85 = vshll.u32 2131351028, %v76
    %v86 = vshrl.u32 2102212464, %v77
    %v87 = vor.u32 %v85, %v86
    %v88 = vshll.u32 2102212464, %v76
    %v89 = vshrl.u32 920167782, %v77
    %v90 = vor.u32 %v88, %v89
    %v91 = vshll.u32 920167782, %v76
    %v92 = vshrl.u32 1326507024, %v77
    %v93 = vor.u32 %v91, %v92
    %vm94 = vcmp.lt.s32.totalorder %v75, 1
    %vm95 = vcmp.lt.s32.totalorder %v75, 2
    %vm96 = vcmp.lt.s32.totalorder %v75, 3
    %vm97 = vcmp.lt.s32.totalorder %v75, 4
    %v98 = vsel %vm94, %v78, %v81
    %v99 = vsel %vm97, %v87, 2102212464
    %v100 = vsel %vm96, %v84, %v99
    %v101 = vsel %vm95, %v98, %v100
    %v102 = vsel %vm94, %v81, %v84
    %v103 = vsel %vm97, %v90, 920167782
    %v104 = vsel %vm96, %v87, %v103
    %v105 = vsel %vm95, %v102, %v104
    %v106 = vsel %vm94, %v84, %v87
    %v107 = vsel %vm97, %v93, 1326507024
    %v108 = vsel %vm96, %v90, %v107
    %v109 = vsel %vm95, %v106, %v108
    %v110 = vshll.u32 %v70, 8
    %v111 = vmul.u32.u64.compose %v110, %v109
    %v112 = vextract.low.u32 %v111
    %v113 = vextract.high.u32 %v111
    %v114 = vmul.u32.u64.compose %v110, %v105
    %v115 = vextract.low.u32 %v114
    %v116 = vextract.high.u32 %v114
    %v117 = vmul.u32 %v110, %v101
    %v118 = vadd.s32 %v113, %v115
    %vm119 = vc.u32 %v113, %v115
    %v120 = vadd.s32 %v116, 1
    %v121 = vsel %vm119, %v120, %v116
    %v122 = vadd.s32 %v117, %v121
    %v123 = vadd.s32 %v122, 536870912
    %v124 = vshrl.u32 %v123, 30
    %v125 = vshll.u32 %v124, 30
    %v126 = vsub.s32 %v122, %v125
    %vm127 = vcmp.lt.s32.totalorder %v126, 0
    %v128 = vsub.s32 0, %v126
    %v129 = vsel %vm127, %v128, %v126
    %v130 = vclz %v129
    %v131 = vsub.s32 %v130, 2
    %vm132 = vcmp.gt.s32.totalorder 0, %v131
    %v133 = vsel %vm132, 0, %v131
    %v134 = vsub.s32 32, %v133
    %v135 = vshll.u32 %v126, %v133
    %v136 = vshrl.u32 %v118, %v134
    %v137 = vor.u32 %v135, %v136
    %v138 = vsub.s32 4294967266, %v133
    %v139 = vadd.s32 %v138, 127
    %v140 = vshll.u32 %v139, 23
    %v141 = vor.u32 4788187, %v140
    %v142 = vand.u32 2147483647, %v141
    %v144 = vcvt.s32.f32 %v137
    %v145 = vmul.f32 %v144, %v142
    %v146 = vxor.u32 %v145, 2147483648
    %v147 = vsel %vm64, %v146, %v145
    %v148 = vsub.s32 4, %v124
    %v149 = vsel %vm64, %v148, %v124
    %v150 = vsel %vm63, %v60, %v147
    %v151 = vsel %vm63, 0, %v149
    %v152 = vcosq.f32.pop %v150
    %v153 = vsinq.f32.pop %v150
    %vm154 = vweird.f32 %v60
    %v155 = vadd.s32 %v151, 3
    %v156 = vand.u32 %v155, 3
    %vm157 = vcmp.lt.s32.totalorder %v156, 2
    %vm158 = vcmp.eq.s32.totalorder %v156, 0
    %v159 = vxor.u32 %v153, 2147483648
    %v160 = vsel %vm158, %v152, %v159
    %vm161 = vcmp.eq.s32.totalorder %v156, 2
    %v162 = vxor.u32 %v152, 2147483648
    %v163 = vsel %vm161, %v162, %v153
    %v164 = vsel %vm157, %v160, %v163
    %v165 = vsel %vm154, nan, %v164
    %v166 = vand.u32 2147483647, %v60
    %vm167 = vcmp.le.f32.partialorder %v166, 0.7853982
    %vm168 = vcmp.lt.s32.totalorder %v60, 0
    %v169 = vand.u32 %v60, 2139095040
    %v170 = vshrl.u32 %v169, 23
    %v171 = vsub.s32 %v170, 127
    %v172 = vand.u32 2147483647, %v60
    %v173 = vand.u32 %v172, 8388607
    %v174 = vor.u32 %v173, 8388608
    %v175 = vsub.s32 0, %v174
    %v176 = vadd.s32 %v171, 1
    %vm177 = vcmp.gt.s32.totalorder %v176, 0
    %v178 = vsel %vm177, %v176, 0
    %v179 = vshrl.u32 %v178, 5
    %v180 = vand.u32 %v178, 31
    %v181 = vsub.s32 32, %v180
    %v182 = vshrl.u32 683565275, %v181
    %v183 = vshll.u32 683565275, %v180
    %v184 = vshrl.u32 2475754826, %v181
    %v185 = vor.u32 %v183, %v184
    %v186 = vshll.u32 2475754826, %v180
    %v187 = vshrl.u32 2131351028, %v181
    %v188 = vor.u32 %v186, %v187
    %v189 = vshll.u32 2131351028, %v180
    %v190 = vshrl.u32 2102212464, %v181
    %v191 = vor.u32 %v189, %v190
    %v192 = vshll.u32 2102212464, %v180
    %v193 = vshrl.u32 920167782, %v181
    %v194 = vor.u32 %v192, %v193
    %v195 = vshll.u32 920167782, %v180
    %v196 = vshrl.u32 1326507024, %v181
    %v197 = vor.u32 %v195, %v196
    %vm198 = vcmp.lt.s32.totalorder %v179, 1
    %vm199 = vcmp.lt.s32.totalorder %v179, 2
    %vm200 = vcmp.lt.s32.totalorder %v179, 3
    %vm201 = vcmp.lt.s32.totalorder %v179, 4
    %v202 = vsel %vm198, %v182, %v185
    %v203 = vsel %vm201, %v191, 2102212464
    %v204 = vsel %vm200, %v188, %v203
    %v205 = vsel %vm199, %v202, %v204
    %v206 = vsel %vm198, %v185, %v188
    %v207 = vsel %vm201, %v194, 920167782
    %v208 = vsel %vm200, %v191, %v207
    %v209 = vsel %vm199, %v206, %v208
    %v210 = vsel %vm198, %v188, %v191
    %v211 = vsel %vm201, %v197, 1326507024
    %v212 = vsel %vm200, %v194, %v211
    %v213 = vsel %vm199, %v210, %v212
    %v214 = vshll.u32 %v174, 8
    %v215 = vmul.u32.u64.compose %v214, %v213
    %v216 = vextract.low.u32 %v215
    %v217 = vextract.high.u32 %v215
    %v218 = vmul.u32.u64.compose %v214, %v209
    %v219 = vextract.low.u32 %v218
    %v220 = vextract.high.u32 %v218
    %v221 = vmul.u32 %v214, %v205
    %v222 = vadd.s32 %v217, %v219
    %vm223 = vc.u32 %v217, %v219
    %v224 = vadd.s32 %v220, 1
    %v225 = vsel %vm223, %v224, %v220
    %v226 = vadd.s32 %v221, %v225
    %v227 = vadd.s32 %v226, 536870912
    %v228 = vshrl.u32 %v227, 30
    %v229 = vshll.u32 %v228, 30
    %v230 = vsub.s32 %v226, %v229
    %vm231 = vcmp.lt.s32.totalorder %v230, 0
    %v232 = vsub.s32 0, %v230
    %v233 = vsel %vm231, %v232, %v230
    %v234 = vclz %v233
    %v235 = vsub.s32 %v234, 2
    %vm236 = vcmp.gt.s32.totalorder 0, %v235
    %v237 = vsel %vm236, 0, %v235
    %v238 = vsub.s32 32, %v237
    %v239 = vshll.u32 %v230, %v237
    %v240 = vshrl.u32 %v222, %v238
    %v241 = vor.u32 %v239, %v240
    %v242 = vsub.s32 4294967266, %v237
    %v243 = vadd.s32 %v242, 127
    %v244 = vshll.u32 %v243, 23
    %v245 = vor.u32 4788187, %v244
    %v246 = vand.u32 2147483647, %v245
    %v248 = vcvt.s32.f32 %v241
    %v249 = vmul.f32 %v248, %v246
    %v250 = vxor.u32 %v249, 2147483648
    %v251 = vsel %vm168, %v250, %v249
    %v252 = vsub.s32 4, %v228
    %v253 = vsel %vm168, %v252, %v228
    %v254 = vsel %vm167, %v60, %v251
    %v255 = vsel %vm167, 0, %v253
    %v256 = vcosq.f32.pop %v254
    %v257 = vsinq.f32.pop %v254
    %vm258 = vweird.f32 %v60
    %v259 = vand.u32 %v255, 3
    %vm260 = vcmp.lt.s32.totalorder %v259, 2
    %vm261 = vcmp.eq.s32.totalorder %v259, 0
    %v262 = vxor.u32 %v257, 2147483648
    %v263 = vsel %vm261, %v256, %v262
    %vm264 = vcmp.eq.s32.totalorder %v259, 2
    %v265 = vxor.u32 %v256, 2147483648
    %v266 = vsel %vm264, %v265, %v257
    %v267 = vsel %vm260, %v263, %v266
    %v268 = vsel %vm258, nan, %v267
    %v269 = vmul.f32 %v56, 0.16666667
    %v270 = vsub.f32 1.0, %v269
    %v271 = vmul.f32 %v165, %v59
    %v272 = vsel %vm57, %v270, %v271
    %v273 = vmul.f32 %v56, 0.041666668
    %v274 = vsub.f32 0.5, %v273
    %v275 = vsub.f32 1.0, %v268
    %v276 = vmul.f32 %v275, %v61
    %v277 = vsel %vm57, %v274, %v276
    %v278 = vmul.f32 %v56, 0.008333334
    %v279 = vsub.f32 0.16666667, %v278
    %v280 = vsub.f32 %v60, %v165
    %v281 = vmul.f32 %v61, %v59
    %v282 = vmul.f32 %v280, %v281
    %v283 = vsel %vm57, %v279, %v282
    %v284 = vmul.f32 %v272, %v52
    %v285 = vmul.f32 %v277, %v54
    %v286 = vmul.f32 %v283, %v54
    %v287 = vmul.f32 %v286, %v52
    %s288 = sld [smem:[#allocation7 + $0x1]]
    %s289 = sld [smem:[#allocation7 + $0x2]]
    %s290 = sld [smem:[#allocation7 + $0x3]]
    %s291 = sld [smem:[#allocation7 + $0x4]]
    %s292 = sld [smem:[#allocation7 + $0x5]]
    %s293 = sld [smem:[#allocation7 + $0x6]]
    %s294 = sld [smem:[#allocation7 + $0x7]]
    %s295 = sld [smem:[#allocation7 + $0x8]]
    %s296 = sld [smem:[#allocation7 + $0x9]]
    %v297 = vstv %s294
    %v298 = vmul.f32 %v285, %v297
    %v299 = vsub.f32 1.0, %v298
    %v300 = vstv %s291
    %v301 = vmul.f32 %v285, %v300
    %v302 = vstv %s290
    %v303 = vmul.f32 %v284, %v302
    %v304 = vsub.f32 %v301, %v303
    %v305 = vstv %s292
    %v306 = vmul.f32 %v285, %v305
    %v307 = vstv %s289
    %v308 = vmul.f32 %v284, %v307
    %v309 = vadd.f32 %v306, %v308
    %v310 = vadd.f32 %v301, %v303
    %v311 = vstv %s295
    %v312 = vmul.f32 %v285, %v311
    %v313 = vsub.f32 1.0, %v312
    %v314 = vstv %s293
    %v315 = vmul.f32 %v285, %v314
    %v316 = vstv %s288
    %v317 = vmul.f32 %v284, %v316
    %v318 = vsub.f32 %v315, %v317
    %v319 = vsub.f32 %v306, %v308
    %v320 = vadd.f32 %v315, %v317
    %v321 = vstv %s296
    %v322 = vmul.f32 %v285, %v321
    %v323 = vsub.f32 1.0, %v322
    %s324 = sld [smem:[#allocation7 + $0xa]]
    %v325 = vstv %s324
    %v326 = vmul.f32 %v52, %v325
    %s327 = sld [smem:[#allocation7 + $0xd]]
    %v328 = vstv %s327
    %v329 = vmul.f32 %v285, %v328
    %v330 = vadd.f32 %v326, %v329
    %s331 = sld [smem:[#allocation7 + $0x10]]
    %v332 = vstv %s331
    %v333 = vmul.f32 %v287, %v332
    %v334 = vadd.f32 %v330, %v333
    %s335 = sld [smem:[#allocation7 + $0xb]]
    %v336 = vstv %s335
    %v337 = vmul.f32 %v52, %v336
    %s338 = sld [smem:[#allocation7 + $0xe]]
    %v339 = vstv %s338
    %v340 = vmul.f32 %v285, %v339
    %v341 = vadd.f32 %v337, %v340
    %s342 = sld [smem:[#allocation7 + $0x11]]
    %v343 = vstv %s342
    %v344 = vmul.f32 %v287, %v343
    %v345 = vadd.f32 %v341, %v344
    %s346 = sld [smem:[#allocation7 + $0xc]]
    %v347 = vstv %s346
    %v348 = vmul.f32 %v52, %v347
    %s349 = sld [smem:[#allocation7 + $0xf]]
    %v350 = vstv %s349
    %v351 = vmul.f32 %v285, %v350
    %v352 = vadd.f32 %v348, %v351
    %s353 = sld [smem:[#allocation7 + $0x12]]
    %v354 = vstv %s353
    %v355 = vmul.f32 %v287, %v354
    %v356 = vadd.f32 %v352, %v355
    %s357 = scalar_lea.vmem [#allocation2], 8
    %v358 = vld [vmem:[%s357] sm:$0xff]
    %s359 = sld [smem:[#allocation7 + $0x80]]
    %v360 = vmul.f32 %v358, %v358
    %v361 = vstv %s359
    %v362 = vmul.f32 %v360, %v361
    %vm363 = vcmp.lt.f32.partialorder %v362, 1e-12
    %v364 = vsel %vm363, 1.0, %v362
    %v365 = vrsqrt.pop %v364
    %v366 = vmul.f32 %v364, %v365
    %v367 = vmul.f32 %v365, %v365
    %v368 = vand.u32 2147483647, %v366
    %vm369 = vcmp.le.f32.partialorder %v368, 0.7853982
    %vm370 = vcmp.lt.s32.totalorder %v366, 0
    %v371 = vand.u32 %v366, 2139095040
    %v372 = vshrl.u32 %v371, 23
    %v373 = vsub.s32 %v372, 127
    %v374 = vand.u32 2147483647, %v366
    %v375 = vand.u32 %v374, 8388607
    %v376 = vor.u32 %v375, 8388608
    %v377 = vsub.s32 0, %v376
    %v378 = vadd.s32 %v373, 1
    %vm379 = vcmp.gt.s32.totalorder %v378, 0
    %v380 = vsel %vm379, %v378, 0
    %v381 = vshrl.u32 %v380, 5
    %v382 = vand.u32 %v380, 31
    %v383 = vsub.s32 32, %v382
    %v384 = vshrl.u32 683565275, %v383
    %v385 = vshll.u32 683565275, %v382
    %v386 = vshrl.u32 2475754826, %v383
    %v387 = vor.u32 %v385, %v386
    %v388 = vshll.u32 2475754826, %v382
    %v389 = vshrl.u32 2131351028, %v383
    %v390 = vor.u32 %v388, %v389
    %v391 = vshll.u32 2131351028, %v382
    %v392 = vshrl.u32 2102212464, %v383
    %v393 = vor.u32 %v391, %v392
    %v394 = vshll.u32 2102212464, %v382
    %v395 = vshrl.u32 920167782, %v383
    %v396 = vor.u32 %v394, %v395
    %v397 = vshll.u32 920167782, %v382
    %v398 = vshrl.u32 1326507024, %v383
    %v399 = vor.u32 %v397, %v398
    %vm400 = vcmp.lt.s32.totalorder %v381, 1
    %vm401 = vcmp.lt.s32.totalorder %v381, 2
    %vm402 = vcmp.lt.s32.totalorder %v381, 3
    %vm403 = vcmp.lt.s32.totalorder %v381, 4
    %v404 = vsel %vm400, %v384, %v387
    %v405 = vsel %vm403, %v393, 2102212464
    %v406 = vsel %vm402, %v390, %v405
    %v407 = vsel %vm401, %v404, %v406
    %v408 = vsel %vm400, %v387, %v390
    %v409 = vsel %vm403, %v396, 920167782
    %v410 = vsel %vm402, %v393, %v409
    %v411 = vsel %vm401, %v408, %v410
    %v412 = vsel %vm400, %v390, %v393
    %v413 = vsel %vm403, %v399, 1326507024
    %v414 = vsel %vm402, %v396, %v413
    %v415 = vsel %vm401, %v412, %v414
    %v416 = vshll.u32 %v376, 8
    %v417 = vmul.u32.u64.compose %v416, %v415
    %v418 = vextract.low.u32 %v417
    %v419 = vextract.high.u32 %v417
    %v420 = vmul.u32.u64.compose %v416, %v411
    %v421 = vextract.low.u32 %v420
    %v422 = vextract.high.u32 %v420
    %v423 = vmul.u32 %v416, %v407
    %v424 = vadd.s32 %v419, %v421
    %vm425 = vc.u32 %v419, %v421
    %v426 = vadd.s32 %v422, 1
    %v427 = vsel %vm425, %v426, %v422
    %v428 = vadd.s32 %v423, %v427
    %v429 = vadd.s32 %v428, 536870912
    %v430 = vshrl.u32 %v429, 30
    %v431 = vshll.u32 %v430, 30
    %v432 = vsub.s32 %v428, %v431
    %vm433 = vcmp.lt.s32.totalorder %v432, 0
    %v434 = vsub.s32 0, %v432
    %v435 = vsel %vm433, %v434, %v432
    %v436 = vclz %v435
    %v437 = vsub.s32 %v436, 2
    %vm438 = vcmp.gt.s32.totalorder 0, %v437
    %v439 = vsel %vm438, 0, %v437
    %v440 = vsub.s32 32, %v439
    %v441 = vshll.u32 %v432, %v439
    %v442 = vshrl.u32 %v424, %v440
    %v443 = vor.u32 %v441, %v442
    %v444 = vsub.s32 4294967266, %v439
    %v445 = vadd.s32 %v444, 127
    %v446 = vshll.u32 %v445, 23
    %v447 = vor.u32 4788187, %v446
    %v448 = vand.u32 2147483647, %v447
    %v450 = vcvt.s32.f32 %v443
    %v451 = vmul.f32 %v450, %v448
    %v452 = vxor.u32 %v451, 2147483648
    %v453 = vsel %vm370, %v452, %v451
    %v454 = vsub.s32 4, %v430
    %v455 = vsel %vm370, %v454, %v430
    %v456 = vsel %vm369, %v366, %v453
    %v457 = vsel %vm369, 0, %v455
    %v458 = vcosq.f32.pop %v456
    %v459 = vsinq.f32.pop %v456
    %vm460 = vweird.f32 %v366
    %v461 = vadd.s32 %v457, 3
    %v462 = vand.u32 %v461, 3
    %vm463 = vcmp.lt.s32.totalorder %v462, 2
    %vm464 = vcmp.eq.s32.totalorder %v462, 0
    %v465 = vxor.u32 %v459, 2147483648
    %v466 = vsel %vm464, %v458, %v465
    %vm467 = vcmp.eq.s32.totalorder %v462, 2
    %v468 = vxor.u32 %v458, 2147483648
    %v469 = vsel %vm467, %v468, %v459
    %v470 = vsel %vm463, %v466, %v469
    %v471 = vsel %vm460, nan, %v470
    %v472 = vand.u32 2147483647, %v366
    %vm473 = vcmp.le.f32.partialorder %v472, 0.7853982
    %vm474 = vcmp.lt.s32.totalorder %v366, 0
    %v475 = vand.u32 %v366, 2139095040
    %v476 = vshrl.u32 %v475, 23
    %v477 = vsub.s32 %v476, 127
    %v478 = vand.u32 2147483647, %v366
    %v479 = vand.u32 %v478, 8388607
    %v480 = vor.u32 %v479, 8388608
    %v481 = vsub.s32 0, %v480
    %v482 = vadd.s32 %v477, 1
    %vm483 = vcmp.gt.s32.totalorder %v482, 0
    %v484 = vsel %vm483, %v482, 0
    %v485 = vshrl.u32 %v484, 5
    %v486 = vand.u32 %v484, 31
    %v487 = vsub.s32 32, %v486
    %v488 = vshrl.u32 683565275, %v487
    %v489 = vshll.u32 683565275, %v486
    %v490 = vshrl.u32 2475754826, %v487
    %v491 = vor.u32 %v489, %v490
    %v492 = vshll.u32 2475754826, %v486
    %v493 = vshrl.u32 2131351028, %v487
    %v494 = vor.u32 %v492, %v493
    %v495 = vshll.u32 2131351028, %v486
    %v496 = vshrl.u32 2102212464, %v487
    %v497 = vor.u32 %v495, %v496
    %v498 = vshll.u32 2102212464, %v486
    %v499 = vshrl.u32 920167782, %v487
    %v500 = vor.u32 %v498, %v499
    %v501 = vshll.u32 920167782, %v486
    %v502 = vshrl.u32 1326507024, %v487
    %v503 = vor.u32 %v501, %v502
    %vm504 = vcmp.lt.s32.totalorder %v485, 1
    %vm505 = vcmp.lt.s32.totalorder %v485, 2
    %vm506 = vcmp.lt.s32.totalorder %v485, 3
    %vm507 = vcmp.lt.s32.totalorder %v485, 4
    %v508 = vsel %vm504, %v488, %v491
    %v509 = vsel %vm507, %v497, 2102212464
    %v510 = vsel %vm506, %v494, %v509
    %v511 = vsel %vm505, %v508, %v510
    %v512 = vsel %vm504, %v491, %v494
    %v513 = vsel %vm507, %v500, 920167782
    %v514 = vsel %vm506, %v497, %v513
    %v515 = vsel %vm505, %v512, %v514
    %v516 = vsel %vm504, %v494, %v497
    %v517 = vsel %vm507, %v503, 1326507024
    %v518 = vsel %vm506, %v500, %v517
    %v519 = vsel %vm505, %v516, %v518
    %v520 = vshll.u32 %v480, 8
    %v521 = vmul.u32.u64.compose %v520, %v519
    %v522 = vextract.low.u32 %v521
    %v523 = vextract.high.u32 %v521
    %v524 = vmul.u32.u64.compose %v520, %v515
    %v525 = vextract.low.u32 %v524
    %v526 = vextract.high.u32 %v524
    %v527 = vmul.u32 %v520, %v511
    %v528 = vadd.s32 %v523, %v525
    %vm529 = vc.u32 %v523, %v525
    %v530 = vadd.s32 %v526, 1
    %v531 = vsel %vm529, %v530, %v526
    %v532 = vadd.s32 %v527, %v531
    %v533 = vadd.s32 %v532, 536870912
    %v534 = vshrl.u32 %v533, 30
    %v535 = vshll.u32 %v534, 30
    %v536 = vsub.s32 %v532, %v535
    %vm537 = vcmp.lt.s32.totalorder %v536, 0
    %v538 = vsub.s32 0, %v536
    %v539 = vsel %vm537, %v538, %v536
    %v540 = vclz %v539
    %v541 = vsub.s32 %v540, 2
    %vm542 = vcmp.gt.s32.totalorder 0, %v541
    %v543 = vsel %vm542, 0, %v541
    %v544 = vsub.s32 32, %v543
    %v545 = vshll.u32 %v536, %v543
    %v546 = vshrl.u32 %v528, %v544
    %v547 = vor.u32 %v545, %v546
    %v548 = vsub.s32 4294967266, %v543
    %v549 = vadd.s32 %v548, 127
    %v550 = vshll.u32 %v549, 23
    %v551 = vor.u32 4788187, %v550
    %v552 = vand.u32 2147483647, %v551
    %v554 = vcvt.s32.f32 %v547
    %v555 = vmul.f32 %v554, %v552
    %v556 = vxor.u32 %v555, 2147483648
    %v557 = vsel %vm474, %v556, %v555
    %v558 = vsub.s32 4, %v534
    %v559 = vsel %vm474, %v558, %v534
    %v560 = vsel %vm473, %v366, %v557
    %v561 = vsel %vm473, 0, %v559
    %v562 = vcosq.f32.pop %v560
    %v563 = vsinq.f32.pop %v560
    %vm564 = vweird.f32 %v366
    %v565 = vand.u32 %v561, 3
    %vm566 = vcmp.lt.s32.totalorder %v565, 2
    %vm567 = vcmp.eq.s32.totalorder %v565, 0
    %v568 = vxor.u32 %v563, 2147483648
    %v569 = vsel %vm567, %v562, %v568
    %vm570 = vcmp.eq.s32.totalorder %v565, 2
    %v571 = vxor.u32 %v562, 2147483648
    %v572 = vsel %vm570, %v571, %v563
    %v573 = vsel %vm566, %v569, %v572
    %v574 = vsel %vm564, nan, %v573
    %v575 = vmul.f32 %v362, 0.16666667
    %v576 = vsub.f32 1.0, %v575
    %v577 = vmul.f32 %v471, %v365
    %v578 = vsel %vm363, %v576, %v577
    %v579 = vmul.f32 %v362, 0.041666668
    %v580 = vsub.f32 0.5, %v579
    %v581 = vsub.f32 1.0, %v574
    %v582 = vmul.f32 %v581, %v367
    %v583 = vsel %vm363, %v580, %v582
    %v584 = vmul.f32 %v362, 0.008333334
    %v585 = vsub.f32 0.16666667, %v584
    %v586 = vsub.f32 %v366, %v471
    %v587 = vmul.f32 %v367, %v365
    %v588 = vmul.f32 %v586, %v587
    %v589 = vsel %vm363, %v585, %v588
    %v590 = vmul.f32 %v578, %v358
    %v591 = vmul.f32 %v583, %v360
    %v592 = vmul.f32 %v589, %v360
    %v593 = vmul.f32 %v592, %v358
    %s594 = sld [smem:[#allocation7 + $0x81]]
    %s595 = sld [smem:[#allocation7 + $0x82]]
    %s596 = sld [smem:[#allocation7 + $0x83]]
    %s597 = sld [smem:[#allocation7 + $0x84]]
    %s598 = sld [smem:[#allocation7 + $0x85]]
    %s599 = sld [smem:[#allocation7 + $0x86]]
    %s600 = sld [smem:[#allocation7 + $0x87]]
    %s601 = sld [smem:[#allocation7 + $0x88]]
    %s602 = sld [smem:[#allocation7 + $0x89]]
    %v603 = vstv %s600
    %v604 = vmul.f32 %v591, %v603
    %v605 = vsub.f32 1.0, %v604
    %v606 = vstv %s597
    %v607 = vmul.f32 %v591, %v606
    %v608 = vstv %s596
    %v609 = vmul.f32 %v590, %v608
    %v610 = vsub.f32 %v607, %v609
    %v611 = vstv %s598
    %v612 = vmul.f32 %v591, %v611
    %v613 = vstv %s595
    %v614 = vmul.f32 %v590, %v613
    %v615 = vadd.f32 %v612, %v614
    %v616 = vadd.f32 %v607, %v609
    %v617 = vstv %s601
    %v618 = vmul.f32 %v591, %v617
    %v619 = vsub.f32 1.0, %v618
    %v620 = vstv %s599
    %v621 = vmul.f32 %v591, %v620
    %v622 = vstv %s594
    %v623 = vmul.f32 %v590, %v622
    %v624 = vsub.f32 %v621, %v623
    %v625 = vsub.f32 %v612, %v614
    %v626 = vadd.f32 %v621, %v623
    %v627 = vstv %s602
    %v628 = vmul.f32 %v591, %v627
    %v629 = vsub.f32 1.0, %v628
    %s630 = sld [smem:[#allocation7 + $0x8a]]
    %v631 = vstv %s630
    %v632 = vmul.f32 %v358, %v631
    %s633 = sld [smem:[#allocation7 + $0x8d]]
    %v634 = vstv %s633
    %v635 = vmul.f32 %v591, %v634
    %v636 = vadd.f32 %v632, %v635
    %s637 = sld [smem:[#allocation7 + $0x90]]
    %v638 = vstv %s637
    %v639 = vmul.f32 %v593, %v638
    %v640 = vadd.f32 %v636, %v639
    %s641 = sld [smem:[#allocation7 + $0x8b]]
    %v642 = vstv %s641
    %v643 = vmul.f32 %v358, %v642
    %s644 = sld [smem:[#allocation7 + $0x8e]]
    %v645 = vstv %s644
    %v646 = vmul.f32 %v591, %v645
    %v647 = vadd.f32 %v643, %v646
    %s648 = sld [smem:[#allocation7 + $0x91]]
    %v649 = vstv %s648
    %v650 = vmul.f32 %v593, %v649
    %v651 = vadd.f32 %v647, %v650
    %s652 = sld [smem:[#allocation7 + $0x8c]]
    %v653 = vstv %s652
    %v654 = vmul.f32 %v358, %v653
    %s655 = sld [smem:[#allocation7 + $0x8f]]
    %v656 = vstv %s655
    %v657 = vmul.f32 %v591, %v656
    %v658 = vadd.f32 %v654, %v657
    %s659 = sld [smem:[#allocation7 + $0x92]]
    %v660 = vstv %s659
    %v661 = vmul.f32 %v593, %v660
    %v662 = vadd.f32 %v658, %v661
    %v663 = vmul.f32 %v299, %v605
    %v664 = vmul.f32 %v304, %v616
    %v665 = vadd.f32 %v663, %v664
    %v666 = vmul.f32 %v309, %v625
    %v667 = vadd.f32 %v665, %v666
    %v668 = vmul.f32 %v299, %v610
    %v669 = vmul.f32 %v304, %v619
    %v670 = vadd.f32 %v668, %v669
    %v671 = vmul.f32 %v309, %v626
    %v672 = vadd.f32 %v670, %v671
    %v673 = vmul.f32 %v299, %v615
    %v674 = vmul.f32 %v304, %v624
    %v675 = vadd.f32 %v673, %v674
    %v676 = vmul.f32 %v309, %v629
    %v677 = vadd.f32 %v675, %v676
    %v678 = vmul.f32 %v310, %v605
    %v679 = vmul.f32 %v313, %v616
    %v680 = vadd.f32 %v678, %v679
    %v681 = vmul.f32 %v318, %v625
    %v682 = vadd.f32 %v680, %v681
    %v683 = vmul.f32 %v310, %v610
    %v684 = vmul.f32 %v313, %v619
    %v685 = vadd.f32 %v683, %v684
    %v686 = vmul.f32 %v318, %v626
    %v687 = vadd.f32 %v685, %v686
    %v688 = vmul.f32 %v310, %v615
    %v689 = vmul.f32 %v313, %v624
    %v690 = vadd.f32 %v688, %v689
    %v691 = vmul.f32 %v318, %v629
    %v692 = vadd.f32 %v690, %v691
    %v693 = vmul.f32 %v319, %v605
    %v694 = vmul.f32 %v320, %v616
    %v695 = vadd.f32 %v693, %v694
    %v696 = vmul.f32 %v323, %v625
    %v697 = vadd.f32 %v695, %v696
    %v698 = vmul.f32 %v319, %v610
    %v699 = vmul.f32 %v320, %v619
    %v700 = vadd.f32 %v698, %v699
    %v701 = vmul.f32 %v323, %v626
    %v702 = vadd.f32 %v700, %v701
    %v703 = vmul.f32 %v319, %v615
    %v704 = vmul.f32 %v320, %v624
    %v705 = vadd.f32 %v703, %v704
    %v706 = vmul.f32 %v323, %v629
    %v707 = vadd.f32 %v705, %v706
    %v708 = vmul.f32 %v299, %v640
    %v709 = vmul.f32 %v304, %v651
    %v710 = vadd.f32 %v708, %v709
    %v711 = vmul.f32 %v309, %v662
    %v712 = vadd.f32 %v710, %v711
    %v713 = vadd.f32 %v712, %v334
    %v714 = vmul.f32 %v310, %v640
    %v715 = vmul.f32 %v313, %v651
    %v716 = vadd.f32 %v714, %v715
    %v717 = vmul.f32 %v318, %v662
    %v718 = vadd.f32 %v716, %v717
    %v719 = vadd.f32 %v718, %v345
    %v720 = vmul.f32 %v319, %v640
    %v721 = vmul.f32 %v320, %v651
    %v722 = vadd.f32 %v720, %v721
    %v723 = vmul.f32 %v323, %v662
    %v724 = vadd.f32 %v722, %v723
    %v725 = vadd.f32 %v724, %v356
    %s726 = scalar_lea.vmem [#allocation2], 16
    %v727 = vld [vmem:[%s726] sm:$0xff]
    %s728 = sld [smem:[#allocation7 + $0x100]]
    %v729 = vmul.f32 %v727, %v727
    %v730 = vstv %s728
    %v731 = vmul.f32 %v729, %v730
    %vm732 = vcmp.lt.f32.partialorder %v731, 1e-12
    %v733 = vsel %vm732, 1.0, %v731
    %v734 = vrsqrt.pop %v733
    %v735 = vmul.f32 %v733, %v734
    %v736 = vmul.f32 %v734, %v734
    %v737 = vand.u32 2147483647, %v735
    %vm738 = vcmp.le.f32.partialorder %v737, 0.7853982
    %vm739 = vcmp.lt.s32.totalorder %v735, 0
    %v740 = vand.u32 %v735, 2139095040
    %v741 = vshrl.u32 %v740, 23
    %v742 = vsub.s32 %v741, 127
    %v743 = vand.u32 2147483647, %v735
    %v744 = vand.u32 %v743, 8388607
    %v745 = vor.u32 %v744, 8388608
    %v746 = vsub.s32 0, %v745
    %v747 = vadd.s32 %v742, 1
    %vm748 = vcmp.gt.s32.totalorder %v747, 0
    %v749 = vsel %vm748, %v747, 0
    %v750 = vshrl.u32 %v749, 5
    %v751 = vand.u32 %v749, 31
    %v752 = vsub.s32 32, %v751
    %v753 = vshrl.u32 683565275, %v752
    %v754 = vshll.u32 683565275, %v751
    %v755 = vshrl.u32 2475754826, %v752
    %v756 = vor.u32 %v754, %v755
    %v757 = vshll.u32 2475754826, %v751
    %v758 = vshrl.u32 2131351028, %v752
    %v759 = vor.u32 %v757, %v758
    %v760 = vshll.u32 2131351028, %v751
    %v761 = vshrl.u32 2102212464, %v752
    %v762 = vor.u32 %v760, %v761
    %v763 = vshll.u32 2102212464, %v751
    %v764 = vshrl.u32 920167782, %v752
    %v765 = vor.u32 %v763, %v764
    %v766 = vshll.u32 920167782, %v751
    %v767 = vshrl.u32 1326507024, %v752
    %v768 = vor.u32 %v766, %v767
    %vm769 = vcmp.lt.s32.totalorder %v750, 1
    %vm770 = vcmp.lt.s32.totalorder %v750, 2
    %vm771 = vcmp.lt.s32.totalorder %v750, 3
    %vm772 = vcmp.lt.s32.totalorder %v750, 4
    %v773 = vsel %vm769, %v753, %v756
    %v774 = vsel %vm772, %v762, 2102212464
    %v775 = vsel %vm771, %v759, %v774
    %v776 = vsel %vm770, %v773, %v775
    %v777 = vsel %vm769, %v756, %v759
    %v778 = vsel %vm772, %v765, 920167782
    %v779 = vsel %vm771, %v762, %v778
    %v780 = vsel %vm770, %v777, %v779
    %v781 = vsel %vm769, %v759, %v762
    %v782 = vsel %vm772, %v768, 1326507024
    %v783 = vsel %vm771, %v765, %v782
    %v784 = vsel %vm770, %v781, %v783
    %v785 = vshll.u32 %v745, 8
    %v786 = vmul.u32.u64.compose %v785, %v784
    %v787 = vextract.low.u32 %v786
    %v788 = vextract.high.u32 %v786
    %v789 = vmul.u32.u64.compose %v785, %v780
    %v790 = vextract.low.u32 %v789
    %v791 = vextract.high.u32 %v789
    %v792 = vmul.u32 %v785, %v776
    %v793 = vadd.s32 %v788, %v790
    %vm794 = vc.u32 %v788, %v790
    %v795 = vadd.s32 %v791, 1
    %v796 = vsel %vm794, %v795, %v791
    %v797 = vadd.s32 %v792, %v796
    %v798 = vadd.s32 %v797, 536870912
    %v799 = vshrl.u32 %v798, 30
    %v800 = vshll.u32 %v799, 30
    %v801 = vsub.s32 %v797, %v800
    %vm802 = vcmp.lt.s32.totalorder %v801, 0
    %v803 = vsub.s32 0, %v801
    %v804 = vsel %vm802, %v803, %v801
    %v805 = vclz %v804
    %v806 = vsub.s32 %v805, 2
    %vm807 = vcmp.gt.s32.totalorder 0, %v806
    %v808 = vsel %vm807, 0, %v806
    %v809 = vsub.s32 32, %v808
    %v810 = vshll.u32 %v801, %v808
    %v811 = vshrl.u32 %v793, %v809
    %v812 = vor.u32 %v810, %v811
    %v813 = vsub.s32 4294967266, %v808
    %v814 = vadd.s32 %v813, 127
    %v815 = vshll.u32 %v814, 23
    %v816 = vor.u32 4788187, %v815
    %v817 = vand.u32 2147483647, %v816
    %v819 = vcvt.s32.f32 %v812
    %v820 = vmul.f32 %v819, %v817
    %v821 = vxor.u32 %v820, 2147483648
    %v822 = vsel %vm739, %v821, %v820
    %v823 = vsub.s32 4, %v799
    %v824 = vsel %vm739, %v823, %v799
    %v825 = vsel %vm738, %v735, %v822
    %v826 = vsel %vm738, 0, %v824
    %v827 = vcosq.f32.pop %v825
    %v828 = vsinq.f32.pop %v825
    %vm829 = vweird.f32 %v735
    %v830 = vadd.s32 %v826, 3
    %v831 = vand.u32 %v830, 3
    %vm832 = vcmp.lt.s32.totalorder %v831, 2
    %vm833 = vcmp.eq.s32.totalorder %v831, 0
    %v834 = vxor.u32 %v828, 2147483648
    %v835 = vsel %vm833, %v827, %v834
    %vm836 = vcmp.eq.s32.totalorder %v831, 2
    %v837 = vxor.u32 %v827, 2147483648
    %v838 = vsel %vm836, %v837, %v828
    %v839 = vsel %vm832, %v835, %v838
    %v840 = vsel %vm829, nan, %v839
    %v841 = vand.u32 2147483647, %v735
    %vm842 = vcmp.le.f32.partialorder %v841, 0.7853982
    %vm843 = vcmp.lt.s32.totalorder %v735, 0
    %v844 = vand.u32 %v735, 2139095040
    %v845 = vshrl.u32 %v844, 23
    %v846 = vsub.s32 %v845, 127
    %v847 = vand.u32 2147483647, %v735
    %v848 = vand.u32 %v847, 8388607
    %v849 = vor.u32 %v848, 8388608
    %v850 = vsub.s32 0, %v849
    %v851 = vadd.s32 %v846, 1
    %vm852 = vcmp.gt.s32.totalorder %v851, 0
    %v853 = vsel %vm852, %v851, 0
    %v854 = vshrl.u32 %v853, 5
    %v855 = vand.u32 %v853, 31
    %v856 = vsub.s32 32, %v855
    %v857 = vshrl.u32 683565275, %v856
    %v858 = vshll.u32 683565275, %v855
    %v859 = vshrl.u32 2475754826, %v856
    %v860 = vor.u32 %v858, %v859
    %v861 = vshll.u32 2475754826, %v855
    %v862 = vshrl.u32 2131351028, %v856
    %v863 = vor.u32 %v861, %v862
    %v864 = vshll.u32 2131351028, %v855
    %v865 = vshrl.u32 2102212464, %v856
    %v866 = vor.u32 %v864, %v865
    %v867 = vshll.u32 2102212464, %v855
    %v868 = vshrl.u32 920167782, %v856
    %v869 = vor.u32 %v867, %v868
    %v870 = vshll.u32 920167782, %v855
    %v871 = vshrl.u32 1326507024, %v856
    %v872 = vor.u32 %v870, %v871
    %vm873 = vcmp.lt.s32.totalorder %v854, 1
    %vm874 = vcmp.lt.s32.totalorder %v854, 2
    %vm875 = vcmp.lt.s32.totalorder %v854, 3
    %vm876 = vcmp.lt.s32.totalorder %v854, 4
    %v877 = vsel %vm873, %v857, %v860
    %v878 = vsel %vm876, %v866, 2102212464
    %v879 = vsel %vm875, %v863, %v878
    %v880 = vsel %vm874, %v877, %v879
    %v881 = vsel %vm873, %v860, %v863
    %v882 = vsel %vm876, %v869, 920167782
    %v883 = vsel %vm875, %v866, %v882
    %v884 = vsel %vm874, %v881, %v883
    %v885 = vsel %vm873, %v863, %v866
    %v886 = vsel %vm876, %v872, 1326507024
    %v887 = vsel %vm875, %v869, %v886
    %v888 = vsel %vm874, %v885, %v887
    %v889 = vshll.u32 %v849, 8
    %v890 = vmul.u32.u64.compose %v889, %v888
    %v891 = vextract.low.u32 %v890
    %v892 = vextract.high.u32 %v890
    %v893 = vmul.u32.u64.compose %v889, %v884
    %v894 = vextract.low.u32 %v893
    %v895 = vextract.high.u32 %v893
    %v896 = vmul.u32 %v889, %v880
    %v897 = vadd.s32 %v892, %v894
    %vm898 = vc.u32 %v892, %v894
    %v899 = vadd.s32 %v895, 1
    %v900 = vsel %vm898, %v899, %v895
    %v901 = vadd.s32 %v896, %v900
    %v902 = vadd.s32 %v901, 536870912
    %v903 = vshrl.u32 %v902, 30
    %v904 = vshll.u32 %v903, 30
    %v905 = vsub.s32 %v901, %v904
    %vm906 = vcmp.lt.s32.totalorder %v905, 0
    %v907 = vsub.s32 0, %v905
    %v908 = vsel %vm906, %v907, %v905
    %v909 = vclz %v908
    %v910 = vsub.s32 %v909, 2
    %vm911 = vcmp.gt.s32.totalorder 0, %v910
    %v912 = vsel %vm911, 0, %v910
    %v913 = vsub.s32 32, %v912
    %v914 = vshll.u32 %v905, %v912
    %v915 = vshrl.u32 %v897, %v913
    %v916 = vor.u32 %v914, %v915
    %v917 = vsub.s32 4294967266, %v912
    %v918 = vadd.s32 %v917, 127
    %v919 = vshll.u32 %v918, 23
    %v920 = vor.u32 4788187, %v919
    %v921 = vand.u32 2147483647, %v920
    %v923 = vcvt.s32.f32 %v916
    %v924 = vmul.f32 %v923, %v921
    %v925 = vxor.u32 %v924, 2147483648
    %v926 = vsel %vm843, %v925, %v924
    %v927 = vsub.s32 4, %v903
    %v928 = vsel %vm843, %v927, %v903
    %v929 = vsel %vm842, %v735, %v926
    %v930 = vsel %vm842, 0, %v928
    %v931 = vcosq.f32.pop %v929
    %v932 = vsinq.f32.pop %v929
    %vm933 = vweird.f32 %v735
    %v934 = vand.u32 %v930, 3
    %vm935 = vcmp.lt.s32.totalorder %v934, 2
    %vm936 = vcmp.eq.s32.totalorder %v934, 0
    %v937 = vxor.u32 %v932, 2147483648
    %v938 = vsel %vm936, %v931, %v937
    %vm939 = vcmp.eq.s32.totalorder %v934, 2
    %v940 = vxor.u32 %v931, 2147483648
    %v941 = vsel %vm939, %v940, %v932
    %v942 = vsel %vm935, %v938, %v941
    %v943 = vsel %vm933, nan, %v942
    %v944 = vmul.f32 %v731, 0.16666667
    %v945 = vsub.f32 1.0, %v944
    %v946 = vmul.f32 %v840, %v734
    %v947 = vsel %vm732, %v945, %v946
    %v948 = vmul.f32 %v731, 0.041666668
    %v949 = vsub.f32 0.5, %v948
    %v950 = vsub.f32 1.0, %v943
    %v951 = vmul.f32 %v950, %v736
    %v952 = vsel %vm732, %v949, %v951
    %v953 = vmul.f32 %v731, 0.008333334
    %v954 = vsub.f32 0.16666667, %v953
    %v955 = vsub.f32 %v735, %v840
    %v956 = vmul.f32 %v736, %v734
    %v957 = vmul.f32 %v955, %v956
    %v958 = vsel %vm732, %v954, %v957
    %v959 = vmul.f32 %v947, %v727
    %v960 = vmul.f32 %v952, %v729
    %v961 = vmul.f32 %v958, %v729
    %v962 = vmul.f32 %v961, %v727
    %s963 = sld [smem:[#allocation7 + $0x101]]
    %s964 = sld [smem:[#allocation7 + $0x102]]
    %s965 = sld [smem:[#allocation7 + $0x103]]
    %s966 = sld [smem:[#allocation7 + $0x104]]
    %s967 = sld [smem:[#allocation7 + $0x105]]
    %s968 = sld [smem:[#allocation7 + $0x106]]
    %s969 = sld [smem:[#allocation7 + $0x107]]
    %s970 = sld [smem:[#allocation7 + $0x108]]
    %s971 = sld [smem:[#allocation7 + $0x109]]
    %v972 = vstv %s969
    %v973 = vmul.f32 %v960, %v972
    %v974 = vsub.f32 1.0, %v973
    %v975 = vstv %s966
    %v976 = vmul.f32 %v960, %v975
    %v977 = vstv %s965
    %v978 = vmul.f32 %v959, %v977
    %v979 = vsub.f32 %v976, %v978
    %v980 = vstv %s967
    %v981 = vmul.f32 %v960, %v980
    %v982 = vstv %s964
    %v983 = vmul.f32 %v959, %v982
    %v984 = vadd.f32 %v981, %v983
    %v985 = vadd.f32 %v976, %v978
    %v986 = vstv %s970
    %v987 = vmul.f32 %v960, %v986
    %v988 = vsub.f32 1.0, %v987
    %v989 = vstv %s968
    %v990 = vmul.f32 %v960, %v989
    %v991 = vstv %s963
    %v992 = vmul.f32 %v959, %v991
    %v993 = vsub.f32 %v990, %v992
    %v994 = vsub.f32 %v981, %v983
    %v995 = vadd.f32 %v990, %v992
    %v996 = vstv %s971
    %v997 = vmul.f32 %v960, %v996
    %v998 = vsub.f32 1.0, %v997
    %s999 = sld [smem:[#allocation7 + $0x10a]]
    %v1000 = vstv %s999
    %v1001 = vmul.f32 %v727, %v1000
    %s1002 = sld [smem:[#allocation7 + $0x10d]]
    %v1003 = vstv %s1002
    %v1004 = vmul.f32 %v960, %v1003
    %v1005 = vadd.f32 %v1001, %v1004
    %s1006 = sld [smem:[#allocation7 + $0x110]]
    %v1007 = vstv %s1006
    %v1008 = vmul.f32 %v962, %v1007
    %v1009 = vadd.f32 %v1005, %v1008
    %s1010 = sld [smem:[#allocation7 + $0x10b]]
    %v1011 = vstv %s1010
    %v1012 = vmul.f32 %v727, %v1011
    %s1013 = sld [smem:[#allocation7 + $0x10e]]
    %v1014 = vstv %s1013
    %v1015 = vmul.f32 %v960, %v1014
    %v1016 = vadd.f32 %v1012, %v1015
    %s1017 = sld [smem:[#allocation7 + $0x111]]
    %v1018 = vstv %s1017
    %v1019 = vmul.f32 %v962, %v1018
    %v1020 = vadd.f32 %v1016, %v1019
    %s1021 = sld [smem:[#allocation7 + $0x10c]]
    %v1022 = vstv %s1021
    %v1023 = vmul.f32 %v727, %v1022
    %s1024 = sld [smem:[#allocation7 + $0x10f]]
    %v1025 = vstv %s1024
    %v1026 = vmul.f32 %v960, %v1025
    %v1027 = vadd.f32 %v1023, %v1026
    %s1028 = sld [smem:[#allocation7 + $0x112]]
    %v1029 = vstv %s1028
    %v1030 = vmul.f32 %v962, %v1029
    %v1031 = vadd.f32 %v1027, %v1030
    %v1032 = vmul.f32 %v667, %v974
    %v1033 = vmul.f32 %v672, %v985
    %v1034 = vadd.f32 %v1032, %v1033
    %v1035 = vmul.f32 %v677, %v994
    %v1036 = vadd.f32 %v1034, %v1035
    %v1037 = vmul.f32 %v667, %v979
    %v1038 = vmul.f32 %v672, %v988
    %v1039 = vadd.f32 %v1037, %v1038
    %v1040 = vmul.f32 %v677, %v995
    %v1041 = vadd.f32 %v1039, %v1040
    %v1042 = vmul.f32 %v667, %v984
    %v1043 = vmul.f32 %v672, %v993
    %v1044 = vadd.f32 %v1042, %v1043
    %v1045 = vmul.f32 %v677, %v998
    %v1046 = vadd.f32 %v1044, %v1045
    %v1047 = vmul.f32 %v682, %v974
    %v1048 = vmul.f32 %v687, %v985
    %v1049 = vadd.f32 %v1047, %v1048
    %v1050 = vmul.f32 %v692, %v994
    %v1051 = vadd.f32 %v1049, %v1050
    %v1052 = vmul.f32 %v682, %v979
    %v1053 = vmul.f32 %v687, %v988
    %v1054 = vadd.f32 %v1052, %v1053
    %v1055 = vmul.f32 %v692, %v995
    %v1056 = vadd.f32 %v1054, %v1055
    %v1057 = vmul.f32 %v682, %v984
    %v1058 = vmul.f32 %v687, %v993
    %v1059 = vadd.f32 %v1057, %v1058
    %v1060 = vmul.f32 %v692, %v998
    %v1061 = vadd.f32 %v1059, %v1060
    %v1062 = vmul.f32 %v697, %v974
    %v1063 = vmul.f32 %v702, %v985
    %v1064 = vadd.f32 %v1062, %v1063
    %v1065 = vmul.f32 %v707, %v994
    %v1066 = vadd.f32 %v1064, %v1065
    %v1067 = vmul.f32 %v697, %v979
    %v1068 = vmul.f32 %v702, %v988
    %v1069 = vadd.f32 %v1067, %v1068
    %v1070 = vmul.f32 %v707, %v995
    %v1071 = vadd.f32 %v1069, %v1070
    %v1072 = vmul.f32 %v697, %v984
    %v1073 = vmul.f32 %v702, %v993
    %v1074 = vadd.f32 %v1072, %v1073
    %v1075 = vmul.f32 %v707, %v998
    %v1076 = vadd.f32 %v1074, %v1075
    %v1077 = vmul.f32 %v667, %v1009
    %v1078 = vmul.f32 %v672, %v1020
    %v1079 = vadd.f32 %v1077, %v1078
    %v1080 = vmul.f32 %v677, %v1031
    %v1081 = vadd.f32 %v1079, %v1080
    %v1082 = vadd.f32 %v1081, %v713
    %v1083 = vmul.f32 %v682, %v1009
    %v1084 = vmul.f32 %v687, %v1020
    %v1085 = vadd.f32 %v1083, %v1084
    %v1086 = vmul.f32 %v692, %v1031
    %v1087 = vadd.f32 %v1085, %v1086
    %v1088 = vadd.f32 %v1087, %v719
    %v1089 = vmul.f32 %v697, %v1009
    %v1090 = vmul.f32 %v702, %v1020
    %v1091 = vadd.f32 %v1089, %v1090
    %v1092 = vmul.f32 %v707, %v1031
    %v1093 = vadd.f32 %v1091, %v1092
    %v1094 = vadd.f32 %v1093, %v725
    %s1095 = scalar_lea.vmem [#allocation2], 24
    %v1096 = vld [vmem:[%s1095] sm:$0xff]
    %s1097 = sld [smem:[#allocation7 + $0x180]]
    %v1098 = vmul.f32 %v1096, %v1096
    %v1099 = vstv %s1097
    %v1100 = vmul.f32 %v1098, %v1099
    %vm1101 = vcmp.lt.f32.partialorder %v1100, 1e-12
    %v1102 = vsel %vm1101, 1.0, %v1100
    %v1103 = vrsqrt.pop %v1102
    %v1104 = vmul.f32 %v1102, %v1103
    %v1105 = vmul.f32 %v1103, %v1103
    %v1106 = vand.u32 2147483647, %v1104
    %vm1107 = vcmp.le.f32.partialorder %v1106, 0.7853982
    %vm1108 = vcmp.lt.s32.totalorder %v1104, 0
    %v1109 = vand.u32 %v1104, 2139095040
    %v1110 = vshrl.u32 %v1109, 23
    %v1111 = vsub.s32 %v1110, 127
    %v1112 = vand.u32 2147483647, %v1104
    %v1113 = vand.u32 %v1112, 8388607
    %v1114 = vor.u32 %v1113, 8388608
    %v1115 = vsub.s32 0, %v1114
    %v1116 = vadd.s32 %v1111, 1
    %vm1117 = vcmp.gt.s32.totalorder %v1116, 0
    %v1118 = vsel %vm1117, %v1116, 0
    %v1119 = vshrl.u32 %v1118, 5
    %v1120 = vand.u32 %v1118, 31
    %v1121 = vsub.s32 32, %v1120
    %v1122 = vshrl.u32 683565275, %v1121
    %v1123 = vshll.u32 683565275, %v1120
    %v1124 = vshrl.u32 2475754826, %v1121
    %v1125 = vor.u32 %v1123, %v1124
    %v1126 = vshll.u32 2475754826, %v1120
    %v1127 = vshrl.u32 2131351028, %v1121
    %v1128 = vor.u32 %v1126, %v1127
    %v1129 = vshll.u32 2131351028, %v1120
    %v1130 = vshrl.u32 2102212464, %v1121
    %v1131 = vor.u32 %v1129, %v1130
    %v1132 = vshll.u32 2102212464, %v1120
    %v1133 = vshrl.u32 920167782, %v1121
    %v1134 = vor.u32 %v1132, %v1133
    %v1135 = vshll.u32 920167782, %v1120
    %v1136 = vshrl.u32 1326507024, %v1121
    %v1137 = vor.u32 %v1135, %v1136
    %vm1138 = vcmp.lt.s32.totalorder %v1119, 1
    %vm1139 = vcmp.lt.s32.totalorder %v1119, 2
    %vm1140 = vcmp.lt.s32.totalorder %v1119, 3
    %vm1141 = vcmp.lt.s32.totalorder %v1119, 4
    %v1142 = vsel %vm1138, %v1122, %v1125
    %v1143 = vsel %vm1141, %v1131, 2102212464
    %v1144 = vsel %vm1140, %v1128, %v1143
    %v1145 = vsel %vm1139, %v1142, %v1144
    %v1146 = vsel %vm1138, %v1125, %v1128
    %v1147 = vsel %vm1141, %v1134, 920167782
    %v1148 = vsel %vm1140, %v1131, %v1147
    %v1149 = vsel %vm1139, %v1146, %v1148
    %v1150 = vsel %vm1138, %v1128, %v1131
    %v1151 = vsel %vm1141, %v1137, 1326507024
    %v1152 = vsel %vm1140, %v1134, %v1151
    %v1153 = vsel %vm1139, %v1150, %v1152
    %v1154 = vshll.u32 %v1114, 8
    %v1155 = vmul.u32.u64.compose %v1154, %v1153
    %v1156 = vextract.low.u32 %v1155
    %v1157 = vextract.high.u32 %v1155
    %v1158 = vmul.u32.u64.compose %v1154, %v1149
    %v1159 = vextract.low.u32 %v1158
    %v1160 = vextract.high.u32 %v1158
    %v1161 = vmul.u32 %v1154, %v1145
    %v1162 = vadd.s32 %v1157, %v1159
    %vm1163 = vc.u32 %v1157, %v1159
    %v1164 = vadd.s32 %v1160, 1
    %v1165 = vsel %vm1163, %v1164, %v1160
    %v1166 = vadd.s32 %v1161, %v1165
    %v1167 = vadd.s32 %v1166, 536870912
    %v1168 = vshrl.u32 %v1167, 30
    %v1169 = vshll.u32 %v1168, 30
    %v1170 = vsub.s32 %v1166, %v1169
    %vm1171 = vcmp.lt.s32.totalorder %v1170, 0
    %v1172 = vsub.s32 0, %v1170
    %v1173 = vsel %vm1171, %v1172, %v1170
    %v1174 = vclz %v1173
    %v1175 = vsub.s32 %v1174, 2
    %vm1176 = vcmp.gt.s32.totalorder 0, %v1175
    %v1177 = vsel %vm1176, 0, %v1175
    %v1178 = vsub.s32 32, %v1177
    %v1179 = vshll.u32 %v1170, %v1177
    %v1180 = vshrl.u32 %v1162, %v1178
    %v1181 = vor.u32 %v1179, %v1180
    %v1182 = vsub.s32 4294967266, %v1177
    %v1183 = vadd.s32 %v1182, 127
    %v1184 = vshll.u32 %v1183, 23
    %v1185 = vor.u32 4788187, %v1184
    %v1186 = vand.u32 2147483647, %v1185
    %v1188 = vcvt.s32.f32 %v1181
    %v1189 = vmul.f32 %v1188, %v1186
    %v1190 = vxor.u32 %v1189, 2147483648
    %v1191 = vsel %vm1108, %v1190, %v1189
    %v1192 = vsub.s32 4, %v1168
    %v1193 = vsel %vm1108, %v1192, %v1168
    %v1194 = vsel %vm1107, %v1104, %v1191
    %v1195 = vsel %vm1107, 0, %v1193
    %v1196 = vcosq.f32.pop %v1194
    %v1197 = vsinq.f32.pop %v1194
    %vm1198 = vweird.f32 %v1104
    %v1199 = vadd.s32 %v1195, 3
    %v1200 = vand.u32 %v1199, 3
    %vm1201 = vcmp.lt.s32.totalorder %v1200, 2
    %vm1202 = vcmp.eq.s32.totalorder %v1200, 0
    %v1203 = vxor.u32 %v1197, 2147483648
    %v1204 = vsel %vm1202, %v1196, %v1203
    %vm1205 = vcmp.eq.s32.totalorder %v1200, 2
    %v1206 = vxor.u32 %v1196, 2147483648
    %v1207 = vsel %vm1205, %v1206, %v1197
    %v1208 = vsel %vm1201, %v1204, %v1207
    %v1209 = vsel %vm1198, nan, %v1208
    %v1210 = vand.u32 2147483647, %v1104
    %vm1211 = vcmp.le.f32.partialorder %v1210, 0.7853982
    %vm1212 = vcmp.lt.s32.totalorder %v1104, 0
    %v1213 = vand.u32 %v1104, 2139095040
    %v1214 = vshrl.u32 %v1213, 23
    %v1215 = vsub.s32 %v1214, 127
    %v1216 = vand.u32 2147483647, %v1104
    %v1217 = vand.u32 %v1216, 8388607
    %v1218 = vor.u32 %v1217, 8388608
    %v1219 = vsub.s32 0, %v1218
    %v1220 = vadd.s32 %v1215, 1
    %vm1221 = vcmp.gt.s32.totalorder %v1220, 0
    %v1222 = vsel %vm1221, %v1220, 0
    %v1223 = vshrl.u32 %v1222, 5
    %v1224 = vand.u32 %v1222, 31
    %v1225 = vsub.s32 32, %v1224
    %v1226 = vshrl.u32 683565275, %v1225
    %v1227 = vshll.u32 683565275, %v1224
    %v1228 = vshrl.u32 2475754826, %v1225
    %v1229 = vor.u32 %v1227, %v1228
    %v1230 = vshll.u32 2475754826, %v1224
    %v1231 = vshrl.u32 2131351028, %v1225
    %v1232 = vor.u32 %v1230, %v1231
    %v1233 = vshll.u32 2131351028, %v1224
    %v1234 = vshrl.u32 2102212464, %v1225
    %v1235 = vor.u32 %v1233, %v1234
    %v1236 = vshll.u32 2102212464, %v1224
    %v1237 = vshrl.u32 920167782, %v1225
    %v1238 = vor.u32 %v1236, %v1237
    %v1239 = vshll.u32 920167782, %v1224
    %v1240 = vshrl.u32 1326507024, %v1225
    %v1241 = vor.u32 %v1239, %v1240
    %vm1242 = vcmp.lt.s32.totalorder %v1223, 1
    %vm1243 = vcmp.lt.s32.totalorder %v1223, 2
    %vm1244 = vcmp.lt.s32.totalorder %v1223, 3
    %vm1245 = vcmp.lt.s32.totalorder %v1223, 4
    %v1246 = vsel %vm1242, %v1226, %v1229
    %v1247 = vsel %vm1245, %v1235, 2102212464
    %v1248 = vsel %vm1244, %v1232, %v1247
    %v1249 = vsel %vm1243, %v1246, %v1248
    %v1250 = vsel %vm1242, %v1229, %v1232
    %v1251 = vsel %vm1245, %v1238, 920167782
    %v1252 = vsel %vm1244, %v1235, %v1251
    %v1253 = vsel %vm1243, %v1250, %v1252
    %v1254 = vsel %vm1242, %v1232, %v1235
    %v1255 = vsel %vm1245, %v1241, 1326507024
    %v1256 = vsel %vm1244, %v1238, %v1255
    %v1257 = vsel %vm1243, %v1254, %v1256
    %v1258 = vshll.u32 %v1218, 8
    %v1259 = vmul.u32.u64.compose %v1258, %v1257
    %v1260 = vextract.low.u32 %v1259
    %v1261 = vextract.high.u32 %v1259
    %v1262 = vmul.u32.u64.compose %v1258, %v1253
    %v1263 = vextract.low.u32 %v1262
    %v1264 = vextract.high.u32 %v1262
    %v1265 = vmul.u32 %v1258, %v1249
    %v1266 = vadd.s32 %v1261, %v1263
    %vm1267 = vc.u32 %v1261, %v1263
    %v1268 = vadd.s32 %v1264, 1
    %v1269 = vsel %vm1267, %v1268, %v1264
    %v1270 = vadd.s32 %v1265, %v1269
    %v1271 = vadd.s32 %v1270, 536870912
    %v1272 = vshrl.u32 %v1271, 30
    %v1273 = vshll.u32 %v1272, 30
    %v1274 = vsub.s32 %v1270, %v1273
    %vm1275 = vcmp.lt.s32.totalorder %v1274, 0
    %v1276 = vsub.s32 0, %v1274
    %v1277 = vsel %vm1275, %v1276, %v1274
    %v1278 = vclz %v1277
    %v1279 = vsub.s32 %v1278, 2
    %vm1280 = vcmp.gt.s32.totalorder 0, %v1279
    %v1281 = vsel %vm1280, 0, %v1279
    %v1282 = vsub.s32 32, %v1281
    %v1283 = vshll.u32 %v1274, %v1281
    %v1284 = vshrl.u32 %v1266, %v1282
    %v1285 = vor.u32 %v1283, %v1284
    %v1286 = vsub.s32 4294967266, %v1281
    %v1287 = vadd.s32 %v1286, 127
    %v1288 = vshll.u32 %v1287, 23
    %v1289 = vor.u32 4788187, %v1288
    %v1290 = vand.u32 2147483647, %v1289
    %v1292 = vcvt.s32.f32 %v1285
    %v1293 = vmul.f32 %v1292, %v1290
    %v1294 = vxor.u32 %v1293, 2147483648
    %v1295 = vsel %vm1212, %v1294, %v1293
    %v1296 = vsub.s32 4, %v1272
    %v1297 = vsel %vm1212, %v1296, %v1272
    %v1298 = vsel %vm1211, %v1104, %v1295
    %v1299 = vsel %vm1211, 0, %v1297
    %v1300 = vcosq.f32.pop %v1298
    %v1301 = vsinq.f32.pop %v1298
    %vm1302 = vweird.f32 %v1104
    %v1303 = vand.u32 %v1299, 3
    %vm1304 = vcmp.lt.s32.totalorder %v1303, 2
    %vm1305 = vcmp.eq.s32.totalorder %v1303, 0
    %v1306 = vxor.u32 %v1301, 2147483648
    %v1307 = vsel %vm1305, %v1300, %v1306
    %vm1308 = vcmp.eq.s32.totalorder %v1303, 2
    %v1309 = vxor.u32 %v1300, 2147483648
    %v1310 = vsel %vm1308, %v1309, %v1301
    %v1311 = vsel %vm1304, %v1307, %v1310
    %v1312 = vsel %vm1302, nan, %v1311
    %v1313 = vmul.f32 %v1100, 0.16666667
    %v1314 = vsub.f32 1.0, %v1313
    %v1315 = vmul.f32 %v1209, %v1103
    %v1316 = vsel %vm1101, %v1314, %v1315
    %v1317 = vmul.f32 %v1100, 0.041666668
    %v1318 = vsub.f32 0.5, %v1317
    %v1319 = vsub.f32 1.0, %v1312
    %v1320 = vmul.f32 %v1319, %v1105
    %v1321 = vsel %vm1101, %v1318, %v1320
    %v1322 = vmul.f32 %v1100, 0.008333334
    %v1323 = vsub.f32 0.16666667, %v1322
    %v1324 = vsub.f32 %v1104, %v1209
    %v1325 = vmul.f32 %v1105, %v1103
    %v1326 = vmul.f32 %v1324, %v1325
    %v1327 = vsel %vm1101, %v1323, %v1326
    %v1328 = vmul.f32 %v1316, %v1096
    %v1329 = vmul.f32 %v1321, %v1098
    %v1330 = vmul.f32 %v1327, %v1098
    %v1331 = vmul.f32 %v1330, %v1096
    %s1332 = sld [smem:[#allocation7 + $0x181]]
    %s1333 = sld [smem:[#allocation7 + $0x182]]
    %s1334 = sld [smem:[#allocation7 + $0x183]]
    %s1335 = sld [smem:[#allocation7 + $0x184]]
    %s1336 = sld [smem:[#allocation7 + $0x185]]
    %s1337 = sld [smem:[#allocation7 + $0x186]]
    %s1338 = sld [smem:[#allocation7 + $0x187]]
    %s1339 = sld [smem:[#allocation7 + $0x188]]
    %s1340 = sld [smem:[#allocation7 + $0x189]]
    %v1341 = vstv %s1338
    %v1342 = vmul.f32 %v1329, %v1341
    %v1343 = vsub.f32 1.0, %v1342
    %v1344 = vstv %s1335
    %v1345 = vmul.f32 %v1329, %v1344
    %v1346 = vstv %s1334
    %v1347 = vmul.f32 %v1328, %v1346
    %v1348 = vsub.f32 %v1345, %v1347
    %v1349 = vstv %s1336
    %v1350 = vmul.f32 %v1329, %v1349
    %v1351 = vstv %s1333
    %v1352 = vmul.f32 %v1328, %v1351
    %v1353 = vadd.f32 %v1350, %v1352
    %v1354 = vadd.f32 %v1345, %v1347
    %v1355 = vstv %s1339
    %v1356 = vmul.f32 %v1329, %v1355
    %v1357 = vsub.f32 1.0, %v1356
    %v1358 = vstv %s1337
    %v1359 = vmul.f32 %v1329, %v1358
    %v1360 = vstv %s1332
    %v1361 = vmul.f32 %v1328, %v1360
    %v1362 = vsub.f32 %v1359, %v1361
    %v1363 = vsub.f32 %v1350, %v1352
    %v1364 = vadd.f32 %v1359, %v1361
    %v1365 = vstv %s1340
    %v1366 = vmul.f32 %v1329, %v1365
    %v1367 = vsub.f32 1.0, %v1366
    %s1368 = sld [smem:[#allocation7 + $0x18a]]
    %v1369 = vstv %s1368
    %v1370 = vmul.f32 %v1096, %v1369
    %s1371 = sld [smem:[#allocation7 + $0x18d]]
    %v1372 = vstv %s1371
    %v1373 = vmul.f32 %v1329, %v1372
    %v1374 = vadd.f32 %v1370, %v1373
    %s1375 = sld [smem:[#allocation7 + $0x190]]
    %v1376 = vstv %s1375
    %v1377 = vmul.f32 %v1331, %v1376
    %v1378 = vadd.f32 %v1374, %v1377
    %s1379 = sld [smem:[#allocation7 + $0x18b]]
    %v1380 = vstv %s1379
    %v1381 = vmul.f32 %v1096, %v1380
    %s1382 = sld [smem:[#allocation7 + $0x18e]]
    %v1383 = vstv %s1382
    %v1384 = vmul.f32 %v1329, %v1383
    %v1385 = vadd.f32 %v1381, %v1384
    %s1386 = sld [smem:[#allocation7 + $0x191]]
    %v1387 = vstv %s1386
    %v1388 = vmul.f32 %v1331, %v1387
    %v1389 = vadd.f32 %v1385, %v1388
    %s1390 = sld [smem:[#allocation7 + $0x18c]]
    %v1391 = vstv %s1390
    %v1392 = vmul.f32 %v1096, %v1391
    %s1393 = sld [smem:[#allocation7 + $0x18f]]
    %v1394 = vstv %s1393
    %v1395 = vmul.f32 %v1329, %v1394
    %v1396 = vadd.f32 %v1392, %v1395
    %s1397 = sld [smem:[#allocation7 + $0x192]]
    %v1398 = vstv %s1397
    %v1399 = vmul.f32 %v1331, %v1398
    %v1400 = vadd.f32 %v1396, %v1399
    %v1401 = vmul.f32 %v1036, %v1343
    %v1402 = vmul.f32 %v1041, %v1354
    %v1403 = vadd.f32 %v1401, %v1402
    %v1404 = vmul.f32 %v1046, %v1363
    %v1405 = vadd.f32 %v1403, %v1404
    %v1406 = vmul.f32 %v1036, %v1348
    %v1407 = vmul.f32 %v1041, %v1357
    %v1408 = vadd.f32 %v1406, %v1407
    %v1409 = vmul.f32 %v1046, %v1364
    %v1410 = vadd.f32 %v1408, %v1409
    %v1411 = vmul.f32 %v1036, %v1353
    %v1412 = vmul.f32 %v1041, %v1362
    %v1413 = vadd.f32 %v1411, %v1412
    %v1414 = vmul.f32 %v1046, %v1367
    %v1415 = vadd.f32 %v1413, %v1414
    %v1416 = vmul.f32 %v1051, %v1343
    %v1417 = vmul.f32 %v1056, %v1354
    %v1418 = vadd.f32 %v1416, %v1417
    %v1419 = vmul.f32 %v1061, %v1363
    %v1420 = vadd.f32 %v1418, %v1419
    %v1421 = vmul.f32 %v1051, %v1348
    %v1422 = vmul.f32 %v1056, %v1357
    %v1423 = vadd.f32 %v1421, %v1422
    %v1424 = vmul.f32 %v1061, %v1364
    %v1425 = vadd.f32 %v1423, %v1424
    %v1426 = vmul.f32 %v1051, %v1353
    %v1427 = vmul.f32 %v1056, %v1362
    %v1428 = vadd.f32 %v1426, %v1427
    %v1429 = vmul.f32 %v1061, %v1367
    %v1430 = vadd.f32 %v1428, %v1429
    %v1431 = vmul.f32 %v1066, %v1343
    %v1432 = vmul.f32 %v1071, %v1354
    %v1433 = vadd.f32 %v1431, %v1432
    %v1434 = vmul.f32 %v1076, %v1363
    %v1435 = vadd.f32 %v1433, %v1434
    %v1436 = vmul.f32 %v1066, %v1348
    %v1437 = vmul.f32 %v1071, %v1357
    %v1438 = vadd.f32 %v1436, %v1437
    %v1439 = vmul.f32 %v1076, %v1364
    %v1440 = vadd.f32 %v1438, %v1439
    %v1441 = vmul.f32 %v1066, %v1353
    %v1442 = vmul.f32 %v1071, %v1362
    %v1443 = vadd.f32 %v1441, %v1442
    %v1444 = vmul.f32 %v1076, %v1367
    %v1445 = vadd.f32 %v1443, %v1444
    %v1446 = vmul.f32 %v1036, %v1378
    %v1447 = vmul.f32 %v1041, %v1389
    %v1448 = vadd.f32 %v1446, %v1447
    %v1449 = vmul.f32 %v1046, %v1400
    %v1450 = vadd.f32 %v1448, %v1449
    %v1451 = vadd.f32 %v1450, %v1082
    %v1452 = vmul.f32 %v1051, %v1378
    %v1453 = vmul.f32 %v1056, %v1389
    %v1454 = vadd.f32 %v1452, %v1453
    %v1455 = vmul.f32 %v1061, %v1400
    %v1456 = vadd.f32 %v1454, %v1455
    %v1457 = vadd.f32 %v1456, %v1088
    %v1458 = vmul.f32 %v1066, %v1378
    %v1459 = vmul.f32 %v1071, %v1389
    %v1460 = vadd.f32 %v1458, %v1459
    %v1461 = vmul.f32 %v1076, %v1400
    %v1462 = vadd.f32 %v1460, %v1461
    %v1463 = vadd.f32 %v1462, %v1094
    %s1464 = scalar_lea.vmem [#allocation2], 32
    %v1465 = vld [vmem:[%s1464] sm:$0xff]
    %s1466 = sld [smem:[#allocation7 + $0x200]]
    %v1467 = vmul.f32 %v1465, %v1465
    %v1468 = vstv %s1466
    %v1469 = vmul.f32 %v1467, %v1468
    %vm1470 = vcmp.lt.f32.partialorder %v1469, 1e-12
    %v1471 = vsel %vm1470, 1.0, %v1469
    %v1472 = vrsqrt.pop %v1471
    %v1473 = vmul.f32 %v1471, %v1472
    %v1474 = vmul.f32 %v1472, %v1472
    %v1475 = vand.u32 2147483647, %v1473
    %vm1476 = vcmp.le.f32.partialorder %v1475, 0.7853982
    %vm1477 = vcmp.lt.s32.totalorder %v1473, 0
    %v1478 = vand.u32 %v1473, 2139095040
    %v1479 = vshrl.u32 %v1478, 23
    %v1480 = vsub.s32 %v1479, 127
    %v1481 = vand.u32 2147483647, %v1473
    %v1482 = vand.u32 %v1481, 8388607
    %v1483 = vor.u32 %v1482, 8388608
    %v1484 = vsub.s32 0, %v1483
    %v1485 = vadd.s32 %v1480, 1
    %vm1486 = vcmp.gt.s32.totalorder %v1485, 0
    %v1487 = vsel %vm1486, %v1485, 0
    %v1488 = vshrl.u32 %v1487, 5
    %v1489 = vand.u32 %v1487, 31
    %v1490 = vsub.s32 32, %v1489
    %v1491 = vshrl.u32 683565275, %v1490
    %v1492 = vshll.u32 683565275, %v1489
    %v1493 = vshrl.u32 2475754826, %v1490
    %v1494 = vor.u32 %v1492, %v1493
    %v1495 = vshll.u32 2475754826, %v1489
    %v1496 = vshrl.u32 2131351028, %v1490
    %v1497 = vor.u32 %v1495, %v1496
    %v1498 = vshll.u32 2131351028, %v1489
    %v1499 = vshrl.u32 2102212464, %v1490
    %v1500 = vor.u32 %v1498, %v1499
    %v1501 = vshll.u32 2102212464, %v1489
    %v1502 = vshrl.u32 920167782, %v1490
    %v1503 = vor.u32 %v1501, %v1502
    %v1504 = vshll.u32 920167782, %v1489
    %v1505 = vshrl.u32 1326507024, %v1490
    %v1506 = vor.u32 %v1504, %v1505
    %vm1507 = vcmp.lt.s32.totalorder %v1488, 1
    %vm1508 = vcmp.lt.s32.totalorder %v1488, 2
    %vm1509 = vcmp.lt.s32.totalorder %v1488, 3
    %vm1510 = vcmp.lt.s32.totalorder %v1488, 4
    %v1511 = vsel %vm1507, %v1491, %v1494
    %v1512 = vsel %vm1510, %v1500, 2102212464
    %v1513 = vsel %vm1509, %v1497, %v1512
    %v1514 = vsel %vm1508, %v1511, %v1513
    %v1515 = vsel %vm1507, %v1494, %v1497
    %v1516 = vsel %vm1510, %v1503, 920167782
    %v1517 = vsel %vm1509, %v1500, %v1516
    %v1518 = vsel %vm1508, %v1515, %v1517
    %v1519 = vsel %vm1507, %v1497, %v1500
    %v1520 = vsel %vm1510, %v1506, 1326507024
    %v1521 = vsel %vm1509, %v1503, %v1520
    %v1522 = vsel %vm1508, %v1519, %v1521
    %v1523 = vshll.u32 %v1483, 8
    %v1524 = vmul.u32.u64.compose %v1523, %v1522
    %v1525 = vextract.low.u32 %v1524
    %v1526 = vextract.high.u32 %v1524
    %v1527 = vmul.u32.u64.compose %v1523, %v1518
    %v1528 = vextract.low.u32 %v1527
    %v1529 = vextract.high.u32 %v1527
    %v1530 = vmul.u32 %v1523, %v1514
    %v1531 = vadd.s32 %v1526, %v1528
    %vm1532 = vc.u32 %v1526, %v1528
    %v1533 = vadd.s32 %v1529, 1
    %v1534 = vsel %vm1532, %v1533, %v1529
    %v1535 = vadd.s32 %v1530, %v1534
    %v1536 = vadd.s32 %v1535, 536870912
    %v1537 = vshrl.u32 %v1536, 30
    %v1538 = vshll.u32 %v1537, 30
    %v1539 = vsub.s32 %v1535, %v1538
    %vm1540 = vcmp.lt.s32.totalorder %v1539, 0
    %v1541 = vsub.s32 0, %v1539
    %v1542 = vsel %vm1540, %v1541, %v1539
    %v1543 = vclz %v1542
    %v1544 = vsub.s32 %v1543, 2
    %vm1545 = vcmp.gt.s32.totalorder 0, %v1544
    %v1546 = vsel %vm1545, 0, %v1544
    %v1547 = vsub.s32 32, %v1546
    %v1548 = vshll.u32 %v1539, %v1546
    %v1549 = vshrl.u32 %v1531, %v1547
    %v1550 = vor.u32 %v1548, %v1549
    %v1551 = vsub.s32 4294967266, %v1546
    %v1552 = vadd.s32 %v1551, 127
    %v1553 = vshll.u32 %v1552, 23
    %v1554 = vor.u32 4788187, %v1553
    %v1555 = vand.u32 2147483647, %v1554
    %v1557 = vcvt.s32.f32 %v1550
    %v1558 = vmul.f32 %v1557, %v1555
    %v1559 = vxor.u32 %v1558, 2147483648
    %v1560 = vsel %vm1477, %v1559, %v1558
    %v1561 = vsub.s32 4, %v1537
    %v1562 = vsel %vm1477, %v1561, %v1537
    %v1563 = vsel %vm1476, %v1473, %v1560
    %v1564 = vsel %vm1476, 0, %v1562
    %v1565 = vcosq.f32.pop %v1563
    %v1566 = vsinq.f32.pop %v1563
    %vm1567 = vweird.f32 %v1473
    %v1568 = vadd.s32 %v1564, 3
    %v1569 = vand.u32 %v1568, 3
    %vm1570 = vcmp.lt.s32.totalorder %v1569, 2
    %vm1571 = vcmp.eq.s32.totalorder %v1569, 0
    %v1572 = vxor.u32 %v1566, 2147483648
    %v1573 = vsel %vm1571, %v1565, %v1572
    %vm1574 = vcmp.eq.s32.totalorder %v1569, 2
    %v1575 = vxor.u32 %v1565, 2147483648
    %v1576 = vsel %vm1574, %v1575, %v1566
    %v1577 = vsel %vm1570, %v1573, %v1576
    %v1578 = vsel %vm1567, nan, %v1577
    %v1579 = vand.u32 2147483647, %v1473
    %vm1580 = vcmp.le.f32.partialorder %v1579, 0.7853982
    %vm1581 = vcmp.lt.s32.totalorder %v1473, 0
    %v1582 = vand.u32 %v1473, 2139095040
    %v1583 = vshrl.u32 %v1582, 23
    %v1584 = vsub.s32 %v1583, 127
    %v1585 = vand.u32 2147483647, %v1473
    %v1586 = vand.u32 %v1585, 8388607
    %v1587 = vor.u32 %v1586, 8388608
    %v1588 = vsub.s32 0, %v1587
    %v1589 = vadd.s32 %v1584, 1
    %vm1590 = vcmp.gt.s32.totalorder %v1589, 0
    %v1591 = vsel %vm1590, %v1589, 0
    %v1592 = vshrl.u32 %v1591, 5
    %v1593 = vand.u32 %v1591, 31
    %v1594 = vsub.s32 32, %v1593
    %v1595 = vshrl.u32 683565275, %v1594
    %v1596 = vshll.u32 683565275, %v1593
    %v1597 = vshrl.u32 2475754826, %v1594
    %v1598 = vor.u32 %v1596, %v1597
    %v1599 = vshll.u32 2475754826, %v1593
    %v1600 = vshrl.u32 2131351028, %v1594
    %v1601 = vor.u32 %v1599, %v1600
    %v1602 = vshll.u32 2131351028, %v1593
    %v1603 = vshrl.u32 2102212464, %v1594
    %v1604 = vor.u32 %v1602, %v1603
    %v1605 = vshll.u32 2102212464, %v1593
    %v1606 = vshrl.u32 920167782, %v1594
    %v1607 = vor.u32 %v1605, %v1606
    %v1608 = vshll.u32 920167782, %v1593
    %v1609 = vshrl.u32 1326507024, %v1594
    %v1610 = vor.u32 %v1608, %v1609
    %vm1611 = vcmp.lt.s32.totalorder %v1592, 1
    %vm1612 = vcmp.lt.s32.totalorder %v1592, 2
    %vm1613 = vcmp.lt.s32.totalorder %v1592, 3
    %vm1614 = vcmp.lt.s32.totalorder %v1592, 4
    %v1615 = vsel %vm1611, %v1595, %v1598
    %v1616 = vsel %vm1614, %v1604, 2102212464
    %v1617 = vsel %vm1613, %v1601, %v1616
    %v1618 = vsel %vm1612, %v1615, %v1617
    %v1619 = vsel %vm1611, %v1598, %v1601
    %v1620 = vsel %vm1614, %v1607, 920167782
    %v1621 = vsel %vm1613, %v1604, %v1620
    %v1622 = vsel %vm1612, %v1619, %v1621
    %v1623 = vsel %vm1611, %v1601, %v1604
    %v1624 = vsel %vm1614, %v1610, 1326507024
    %v1625 = vsel %vm1613, %v1607, %v1624
    %v1626 = vsel %vm1612, %v1623, %v1625
    %v1627 = vshll.u32 %v1587, 8
    %v1628 = vmul.u32.u64.compose %v1627, %v1626
    %v1629 = vextract.low.u32 %v1628
    %v1630 = vextract.high.u32 %v1628
    %v1631 = vmul.u32.u64.compose %v1627, %v1622
    %v1632 = vextract.low.u32 %v1631
    %v1633 = vextract.high.u32 %v1631
    %v1634 = vmul.u32 %v1627, %v1618
    %v1635 = vadd.s32 %v1630, %v1632
    %vm1636 = vc.u32 %v1630, %v1632
    %v1637 = vadd.s32 %v1633, 1
    %v1638 = vsel %vm1636, %v1637, %v1633
    %v1639 = vadd.s32 %v1634, %v1638
    %v1640 = vadd.s32 %v1639, 536870912
    %v1641 = vshrl.u32 %v1640, 30
    %v1642 = vshll.u32 %v1641, 30
    %v1643 = vsub.s32 %v1639, %v1642
    %vm1644 = vcmp.lt.s32.totalorder %v1643, 0
    %v1645 = vsub.s32 0, %v1643
    %v1646 = vsel %vm1644, %v1645, %v1643
    %v1647 = vclz %v1646
    %v1648 = vsub.s32 %v1647, 2
    %vm1649 = vcmp.gt.s32.totalorder 0, %v1648
    %v1650 = vsel %vm1649, 0, %v1648
    %v1651 = vsub.s32 32, %v1650
    %v1652 = vshll.u32 %v1643, %v1650
    %v1653 = vshrl.u32 %v1635, %v1651
    %v1654 = vor.u32 %v1652, %v1653
    %v1655 = vsub.s32 4294967266, %v1650
    %v1656 = vadd.s32 %v1655, 127
    %v1657 = vshll.u32 %v1656, 23
    %v1658 = vor.u32 4788187, %v1657
    %v1659 = vand.u32 2147483647, %v1658
    %v1661 = vcvt.s32.f32 %v1654
    %v1662 = vmul.f32 %v1661, %v1659
    %v1663 = vxor.u32 %v1662, 2147483648
    %v1664 = vsel %vm1581, %v1663, %v1662
    %v1665 = vsub.s32 4, %v1641
    %v1666 = vsel %vm1581, %v1665, %v1641
    %v1667 = vsel %vm1580, %v1473, %v1664
    %v1668 = vsel %vm1580, 0, %v1666
    %v1669 = vcosq.f32.pop %v1667
    %v1670 = vsinq.f32.pop %v1667
    %vm1671 = vweird.f32 %v1473
    %v1672 = vand.u32 %v1668, 3
    %vm1673 = vcmp.lt.s32.totalorder %v1672, 2
    %vm1674 = vcmp.eq.s32.totalorder %v1672, 0
    %v1675 = vxor.u32 %v1670, 2147483648
    %v1676 = vsel %vm1674, %v1669, %v1675
    %vm1677 = vcmp.eq.s32.totalorder %v1672, 2
    %v1678 = vxor.u32 %v1669, 2147483648
    %v1679 = vsel %vm1677, %v1678, %v1670
    %v1680 = vsel %vm1673, %v1676, %v1679
    %v1681 = vsel %vm1671, nan, %v1680
    %v1682 = vmul.f32 %v1469, 0.16666667
    %v1683 = vsub.f32 1.0, %v1682
    %v1684 = vmul.f32 %v1578, %v1472
    %v1685 = vsel %vm1470, %v1683, %v1684
    %v1686 = vmul.f32 %v1469, 0.041666668
    %v1687 = vsub.f32 0.5, %v1686
    %v1688 = vsub.f32 1.0, %v1681
    %v1689 = vmul.f32 %v1688, %v1474
    %v1690 = vsel %vm1470, %v1687, %v1689
    %v1691 = vmul.f32 %v1469, 0.008333334
    %v1692 = vsub.f32 0.16666667, %v1691
    %v1693 = vsub.f32 %v1473, %v1578
    %v1694 = vmul.f32 %v1474, %v1472
    %v1695 = vmul.f32 %v1693, %v1694
    %v1696 = vsel %vm1470, %v1692, %v1695
    %v1697 = vmul.f32 %v1685, %v1465
    %v1698 = vmul.f32 %v1690, %v1467
    %v1699 = vmul.f32 %v1696, %v1467
    %v1700 = vmul.f32 %v1699, %v1465
    %s1701 = sld [smem:[#allocation7 + $0x201]]
    %s1702 = sld [smem:[#allocation7 + $0x202]]
    %s1703 = sld [smem:[#allocation7 + $0x203]]
    %s1704 = sld [smem:[#allocation7 + $0x204]]
    %s1705 = sld [smem:[#allocation7 + $0x205]]
    %s1706 = sld [smem:[#allocation7 + $0x206]]
    %s1707 = sld [smem:[#allocation7 + $0x207]]
    %s1708 = sld [smem:[#allocation7 + $0x208]]
    %s1709 = sld [smem:[#allocation7 + $0x209]]
    %v1710 = vstv %s1707
    %v1711 = vmul.f32 %v1698, %v1710
    %v1712 = vsub.f32 1.0, %v1711
    %v1713 = vstv %s1704
    %v1714 = vmul.f32 %v1698, %v1713
    %v1715 = vstv %s1703
    %v1716 = vmul.f32 %v1697, %v1715
    %v1717 = vsub.f32 %v1714, %v1716
    %v1718 = vstv %s1705
    %v1719 = vmul.f32 %v1698, %v1718
    %v1720 = vstv %s1702
    %v1721 = vmul.f32 %v1697, %v1720
    %v1722 = vadd.f32 %v1719, %v1721
    %v1723 = vadd.f32 %v1714, %v1716
    %v1724 = vstv %s1708
    %v1725 = vmul.f32 %v1698, %v1724
    %v1726 = vsub.f32 1.0, %v1725
    %v1727 = vstv %s1706
    %v1728 = vmul.f32 %v1698, %v1727
    %v1729 = vstv %s1701
    %v1730 = vmul.f32 %v1697, %v1729
    %v1731 = vsub.f32 %v1728, %v1730
    %v1732 = vsub.f32 %v1719, %v1721
    %v1733 = vadd.f32 %v1728, %v1730
    %v1734 = vstv %s1709
    %v1735 = vmul.f32 %v1698, %v1734
    %v1736 = vsub.f32 1.0, %v1735
    %s1737 = sld [smem:[#allocation7 + $0x20a]]
    %v1738 = vstv %s1737
    %v1739 = vmul.f32 %v1465, %v1738
    %s1740 = sld [smem:[#allocation7 + $0x20d]]
    %v1741 = vstv %s1740
    %v1742 = vmul.f32 %v1698, %v1741
    %v1743 = vadd.f32 %v1739, %v1742
    %s1744 = sld [smem:[#allocation7 + $0x210]]
    %v1745 = vstv %s1744
    %v1746 = vmul.f32 %v1700, %v1745
    %v1747 = vadd.f32 %v1743, %v1746
    %s1748 = sld [smem:[#allocation7 + $0x20b]]
    %v1749 = vstv %s1748
    %v1750 = vmul.f32 %v1465, %v1749
    %s1751 = sld [smem:[#allocation7 + $0x20e]]
    %v1752 = vstv %s1751
    %v1753 = vmul.f32 %v1698, %v1752
    %v1754 = vadd.f32 %v1750, %v1753
    %s1755 = sld [smem:[#allocation7 + $0x211]]
    %v1756 = vstv %s1755
    %v1757 = vmul.f32 %v1700, %v1756
    %v1758 = vadd.f32 %v1754, %v1757
    %s1759 = sld [smem:[#allocation7 + $0x20c]]
    %v1760 = vstv %s1759
    %v1761 = vmul.f32 %v1465, %v1760
    %s1762 = sld [smem:[#allocation7 + $0x20f]]
    %v1763 = vstv %s1762
    %v1764 = vmul.f32 %v1698, %v1763
    %v1765 = vadd.f32 %v1761, %v1764
    %s1766 = sld [smem:[#allocation7 + $0x212]]
    %v1767 = vstv %s1766
    %v1768 = vmul.f32 %v1700, %v1767
    %v1769 = vadd.f32 %v1765, %v1768
    %v1770 = vmul.f32 %v1405, %v1712
    %v1771 = vmul.f32 %v1410, %v1723
    %v1772 = vadd.f32 %v1770, %v1771
    %v1773 = vmul.f32 %v1415, %v1732
    %v1774 = vadd.f32 %v1772, %v1773
    %v1775 = vmul.f32 %v1405, %v1717
    %v1776 = vmul.f32 %v1410, %v1726
    %v1777 = vadd.f32 %v1775, %v1776
    %v1778 = vmul.f32 %v1415, %v1733
    %v1779 = vadd.f32 %v1777, %v1778
    %v1780 = vmul.f32 %v1405, %v1722
    %v1781 = vmul.f32 %v1410, %v1731
    %v1782 = vadd.f32 %v1780, %v1781
    %v1783 = vmul.f32 %v1415, %v1736
    %v1784 = vadd.f32 %v1782, %v1783
    %v1785 = vmul.f32 %v1420, %v1712
    %v1786 = vmul.f32 %v1425, %v1723
    %v1787 = vadd.f32 %v1785, %v1786
    %v1788 = vmul.f32 %v1430, %v1732
    %v1789 = vadd.f32 %v1787, %v1788
    %v1790 = vmul.f32 %v1420, %v1717
    %v1791 = vmul.f32 %v1425, %v1726
    %v1792 = vadd.f32 %v1790, %v1791
    %v1793 = vmul.f32 %v1430, %v1733
    %v1794 = vadd.f32 %v1792, %v1793
    %v1795 = vmul.f32 %v1420, %v1722
    %v1796 = vmul.f32 %v1425, %v1731
    %v1797 = vadd.f32 %v1795, %v1796
    %v1798 = vmul.f32 %v1430, %v1736
    %v1799 = vadd.f32 %v1797, %v1798
    %v1800 = vmul.f32 %v1435, %v1712
    %v1801 = vmul.f32 %v1440, %v1723
    %v1802 = vadd.f32 %v1800, %v1801
    %v1803 = vmul.f32 %v1445, %v1732
    %v1804 = vadd.f32 %v1802, %v1803
    %v1805 = vmul.f32 %v1435, %v1717
    %v1806 = vmul.f32 %v1440, %v1726
    %v1807 = vadd.f32 %v1805, %v1806
    %v1808 = vmul.f32 %v1445, %v1733
    %v1809 = vadd.f32 %v1807, %v1808
    %v1810 = vmul.f32 %v1435, %v1722
    %v1811 = vmul.f32 %v1440, %v1731
    %v1812 = vadd.f32 %v1810, %v1811
    %v1813 = vmul.f32 %v1445, %v1736
    %v1814 = vadd.f32 %v1812, %v1813
    %v1815 = vmul.f32 %v1405, %v1747
    %v1816 = vmul.f32 %v1410, %v1758
    %v1817 = vadd.f32 %v1815, %v1816
    %v1818 = vmul.f32 %v1415, %v1769
    %v1819 = vadd.f32 %v1817, %v1818
    %v1820 = vadd.f32 %v1819, %v1451
    %v1821 = vmul.f32 %v1420, %v1747
    %v1822 = vmul.f32 %v1425, %v1758
    %v1823 = vadd.f32 %v1821, %v1822
    %v1824 = vmul.f32 %v1430, %v1769
    %v1825 = vadd.f32 %v1823, %v1824
    %v1826 = vadd.f32 %v1825, %v1457
    %v1827 = vmul.f32 %v1435, %v1747
    %v1828 = vmul.f32 %v1440, %v1758
    %v1829 = vadd.f32 %v1827, %v1828
    %v1830 = vmul.f32 %v1445, %v1769
    %v1831 = vadd.f32 %v1829, %v1830
    %v1832 = vadd.f32 %v1831, %v1463
    %s1833 = scalar_lea.vmem [#allocation2], 40
    %v1834 = vld [vmem:[%s1833] sm:$0xff]
    %s1835 = sld [smem:[#allocation7 + $0x280]]
    %v1836 = vmul.f32 %v1834, %v1834
    %v1837 = vstv %s1835
    %v1838 = vmul.f32 %v1836, %v1837
    %vm1839 = vcmp.lt.f32.partialorder %v1838, 1e-12
    %v1840 = vsel %vm1839, 1.0, %v1838
    %v1841 = vrsqrt.pop %v1840
    %v1842 = vmul.f32 %v1840, %v1841
    %v1843 = vmul.f32 %v1841, %v1841
    %v1844 = vand.u32 2147483647, %v1842
    %vm1845 = vcmp.le.f32.partialorder %v1844, 0.7853982
    %vm1846 = vcmp.lt.s32.totalorder %v1842, 0
    %v1847 = vand.u32 %v1842, 2139095040
    %v1848 = vshrl.u32 %v1847, 23
    %v1849 = vsub.s32 %v1848, 127
    %v1850 = vand.u32 2147483647, %v1842
    %v1851 = vand.u32 %v1850, 8388607
    %v1852 = vor.u32 %v1851, 8388608
    %v1853 = vsub.s32 0, %v1852
    %v1854 = vadd.s32 %v1849, 1
    %vm1855 = vcmp.gt.s32.totalorder %v1854, 0
    %v1856 = vsel %vm1855, %v1854, 0
    %v1857 = vshrl.u32 %v1856, 5
    %v1858 = vand.u32 %v1856, 31
    %v1859 = vsub.s32 32, %v1858
    %v1860 = vshrl.u32 683565275, %v1859
    %v1861 = vshll.u32 683565275, %v1858
    %v1862 = vshrl.u32 2475754826, %v1859
    %v1863 = vor.u32 %v1861, %v1862
    %v1864 = vshll.u32 2475754826, %v1858
    %v1865 = vshrl.u32 2131351028, %v1859
    %v1866 = vor.u32 %v1864, %v1865
    %v1867 = vshll.u32 2131351028, %v1858
    %v1868 = vshrl.u32 2102212464, %v1859
    %v1869 = vor.u32 %v1867, %v1868
    %v1870 = vshll.u32 2102212464, %v1858
    %v1871 = vshrl.u32 920167782, %v1859
    %v1872 = vor.u32 %v1870, %v1871
    %v1873 = vshll.u32 920167782, %v1858
    %v1874 = vshrl.u32 1326507024, %v1859
    %v1875 = vor.u32 %v1873, %v1874
    %vm1876 = vcmp.lt.s32.totalorder %v1857, 1
    %vm1877 = vcmp.lt.s32.totalorder %v1857, 2
    %vm1878 = vcmp.lt.s32.totalorder %v1857, 3
    %vm1879 = vcmp.lt.s32.totalorder %v1857, 4
    %v1880 = vsel %vm1876, %v1860, %v1863
    %v1881 = vsel %vm1879, %v1869, 2102212464
    %v1882 = vsel %vm1878, %v1866, %v1881
    %v1883 = vsel %vm1877, %v1880, %v1882
    %v1884 = vsel %vm1876, %v1863, %v1866
    %v1885 = vsel %vm1879, %v1872, 920167782
    %v1886 = vsel %vm1878, %v1869, %v1885
    %v1887 = vsel %vm1877, %v1884, %v1886
    %v1888 = vsel %vm1876, %v1866, %v1869
    %v1889 = vsel %vm1879, %v1875, 1326507024
    %v1890 = vsel %vm1878, %v1872, %v1889
    %v1891 = vsel %vm1877, %v1888, %v1890
    %v1892 = vshll.u32 %v1852, 8
    %v1893 = vmul.u32.u64.compose %v1892, %v1891
    %v1894 = vextract.low.u32 %v1893
    %v1895 = vextract.high.u32 %v1893
    %v1896 = vmul.u32.u64.compose %v1892, %v1887
    %v1897 = vextract.low.u32 %v1896
    %v1898 = vextract.high.u32 %v1896
    %v1899 = vmul.u32 %v1892, %v1883
    %v1900 = vadd.s32 %v1895, %v1897
    %vm1901 = vc.u32 %v1895, %v1897
    %v1902 = vadd.s32 %v1898, 1
    %v1903 = vsel %vm1901, %v1902, %v1898
    %v1904 = vadd.s32 %v1899, %v1903
    %v1905 = vadd.s32 %v1904, 536870912
    %v1906 = vshrl.u32 %v1905, 30
    %v1907 = vshll.u32 %v1906, 30
    %v1908 = vsub.s32 %v1904, %v1907
    %vm1909 = vcmp.lt.s32.totalorder %v1908, 0
    %v1910 = vsub.s32 0, %v1908
    %v1911 = vsel %vm1909, %v1910, %v1908
    %v1912 = vclz %v1911
    %v1913 = vsub.s32 %v1912, 2
    %vm1914 = vcmp.gt.s32.totalorder 0, %v1913
    %v1915 = vsel %vm1914, 0, %v1913
    %v1916 = vsub.s32 32, %v1915
    %v1917 = vshll.u32 %v1908, %v1915
    %v1918 = vshrl.u32 %v1900, %v1916
    %v1919 = vor.u32 %v1917, %v1918
    %v1920 = vsub.s32 4294967266, %v1915
    %v1921 = vadd.s32 %v1920, 127
    %v1922 = vshll.u32 %v1921, 23
    %v1923 = vor.u32 4788187, %v1922
    %v1924 = vand.u32 2147483647, %v1923
    %v1926 = vcvt.s32.f32 %v1919
    %v1927 = vmul.f32 %v1926, %v1924
    %v1928 = vxor.u32 %v1927, 2147483648
    %v1929 = vsel %vm1846, %v1928, %v1927
    %v1930 = vsub.s32 4, %v1906
    %v1931 = vsel %vm1846, %v1930, %v1906
    %v1932 = vsel %vm1845, %v1842, %v1929
    %v1933 = vsel %vm1845, 0, %v1931
    %v1934 = vcosq.f32.pop %v1932
    %v1935 = vsinq.f32.pop %v1932
    %vm1936 = vweird.f32 %v1842
    %v1937 = vadd.s32 %v1933, 3
    %v1938 = vand.u32 %v1937, 3
    %vm1939 = vcmp.lt.s32.totalorder %v1938, 2
    %vm1940 = vcmp.eq.s32.totalorder %v1938, 0
    %v1941 = vxor.u32 %v1935, 2147483648
    %v1942 = vsel %vm1940, %v1934, %v1941
    %vm1943 = vcmp.eq.s32.totalorder %v1938, 2
    %v1944 = vxor.u32 %v1934, 2147483648
    %v1945 = vsel %vm1943, %v1944, %v1935
    %v1946 = vsel %vm1939, %v1942, %v1945
    %v1947 = vsel %vm1936, nan, %v1946
    %v1948 = vand.u32 2147483647, %v1842
    %vm1949 = vcmp.le.f32.partialorder %v1948, 0.7853982
    %vm1950 = vcmp.lt.s32.totalorder %v1842, 0
    %v1951 = vand.u32 %v1842, 2139095040
    %v1952 = vshrl.u32 %v1951, 23
    %v1953 = vsub.s32 %v1952, 127
    %v1954 = vand.u32 2147483647, %v1842
    %v1955 = vand.u32 %v1954, 8388607
    %v1956 = vor.u32 %v1955, 8388608
    %v1957 = vsub.s32 0, %v1956
    %v1958 = vadd.s32 %v1953, 1
    %vm1959 = vcmp.gt.s32.totalorder %v1958, 0
    %v1960 = vsel %vm1959, %v1958, 0
    %v1961 = vshrl.u32 %v1960, 5
    %v1962 = vand.u32 %v1960, 31
    %v1963 = vsub.s32 32, %v1962
    %v1964 = vshrl.u32 683565275, %v1963
    %v1965 = vshll.u32 683565275, %v1962
    %v1966 = vshrl.u32 2475754826, %v1963
    %v1967 = vor.u32 %v1965, %v1966
    %v1968 = vshll.u32 2475754826, %v1962
    %v1969 = vshrl.u32 2131351028, %v1963
    %v1970 = vor.u32 %v1968, %v1969
    %v1971 = vshll.u32 2131351028, %v1962
    %v1972 = vshrl.u32 2102212464, %v1963
    %v1973 = vor.u32 %v1971, %v1972
    %v1974 = vshll.u32 2102212464, %v1962
    %v1975 = vshrl.u32 920167782, %v1963
    %v1976 = vor.u32 %v1974, %v1975
    %v1977 = vshll.u32 920167782, %v1962
    %v1978 = vshrl.u32 1326507024, %v1963
    %v1979 = vor.u32 %v1977, %v1978
    %vm1980 = vcmp.lt.s32.totalorder %v1961, 1
    %vm1981 = vcmp.lt.s32.totalorder %v1961, 2
    %vm1982 = vcmp.lt.s32.totalorder %v1961, 3
    %vm1983 = vcmp.lt.s32.totalorder %v1961, 4
    %v1984 = vsel %vm1980, %v1964, %v1967
    %v1985 = vsel %vm1983, %v1973, 2102212464
    %v1986 = vsel %vm1982, %v1970, %v1985
    %v1987 = vsel %vm1981, %v1984, %v1986
    %v1988 = vsel %vm1980, %v1967, %v1970
    %v1989 = vsel %vm1983, %v1976, 920167782
    %v1990 = vsel %vm1982, %v1973, %v1989
    %v1991 = vsel %vm1981, %v1988, %v1990
    %v1992 = vsel %vm1980, %v1970, %v1973
    %v1993 = vsel %vm1983, %v1979, 1326507024
    %v1994 = vsel %vm1982, %v1976, %v1993
    %v1995 = vsel %vm1981, %v1992, %v1994
    %v1996 = vshll.u32 %v1956, 8
    %v1997 = vmul.u32.u64.compose %v1996, %v1995
    %v1998 = vextract.low.u32 %v1997
    %v1999 = vextract.high.u32 %v1997
    %v2000 = vmul.u32.u64.compose %v1996, %v1991
    %v2001 = vextract.low.u32 %v2000
    %v2002 = vextract.high.u32 %v2000
    %v2003 = vmul.u32 %v1996, %v1987
    %v2004 = vadd.s32 %v1999, %v2001
    %vm2005 = vc.u32 %v1999, %v2001
    %v2006 = vadd.s32 %v2002, 1
    %v2007 = vsel %vm2005, %v2006, %v2002
    %v2008 = vadd.s32 %v2003, %v2007
    %v2009 = vadd.s32 %v2008, 536870912
    %v2010 = vshrl.u32 %v2009, 30
    %v2011 = vshll.u32 %v2010, 30
    %v2012 = vsub.s32 %v2008, %v2011
    %vm2013 = vcmp.lt.s32.totalorder %v2012, 0
    %v2014 = vsub.s32 0, %v2012
    %v2015 = vsel %vm2013, %v2014, %v2012
    %v2016 = vclz %v2015
    %v2017 = vsub.s32 %v2016, 2
    %vm2018 = vcmp.gt.s32.totalorder 0, %v2017
    %v2019 = vsel %vm2018, 0, %v2017
    %v2020 = vsub.s32 32, %v2019
    %v2021 = vshll.u32 %v2012, %v2019
    %v2022 = vshrl.u32 %v2004, %v2020
    %v2023 = vor.u32 %v2021, %v2022
    %v2024 = vsub.s32 4294967266, %v2019
    %v2025 = vadd.s32 %v2024, 127
    %v2026 = vshll.u32 %v2025, 23
    %v2027 = vor.u32 4788187, %v2026
    %v2028 = vand.u32 2147483647, %v2027
    %v2030 = vcvt.s32.f32 %v2023
    %v2031 = vmul.f32 %v2030, %v2028
    %v2032 = vxor.u32 %v2031, 2147483648
    %v2033 = vsel %vm1950, %v2032, %v2031
    %v2034 = vsub.s32 4, %v2010
    %v2035 = vsel %vm1950, %v2034, %v2010
    %v2036 = vsel %vm1949, %v1842, %v2033
    %v2037 = vsel %vm1949, 0, %v2035
    %v2038 = vcosq.f32.pop %v2036
    %v2039 = vsinq.f32.pop %v2036
    %vm2040 = vweird.f32 %v1842
    %v2041 = vand.u32 %v2037, 3
    %vm2042 = vcmp.lt.s32.totalorder %v2041, 2
    %vm2043 = vcmp.eq.s32.totalorder %v2041, 0
    %v2044 = vxor.u32 %v2039, 2147483648
    %v2045 = vsel %vm2043, %v2038, %v2044
    %vm2046 = vcmp.eq.s32.totalorder %v2041, 2
    %v2047 = vxor.u32 %v2038, 2147483648
    %v2048 = vsel %vm2046, %v2047, %v2039
    %v2049 = vsel %vm2042, %v2045, %v2048
    %v2050 = vsel %vm2040, nan, %v2049
    %v2051 = vmul.f32 %v1838, 0.16666667
    %v2052 = vsub.f32 1.0, %v2051
    %v2053 = vmul.f32 %v1947, %v1841
    %v2054 = vsel %vm1839, %v2052, %v2053
    %v2055 = vmul.f32 %v1838, 0.041666668
    %v2056 = vsub.f32 0.5, %v2055
    %v2057 = vsub.f32 1.0, %v2050
    %v2058 = vmul.f32 %v2057, %v1843
    %v2059 = vsel %vm1839, %v2056, %v2058
    %v2060 = vmul.f32 %v1838, 0.008333334
    %v2061 = vsub.f32 0.16666667, %v2060
    %v2062 = vsub.f32 %v1842, %v1947
    %v2063 = vmul.f32 %v1843, %v1841
    %v2064 = vmul.f32 %v2062, %v2063
    %v2065 = vsel %vm1839, %v2061, %v2064
    %v2066 = vmul.f32 %v2054, %v1834
    %v2067 = vmul.f32 %v2059, %v1836
    %v2068 = vmul.f32 %v2065, %v1836
    %v2069 = vmul.f32 %v2068, %v1834
    %s2070 = sld [smem:[#allocation7 + $0x281]]
    %s2071 = sld [smem:[#allocation7 + $0x282]]
    %s2072 = sld [smem:[#allocation7 + $0x283]]
    %s2073 = sld [smem:[#allocation7 + $0x284]]
    %s2074 = sld [smem:[#allocation7 + $0x285]]
    %s2075 = sld [smem:[#allocation7 + $0x286]]
    %s2076 = sld [smem:[#allocation7 + $0x287]]
    %s2077 = sld [smem:[#allocation7 + $0x288]]
    %s2078 = sld [smem:[#allocation7 + $0x289]]
    %v2079 = vstv %s2076
    %v2080 = vmul.f32 %v2067, %v2079
    %v2081 = vsub.f32 1.0, %v2080
    %v2082 = vstv %s2073
    %v2083 = vmul.f32 %v2067, %v2082
    %v2084 = vstv %s2072
    %v2085 = vmul.f32 %v2066, %v2084
    %v2086 = vsub.f32 %v2083, %v2085
    %v2087 = vstv %s2074
    %v2088 = vmul.f32 %v2067, %v2087
    %v2089 = vstv %s2071
    %v2090 = vmul.f32 %v2066, %v2089
    %v2091 = vadd.f32 %v2088, %v2090
    %v2092 = vadd.f32 %v2083, %v2085
    %v2093 = vstv %s2077
    %v2094 = vmul.f32 %v2067, %v2093
    %v2095 = vsub.f32 1.0, %v2094
    %v2096 = vstv %s2075
    %v2097 = vmul.f32 %v2067, %v2096
    %v2098 = vstv %s2070
    %v2099 = vmul.f32 %v2066, %v2098
    %v2100 = vsub.f32 %v2097, %v2099
    %v2101 = vsub.f32 %v2088, %v2090
    %v2102 = vadd.f32 %v2097, %v2099
    %v2103 = vstv %s2078
    %v2104 = vmul.f32 %v2067, %v2103
    %v2105 = vsub.f32 1.0, %v2104
    %s2106 = sld [smem:[#allocation7 + $0x28a]]
    %v2107 = vstv %s2106
    %v2108 = vmul.f32 %v1834, %v2107
    %s2109 = sld [smem:[#allocation7 + $0x28d]]
    %v2110 = vstv %s2109
    %v2111 = vmul.f32 %v2067, %v2110
    %v2112 = vadd.f32 %v2108, %v2111
    %s2113 = sld [smem:[#allocation7 + $0x290]]
    %v2114 = vstv %s2113
    %v2115 = vmul.f32 %v2069, %v2114
    %v2116 = vadd.f32 %v2112, %v2115
    %s2117 = sld [smem:[#allocation7 + $0x28b]]
    %v2118 = vstv %s2117
    %v2119 = vmul.f32 %v1834, %v2118
    %s2120 = sld [smem:[#allocation7 + $0x28e]]
    %v2121 = vstv %s2120
    %v2122 = vmul.f32 %v2067, %v2121
    %v2123 = vadd.f32 %v2119, %v2122
    %s2124 = sld [smem:[#allocation7 + $0x291]]
    %v2125 = vstv %s2124
    %v2126 = vmul.f32 %v2069, %v2125
    %v2127 = vadd.f32 %v2123, %v2126
    %s2128 = sld [smem:[#allocation7 + $0x28c]]
    %v2129 = vstv %s2128
    %v2130 = vmul.f32 %v1834, %v2129
    %s2131 = sld [smem:[#allocation7 + $0x28f]]
    %v2132 = vstv %s2131
    %v2133 = vmul.f32 %v2067, %v2132
    %v2134 = vadd.f32 %v2130, %v2133
    %s2135 = sld [smem:[#allocation7 + $0x292]]
    %v2136 = vstv %s2135
    %v2137 = vmul.f32 %v2069, %v2136
    %v2138 = vadd.f32 %v2134, %v2137
    %v2139 = vmul.f32 %v1774, %v2081
    %v2140 = vmul.f32 %v1779, %v2092
    %v2141 = vadd.f32 %v2139, %v2140
    %v2142 = vmul.f32 %v1784, %v2101
    %v2143 = vadd.f32 %v2141, %v2142
    %v2144 = vmul.f32 %v1774, %v2086
    %v2145 = vmul.f32 %v1779, %v2095
    %v2146 = vadd.f32 %v2144, %v2145
    %v2147 = vmul.f32 %v1784, %v2102
    %v2148 = vadd.f32 %v2146, %v2147
    %v2149 = vmul.f32 %v1774, %v2091
    %v2150 = vmul.f32 %v1779, %v2100
    %v2151 = vadd.f32 %v2149, %v2150
    %v2152 = vmul.f32 %v1784, %v2105
    %v2153 = vadd.f32 %v2151, %v2152
    %v2154 = vmul.f32 %v1789, %v2081
    %v2155 = vmul.f32 %v1794, %v2092
    %v2156 = vadd.f32 %v2154, %v2155
    %v2157 = vmul.f32 %v1799, %v2101
    %v2158 = vadd.f32 %v2156, %v2157
    %v2159 = vmul.f32 %v1789, %v2086
    %v2160 = vmul.f32 %v1794, %v2095
    %v2161 = vadd.f32 %v2159, %v2160
    %v2162 = vmul.f32 %v1799, %v2102
    %v2163 = vadd.f32 %v2161, %v2162
    %v2164 = vmul.f32 %v1789, %v2091
    %v2165 = vmul.f32 %v1794, %v2100
    %v2166 = vadd.f32 %v2164, %v2165
    %v2167 = vmul.f32 %v1799, %v2105
    %v2168 = vadd.f32 %v2166, %v2167
    %v2169 = vmul.f32 %v1804, %v2081
    %v2170 = vmul.f32 %v1809, %v2092
    %v2171 = vadd.f32 %v2169, %v2170
    %v2172 = vmul.f32 %v1814, %v2101
    %v2173 = vadd.f32 %v2171, %v2172
    %v2174 = vmul.f32 %v1804, %v2086
    %v2175 = vmul.f32 %v1809, %v2095
    %v2176 = vadd.f32 %v2174, %v2175
    %v2177 = vmul.f32 %v1814, %v2102
    %v2178 = vadd.f32 %v2176, %v2177
    %v2179 = vmul.f32 %v1804, %v2091
    %v2180 = vmul.f32 %v1809, %v2100
    %v2181 = vadd.f32 %v2179, %v2180
    %v2182 = vmul.f32 %v1814, %v2105
    %v2183 = vadd.f32 %v2181, %v2182
    %v2184 = vmul.f32 %v1774, %v2116
    %v2185 = vmul.f32 %v1779, %v2127
    %v2186 = vadd.f32 %v2184, %v2185
    %v2187 = vmul.f32 %v1784, %v2138
    %v2188 = vadd.f32 %v2186, %v2187
    %v2189 = vadd.f32 %v2188, %v1820
    %v2190 = vmul.f32 %v1789, %v2116
    %v2191 = vmul.f32 %v1794, %v2127
    %v2192 = vadd.f32 %v2190, %v2191
    %v2193 = vmul.f32 %v1799, %v2138
    %v2194 = vadd.f32 %v2192, %v2193
    %v2195 = vadd.f32 %v2194, %v1826
    %v2196 = vmul.f32 %v1804, %v2116
    %v2197 = vmul.f32 %v1809, %v2127
    %v2198 = vadd.f32 %v2196, %v2197
    %v2199 = vmul.f32 %v1814, %v2138
    %v2200 = vadd.f32 %v2198, %v2199
    %v2201 = vadd.f32 %v2200, %v1832
    %s2202 = sld [smem:[#allocation8]]
    %v2203 = vstv %s2202
    %v2204 = vmul.f32 %v2143, %v2203
    %s2205 = sld [smem:[#allocation8 + $0x4]]
    %v2206 = vstv %s2205
    %v2207 = vmul.f32 %v2148, %v2206
    %v2208 = vadd.f32 %v2204, %v2207
    %s2209 = sld [smem:[#allocation8 + $0x8]]
    %v2210 = vstv %s2209
    %v2211 = vmul.f32 %v2153, %v2210
    %v2212 = vadd.f32 %v2208, %v2211
    %s2213 = sld [smem:[#allocation8 + $0x1]]
    %v2214 = vstv %s2213
    %v2215 = vmul.f32 %v2143, %v2214
    %s2216 = sld [smem:[#allocation8 + $0x5]]
    %v2217 = vstv %s2216
    %v2218 = vmul.f32 %v2148, %v2217
    %v2219 = vadd.f32 %v2215, %v2218
    %s2220 = sld [smem:[#allocation8 + $0x9]]
    %v2221 = vstv %s2220
    %v2222 = vmul.f32 %v2153, %v2221
    %v2223 = vadd.f32 %v2219, %v2222
    %s2224 = sld [smem:[#allocation8 + $0x2]]
    %v2225 = vstv %s2224
    %v2226 = vmul.f32 %v2143, %v2225
    %s2227 = sld [smem:[#allocation8 + $0x6]]
    %v2228 = vstv %s2227
    %v2229 = vmul.f32 %v2148, %v2228
    %v2230 = vadd.f32 %v2226, %v2229
    %s2231 = sld [smem:[#allocation8 + $0xa]]
    %v2232 = vstv %s2231
    %v2233 = vmul.f32 %v2153, %v2232
    %v2234 = vadd.f32 %v2230, %v2233
    %s2235 = sld [smem:[#allocation8 + $0x3]]
    %v2236 = vstv %s2235
    %v2237 = vmul.f32 %v2143, %v2236
    %s2238 = sld [smem:[#allocation8 + $0x7]]
    %v2239 = vstv %s2238
    %v2240 = vmul.f32 %v2148, %v2239
    %v2241 = vadd.f32 %v2237, %v2240
    %s2242 = sld [smem:[#allocation8 + $0xb]]
    %v2243 = vstv %s2242
    %v2244 = vmul.f32 %v2153, %v2243
    %v2245 = vadd.f32 %v2241, %v2244
    %v2246 = vadd.f32 %v2245, %v2189
    %v2247 = vmul.f32 %v2158, %v2203
    %v2248 = vmul.f32 %v2163, %v2206
    %v2249 = vadd.f32 %v2247, %v2248
    %v2250 = vmul.f32 %v2168, %v2210
    %v2251 = vadd.f32 %v2249, %v2250
    %v2252 = vmul.f32 %v2158, %v2214
    %v2253 = vmul.f32 %v2163, %v2217
    %v2254 = vadd.f32 %v2252, %v2253
    %v2255 = vmul.f32 %v2168, %v2221
    %v2256 = vadd.f32 %v2254, %v2255
    %v2257 = vmul.f32 %v2158, %v2225
    %v2258 = vmul.f32 %v2163, %v2228
    %v2259 = vadd.f32 %v2257, %v2258
    %v2260 = vmul.f32 %v2168, %v2232
    %v2261 = vadd.f32 %v2259, %v2260
    %v2262 = vmul.f32 %v2158, %v2236
    %v2263 = vmul.f32 %v2163, %v2239
    %v2264 = vadd.f32 %v2262, %v2263
    %v2265 = vmul.f32 %v2168, %v2243
    %v2266 = vadd.f32 %v2264, %v2265
    %v2267 = vadd.f32 %v2266, %v2195
    %v2268 = vmul.f32 %v2173, %v2203
    %v2269 = vmul.f32 %v2178, %v2206
    %v2270 = vadd.f32 %v2268, %v2269
    %v2271 = vmul.f32 %v2183, %v2210
    %v2272 = vadd.f32 %v2270, %v2271
    %v2273 = vmul.f32 %v2173, %v2214
    %v2274 = vmul.f32 %v2178, %v2217
    %v2275 = vadd.f32 %v2273, %v2274
    %v2276 = vmul.f32 %v2183, %v2221
    %v2277 = vadd.f32 %v2275, %v2276
    %v2278 = vmul.f32 %v2173, %v2225
    %v2279 = vmul.f32 %v2178, %v2228
    %v2280 = vadd.f32 %v2278, %v2279
    %v2281 = vmul.f32 %v2183, %v2232
    %v2282 = vadd.f32 %v2280, %v2281
    %v2283 = vmul.f32 %v2173, %v2236
    %v2284 = vmul.f32 %v2178, %v2239
    %v2285 = vadd.f32 %v2283, %v2284
    %v2286 = vmul.f32 %v2183, %v2243
    %v2287 = vadd.f32 %v2285, %v2286
    %v2288 = vadd.f32 %v2287, %v2201
    %2289 = vst [vmem:[#allocation9] sm:$0xff] %v2212
    %s2290 = scalar_lea.vmem [#allocation9], 8
    %2291 = vst [vmem:[%s2290] sm:$0xff] %v2223
    %s2292 = scalar_lea.vmem [#allocation9], 16
    %2293 = vst [vmem:[%s2292] sm:$0xff] %v2234
    %s2294 = scalar_lea.vmem [#allocation9], 24
    %2295 = vst [vmem:[%s2294] sm:$0xff] %v2246
    %s2296 = scalar_lea.vmem [#allocation9], 32
    %2297 = vst [vmem:[%s2296] sm:$0xff] %v2251
    %s2298 = scalar_lea.vmem [#allocation9], 40
    %2299 = vst [vmem:[%s2298] sm:$0xff] %v2256
    %s2300 = scalar_lea.vmem [#allocation9], 48
    %2301 = vst [vmem:[%s2300] sm:$0xff] %v2261
    %s2302 = scalar_lea.vmem [#allocation9], 56
    %2303 = vst [vmem:[%s2302] sm:$0xff] %v2267
    %s2304 = scalar_lea.vmem [#allocation9], 64
    %2305 = vst [vmem:[%s2304] sm:$0xff] %v2272
    %s2306 = scalar_lea.vmem [#allocation9], 72
    %2307 = vst [vmem:[%s2306] sm:$0xff] %v2277
    %s2308 = scalar_lea.vmem [#allocation9], 80
    %2309 = vst [vmem:[%s2308] sm:$0xff] %v2282
    %s2310 = scalar_lea.vmem [#allocation9], 88
    %2311 = vst [vmem:[%s2310] sm:$0xff] %v2288
    // Predicated region
    $region26: #{tpu_custom_call.1} parent=1 // pred_check
      _
    $region27: #{tpu_custom_call.1} parent=1 // pred_check_branch
      %2313 = sbr.rel (0) target = $region29
    $region28: #{tpu_custom_call.1} parent=1 // pred_region
      %s2315 = ssub.s32 1536, 1536
      %2316 = vsyncadd [#allocation4], %s2315
      %s2317 = sshll.u32 [#allocation9], 4
      %s2318 = int_to_ptr.vmem [resolvable:$true] %s2317
      %2323 = dma.vmem_to_hbm [thread:$0]  %s2318, 1536, %s3, [#allocation4], 128, 128, 8
    $region29: #{tpu_custom_call.1} parent=1 // pred_fallthru
      _
    // Predicated region
    $region30: #{tpu_custom_call.1} parent=1 // pred_check
      _
    $region31: #{tpu_custom_call.1} parent=1 // pred_check_branch
      %2325 = sbr.rel (0) target = $region33
    $region32: #{tpu_custom_call.1} parent=1 // pred_region
      %2326 = dma.done [#allocation4], 1536
    $region33: #{tpu_custom_call.1} parent=1 // pred_fallthru
      _
    %2327 = vsyncpa [#allocation3], 1
    %2328 = vsyncpa [#allocation4], 1
    %2329 = vsyncpa [#allocation5], 1
    %2330 = vsyncpa [#allocation6], 1

</llo_original>
